<compile_context>
chip_gen: v6e
topology: v6e:2x2x1
jax: 0.10.0
libtpu: 0.0.40
codegen_flags: <defaults>
</compile_context>

<pallas_src>
import jax
import jax.numpy as jnp
from jax.experimental import pallas as pl
from jax.experimental.pallas import tpu as pltpu  # noqa: F401


# ----------------------------------------------------------------------------
# Fused MHA kernel: QKV projections + scaled-dot-product attention (mask +
# softmax) + per-head output projection (summed) + residual + LayerNorm.
# ----------------------------------------------------------------------------
def mha_kernel(q_ref, k_ref, v_ref, bias_ref,
               wq_ref, wk_ref, wv_ref, fcw_ref, fcb_ref,
               gamma_ref, beta_ref,
               out_ref, attn_ref):
    B, Lq, Lk = bias_ref.shape
    H, D, dk = wq_ref.shape
    inv_temp = 1.0 / (float(dk) ** 0.5)          # 1 / temperature

    q_all = q_ref[...]                           # [B*Lq, D]  (also the residual)
    k_all = k_ref[...]                           # [B*Lk, D]
    v_all = v_ref[...]                           # [B*Lk, D]

    # residual + fc bias; per-head fc contributions accumulate below.
    acc = [q_all[b * Lq:(b + 1) * Lq, :] + fcb_ref[...] for b in range(B)]

    for h in range(H):                           # tiny static loops, unrolled
        # Projections batched over the batch dim: one MXU matmul per
        # (head, tensor) instead of one per (batch, head, tensor).
        qh = jnp.dot(q_all, wq_ref[h],
                     preferred_element_type=jnp.float32) * inv_temp          # [B*Lq, dk]
        kh = jnp.dot(k_all, wk_ref[h], preferred_element_type=jnp.float32)   # [B*Lk, dk]
        vh = jnp.dot(v_all, wv_ref[h], preferred_element_type=jnp.float32)   # [B*Lk, dv]

        for b in range(B):
            qb = qh[b * Lq:(b + 1) * Lq, :]      # sublane-tile-aligned slices
            kb = kh[b * Lk:(b + 1) * Lk, :]
            vb = vh[b * Lk:(b + 1) * Lk, :]

            # q @ k^T without an explicit relayout transpose; scale already
            # folded into qh, mask applied as a precomputed additive bias.
            s = jax.lax.dot_general(
                qb, kb, (((1,), (1,)), ((), ())),
                preferred_element_type=jnp.float32) + bias_ref[b]            # [Lq, Lk]

            # numerically-stable softmax over keys
            s = s - jnp.max(s, axis=-1, keepdims=True)
            e = jnp.exp(s)
            p = e / jnp.sum(e, axis=-1, keepdims=True)                       # [Lq, Lk]

            # attn layout matches torch: [n_head*B, Lq, Lk], head-major
            attn_ref[h * B + b] = p.astype(attn_ref.dtype)

            ctx = jnp.dot(p, vb, preferred_element_type=jnp.float32)         # [Lq, dv]
            acc[b] = acc[b] + jnp.dot(ctx, fcw_ref[h],
                                      preferred_element_type=jnp.float32)    # [Lq, D]

    # LayerNorm over d_model (eps = 1e-5, elementwise affine)
    for b in range(B):
        y = acc[b]
        mean = jnp.mean(y, axis=-1, keepdims=True)
        cen = y - mean
        var = jnp.mean(cen * cen, axis=-1, keepdims=True)
        out = cen * jax.lax.rsqrt(var + 1e-5) * gamma_ref[...] + beta_ref[...]
        out_ref[b] = out.astype(out_ref.dtype)


# ----------------------------------------------------------------------------
# Wrapper
# ----------------------------------------------------------------------------
def mha_forward(params, q, k, v, mask):
    """q,k,v: [B, L, d_model]; mask: [B, Lq, Lk] (nonzero = masked).
    Returns (output [B, Lq, d_model], attn [n_head*B, Lq, Lk])."""
    B, Lq, D = q.shape
    Lk = k.shape[1]
    H, _, dk = params["wq"].shape
    dv = params["wv"].shape[2]

    # Free wrapper-side preprocessing: flatten batch into sublanes so the
    # kernel's projection matmuls are batched, and build the additive mask.
    q2 = q.reshape(B * Lq, D)
    k2 = k.reshape(B * Lk, D)
    v2 = v.reshape(B * Lk, D)
    bias = jnp.float32(-1e10) * mask.astype(jnp.float32)       # [B, Lq, Lk]

    flops = 2 * B * H * (Lq * D * dk + Lk * D * dk + Lk * D * dv
                         + Lq * Lk * dk + Lq * Lk * dv + Lq * dv * D)
    transcendentals = B * H * Lq * Lk + 2 * B * Lq
    bytes_accessed = 4 * (q.size + k.size + v.size + bias.size
                          + sum(int(p.size) for p in params.values())
                          + B * Lq * D + H * B * Lq * Lk)

    out, attn = pl.pallas_call(
        mha_kernel,
        out_shape=(jax.ShapeDtypeStruct((B, Lq, D), jnp.float32),
                   jax.ShapeDtypeStruct((H * B, Lq, Lk), jnp.float32)),
        cost_estimate=pl.CostEstimate(flops=flops,
                                      transcendentals=transcendentals,
                                      bytes_accessed=bytes_accessed),
    )(q2, k2, v2, bias,
      params["wq"], params["wk"], params["wv"],
      params["fcw"], params["fcb"], params["gamma"], params["beta"])

    return out, attn


# ----------------------------------------------------------------------------
# Deterministic synthetic parameters (shapes / init scales match the module)
# ----------------------------------------------------------------------------
def init_params(key, d_model, n_head, d_k, d_v):
    ks = jax.random.split(key, 7)
    std_qk = (2.0 / (d_model + d_k)) ** 0.5
    std_v = (2.0 / (d_model + d_v)) ** 0.5
    std_fc = (2.0 / (n_head * d_v + d_model)) ** 0.5          # xavier_normal
    b_scale = 1.0 / ((n_head * d_v) ** 0.5)                   # torch Linear bias
    return {
        # projection weights stored [H, d_model, d_k|d_v] (transposed vs torch)
        "wq": std_qk * jax.random.normal(ks[0], (n_head, d_model, d_k), jnp.float32),
        "wk": std_qk * jax.random.normal(ks[1], (n_head, d_model, d_k), jnp.float32),
        "wv": std_v * jax.random.normal(ks[2], (n_head, d_model, d_v), jnp.float32),
        # fc split per head: [H, d_v, d_model]
        "fcw": std_fc * jax.random.normal(ks[3], (n_head, d_v, d_model), jnp.float32),
        "fcb": b_scale * jax.random.uniform(ks[4], (1, d_model), jnp.float32, -1.0, 1.0),
        # LayerNorm affine (randomized slightly so the check is non-trivial)
        "gamma": 1.0 + 0.1 * jax.random.normal(ks[5], (1, d_model), jnp.float32),
        "beta": 0.05 * jax.random.normal(ks[6], (1, d_model), jnp.float32),
    }


# ----------------------------------------------------------------------------
# Pure-JAX reference (mirrors the torch forward, dropout in eval mode)
# ----------------------------------------------------------------------------
def reference_forward(params, q, k, v, mask):
    B, Lq, D = q.shape
    Lk = k.shape[1]
    H, _, dk = params["wq"].shape
    hp = jax.lax.Precision.HIGHEST

    qh = jnp.einsum("bqd,hde->hbqe", q, params["wq"], precision=hp)
    kh = jnp.einsum("bkd,hde->hbke", k, params["wk"], precision=hp)
    vh = jnp.einsum("bkd,hde->hbke", v, params["wv"], precision=hp)

    s = jnp.einsum("hbqe,hbke->hbqk", qh, kh, precision=hp) / (float(dk) ** 0.5)
    s = jnp.where(mask[None], jnp.float32(-1e10), s)
    p = jax.nn.softmax(s, axis=-1)

    ctx = jnp.einsum("hbqk,hbke->hbqe", p, vh, precision=hp)
    fc_out = jnp.einsum("hbqe,hed->bqd", ctx, params["fcw"], precision=hp) + params["fcb"]

    y = fc_out + q
    mean = jnp.mean(y, axis=-1, keepdims=True)
    var = jnp.mean((y - mean) ** 2, axis=-1, keepdims=True)
    out = (y - mean) / jnp.sqrt(var + 1e-5) * params["gamma"] + params["beta"]
    attn = p.reshape(H * B, Lq, Lk)
    return out, attn


if __name__ == "__main__":
    B, L = 2, 8
    d_model, n_head, d_k, d_v = 128, 4, 32, 32

    key = jax.random.PRNGKey(0)
    kp, kq, kk, kv = jax.random.split(key, 4)

    params = init_params(kp, d_model, n_head, d_k, d_v)
    q = jax.random.normal(kq, (B, L, d_model), jnp.float32)
    k = jax.random.normal(kk, (B, L, d_model), jnp.float32)
    v = jax.random.normal(kv, (B, L, d_model), jnp.float32)

    # padding-style key mask: batch 0 sees all 8 keys, batch 1 only first 5
    valid = jnp.array([8, 5], jnp.int32)
    cols = jnp.arange(L, dtype=jnp.int32)[None, None, :]           # [1,1,L]
    mask = jnp.broadcast_to(cols >= valid[:, None, None], (B, L, L))

    out, attn = mha_forward(params, q, k, v, mask)
    out = jax.block_until_ready(out)
    attn = jax.block_until_ready(attn)
    assert out.shape == (B, L, d_model)
    assert attn.shape == (n_head * B, L, L)

    ref_out, ref_attn = reference_forward(params, q, k, v, mask)
    assert jnp.allclose(attn, ref_attn, atol=1e-3, rtol=1e-3), "attn mismatch"
    assert jnp.allclose(out, ref_out, atol=1e-3, rtol=1e-3), "output mismatch"

    print("KERNEL_OK")
</pallas_src>

<mosaic_0001>
module attributes {stable_mosaic.version = 11 : i64} {
  func.func @mha_kernel(%arg0: memref<16x128xf32, #tpu.memory_space<vmem>>, %arg1: memref<16x128xf32, #tpu.memory_space<vmem>>, %arg2: memref<16x128xf32, #tpu.memory_space<vmem>>, %arg3: memref<2x8x8xf32, #tpu.memory_space<vmem>>, %arg4: memref<4x128x32xf32, #tpu.memory_space<vmem>>, %arg5: memref<4x128x32xf32, #tpu.memory_space<vmem>>, %arg6: memref<4x128x32xf32, #tpu.memory_space<vmem>>, %arg7: memref<4x32x128xf32, #tpu.memory_space<vmem>>, %arg8: memref<1x128xf32, #tpu.memory_space<vmem>>, %arg9: memref<1x128xf32, #tpu.memory_space<vmem>>, %arg10: memref<1x128xf32, #tpu.memory_space<vmem>>, %arg11: memref<2x8x128xf32, #tpu.memory_space<vmem>>, %arg12: memref<8x8x8xf32, #tpu.memory_space<vmem>>) attributes {dimension_semantics = [], scalar_prefetch = 0 : i64, scratch_operands = 0 : i64, tpu.core_type = #tpu.core_type<tc>} {
    %c0 = arith.constant 0 : index
    %c0_0 = arith.constant 0 : index
    %0 = vector.load %arg0[%c0, %c0_0] : memref<16x128xf32, #tpu.memory_space<vmem>>, vector<16x128xf32>
    %c0_1 = arith.constant 0 : index
    %c0_2 = arith.constant 0 : index
    %1 = vector.load %arg1[%c0_1, %c0_2] : memref<16x128xf32, #tpu.memory_space<vmem>>, vector<16x128xf32>
    %c0_3 = arith.constant 0 : index
    %c0_4 = arith.constant 0 : index
    %2 = vector.load %arg2[%c0_3, %c0_4] : memref<16x128xf32, #tpu.memory_space<vmem>>, vector<16x128xf32>
    %3 = vector.extract_strided_slice %0 {offsets = [0, 0], sizes = [8, 128], strides = [1, 1]} : vector<16x128xf32> to vector<8x128xf32>
    %c0_5 = arith.constant 0 : index
    %c0_6 = arith.constant 0 : index
    %4 = vector.load %arg8[%c0_5, %c0_6] : memref<1x128xf32, #tpu.memory_space<vmem>>, vector<1x128xf32>
    %5 = vector.broadcast %4 : vector<1x128xf32> to vector<8x128xf32>
    %6 = arith.addf %3, %5 : vector<8x128xf32>
    %7 = vector.extract_strided_slice %0 {offsets = [8, 0], sizes = [8, 128], strides = [1, 1]} : vector<16x128xf32> to vector<8x128xf32>
    %c0_7 = arith.constant 0 : index
    %c0_8 = arith.constant 0 : index
    %8 = vector.load %arg8[%c0_7, %c0_8] : memref<1x128xf32, #tpu.memory_space<vmem>>, vector<1x128xf32>
    %9 = vector.broadcast %8 : vector<1x128xf32> to vector<8x128xf32>
    %10 = arith.addf %7, %9 : vector<8x128xf32>
    %c0_9 = arith.constant 0 : index
    %c0_10 = arith.constant 0 : index
    %c0_11 = arith.constant 0 : index
    %11 = vector.load %arg4[%c0_9, %c0_10, %c0_11] : memref<4x128x32xf32, #tpu.memory_space<vmem>>, vector<1x128x32xf32>
    %12 = vector.shape_cast %11 : vector<1x128x32xf32> to vector<128x32xf32>
    %cst = arith.constant dense<0.000000e+00> : vector<16x32xf32>
    %13 = tpu.matmul %0, %12, %cst {dimension_numbers = #tpu.dot_dimension_numbers<[1], [0], [0], [1], [0, 0, 1, 1], [], []>} : vector<16x128xf32>, vector<128x32xf32>, vector<16x32xf32> -> vector<16x32xf32>
    %cst_12 = arith.constant 0.176776692 : f32
    %14 = vector.broadcast %cst_12 : f32 to vector<16x32xf32>
    %15 = arith.mulf %13, %14 : vector<16x32xf32>
    %c0_13 = arith.constant 0 : index
    %c0_14 = arith.constant 0 : index
    %c0_15 = arith.constant 0 : index
    %16 = vector.load %arg5[%c0_13, %c0_14, %c0_15] : memref<4x128x32xf32, #tpu.memory_space<vmem>>, vector<1x128x32xf32>
    %17 = vector.shape_cast %16 : vector<1x128x32xf32> to vector<128x32xf32>
    %cst_16 = arith.constant dense<0.000000e+00> : vector<16x32xf32>
    %18 = tpu.matmul %1, %17, %cst_16 {dimension_numbers = #tpu.dot_dimension_numbers<[1], [0], [0], [1], [0, 0, 1, 1], [], []>} : vector<16x128xf32>, vector<128x32xf32>, vector<16x32xf32> -> vector<16x32xf32>
    %c0_17 = arith.constant 0 : index
    %c0_18 = arith.constant 0 : index
    %c0_19 = arith.constant 0 : index
    %19 = vector.load %arg6[%c0_17, %c0_18, %c0_19] : memref<4x128x32xf32, #tpu.memory_space<vmem>>, vector<1x128x32xf32>
    %20 = vector.shape_cast %19 : vector<1x128x32xf32> to vector<128x32xf32>
    %cst_20 = arith.constant dense<0.000000e+00> : vector<16x32xf32>
    %21 = tpu.matmul %2, %20, %cst_20 {dimension_numbers = #tpu.dot_dimension_numbers<[1], [0], [0], [1], [0, 0, 1, 1], [], []>} : vector<16x128xf32>, vector<128x32xf32>, vector<16x32xf32> -> vector<16x32xf32>
    %22 = vector.extract_strided_slice %15 {offsets = [0, 0], sizes = [8, 32], strides = [1, 1]} : vector<16x32xf32> to vector<8x32xf32>
    %23 = vector.extract_strided_slice %18 {offsets = [0, 0], sizes = [8, 32], strides = [1, 1]} : vector<16x32xf32> to vector<8x32xf32>
    %24 = vector.extract_strided_slice %21 {offsets = [0, 0], sizes = [8, 32], strides = [1, 1]} : vector<16x32xf32> to vector<8x32xf32>
    %cst_21 = arith.constant dense<0.000000e+00> : vector<8x8xf32>
    %25 = tpu.matmul %22, %23, %cst_21 {dimension_numbers = #tpu.dot_dimension_numbers<[1], [1], [0], [0], [0, 0, 1, 0], [], []>} : vector<8x32xf32>, vector<8x32xf32>, vector<8x8xf32> -> vector<8x8xf32>
    %c0_22 = arith.constant 0 : index
    %c0_23 = arith.constant 0 : index
    %c0_24 = arith.constant 0 : index
    %26 = vector.load %arg3[%c0_22, %c0_23, %c0_24] : memref<2x8x8xf32, #tpu.memory_space<vmem>>, vector<1x8x8xf32>
    %27 = vector.shape_cast %26 : vector<1x8x8xf32> to vector<8x8xf32>
    %28 = arith.addf %25, %27 : vector<8x8xf32>
    %cst_25 = arith.constant dense<0xFF800000> : vector<8xf32>
    %29 = vector.multi_reduction <maximumf>, %28, %cst_25 [1] : vector<8x8xf32> to vector<8xf32>
    %30 = vector.shape_cast %29 : vector<8xf32> to vector<8x1xf32>
    %31 = vector.broadcast %30 : vector<8x1xf32> to vector<8x8xf32>
    %32 = arith.subf %28, %31 : vector<8x8xf32>
    %33 = math.exp %32 : vector<8x8xf32>
    %cst_26 = arith.constant dense<0.000000e+00> : vector<8xf32>
    %34 = vector.multi_reduction <add>, %33, %cst_26 [1] : vector<8x8xf32> to vector<8xf32>
    %35 = vector.shape_cast %34 : vector<8xf32> to vector<8x1xf32>
    %36 = vector.broadcast %35 : vector<8x1xf32> to vector<8x8xf32>
    %37 = arith.divf %33, %36 : vector<8x8xf32>
    %c0_27 = arith.constant 0 : index
    %c0_28 = arith.constant 0 : index
    %c0_29 = arith.constant 0 : index
    %38 = vector.load %arg12[%c0_27, %c0_28, %c0_29] : memref<8x8x8xf32, #tpu.memory_space<vmem>>, vector<1x8x8xf32>
    %39 = vector.shape_cast %38 : vector<1x8x8xf32> to vector<8x8xf32>
    %40 = vector.shape_cast %37 : vector<8x8xf32> to vector<1x8x8xf32>
    tpu.vector_store %arg12[%c0_27, %c0_28, %c0_29], %40 {strides = array<i32>} : memref<8x8x8xf32, #tpu.memory_space<vmem>>, vector<1x8x8xf32>,
    %cst_30 = arith.constant dense<0.000000e+00> : vector<8x32xf32>
    %41 = tpu.matmul %37, %24, %cst_30 {dimension_numbers = #tpu.dot_dimension_numbers<[1], [0], [0], [1], [0, 0, 1, 1], [], []>} : vector<8x8xf32>, vector<8x32xf32>, vector<8x32xf32> -> vector<8x32xf32>
    %c0_31 = arith.constant 0 : index
    %c0_32 = arith.constant 0 : index
    %c0_33 = arith.constant 0 : index
    %42 = vector.load %arg7[%c0_31, %c0_32, %c0_33] : memref<4x32x128xf32, #tpu.memory_space<vmem>>, vector<1x32x128xf32>
    %43 = vector.shape_cast %42 : vector<1x32x128xf32> to vector<32x128xf32>
    %cst_34 = arith.constant dense<0.000000e+00> : vector<8x128xf32>
    %44 = tpu.matmul %41, %43, %cst_34 {dimension_numbers = #tpu.dot_dimension_numbers<[1], [0], [0], [1], [0, 0, 1, 1], [], []>} : vector<8x32xf32>, vector<32x128xf32>, vector<8x128xf32> -> vector<8x128xf32>
    %45 = arith.addf %6, %44 : vector<8x128xf32>
    %46 = vector.extract_strided_slice %15 {offsets = [8, 0], sizes = [8, 32], strides = [1, 1]} : vector<16x32xf32> to vector<8x32xf32>
    %47 = vector.extract_strided_slice %18 {offsets = [8, 0], sizes = [8, 32], strides = [1, 1]} : vector<16x32xf32> to vector<8x32xf32>
    %48 = vector.extract_strided_slice %21 {offsets = [8, 0], sizes = [8, 32], strides = [1, 1]} : vector<16x32xf32> to vector<8x32xf32>
    %cst_35 = arith.constant dense<0.000000e+00> : vector<8x8xf32>
    %49 = tpu.matmul %46, %47, %cst_35 {dimension_numbers = #tpu.dot_dimension_numbers<[1], [1], [0], [0], [0, 0, 1, 0], [], []>} : vector<8x32xf32>, vector<8x32xf32>, vector<8x8xf32> -> vector<8x8xf32>
    %c1 = arith.constant 1 : index
    %c0_36 = arith.constant 0 : index
    %c0_37 = arith.constant 0 : index
    %50 = vector.load %arg3[%c1, %c0_36, %c0_37] : memref<2x8x8xf32, #tpu.memory_space<vmem>>, vector<1x8x8xf32>
    %51 = vector.shape_cast %50 : vector<1x8x8xf32> to vector<8x8xf32>
    %52 = arith.addf %49, %51 : vector<8x8xf32>
    %cst_38 = arith.constant dense<0xFF800000> : vector<8xf32>
    %53 = vector.multi_reduction <maximumf>, %52, %cst_38 [1] : vector<8x8xf32> to vector<8xf32>
    %54 = vector.shape_cast %53 : vector<8xf32> to vector<8x1xf32>
    %55 = vector.broadcast %54 : vector<8x1xf32> to vector<8x8xf32>
    %56 = arith.subf %52, %55 : vector<8x8xf32>
    %57 = math.exp %56 : vector<8x8xf32>
    %cst_39 = arith.constant dense<0.000000e+00> : vector<8xf32>
    %58 = vector.multi_reduction <add>, %57, %cst_39 [1] : vector<8x8xf32> to vector<8xf32>
    %59 = vector.shape_cast %58 : vector<8xf32> to vector<8x1xf32>
    %60 = vector.broadcast %59 : vector<8x1xf32> to vector<8x8xf32>
    %61 = arith.divf %57, %60 : vector<8x8xf32>
    %c1_40 = arith.constant 1 : index
    %c0_41 = arith.constant 0 : index
    %c0_42 = arith.constant 0 : index
    %62 = vector.load %arg12[%c1_40, %c0_41, %c0_42] : memref<8x8x8xf32, #tpu.memory_space<vmem>>, vector<1x8x8xf32>
    %63 = vector.shape_cast %62 : vector<1x8x8xf32> to vector<8x8xf32>
    %64 = vector.shape_cast %61 : vector<8x8xf32> to vector<1x8x8xf32>
    tpu.vector_store %arg12[%c1_40, %c0_41, %c0_42], %64 {strides = array<i32>} : memref<8x8x8xf32, #tpu.memory_space<vmem>>, vector<1x8x8xf32>,
    %cst_43 = arith.constant dense<0.000000e+00> : vector<8x32xf32>
    %65 = tpu.matmul %61, %48, %cst_43 {dimension_numbers = #tpu.dot_dimension_numbers<[1], [0], [0], [1], [0, 0, 1, 1], [], []>} : vector<8x8xf32>, vector<8x32xf32>, vector<8x32xf32> -> vector<8x32xf32>
    %c0_44 = arith.constant 0 : index
    %c0_45 = arith.constant 0 : index
    %c0_46 = arith.constant 0 : index
    %66 = vector.load %arg7[%c0_44, %c0_45, %c0_46] : memref<4x32x128xf32, #tpu.memory_space<vmem>>, vector<1x32x128xf32>
    %67 = vector.shape_cast %66 : vector<1x32x128xf32> to vector<32x128xf32>
    %cst_47 = arith.constant dense<0.000000e+00> : vector<8x128xf32>
    %68 = tpu.matmul %65, %67, %cst_47 {dimension_numbers = #tpu.dot_dimension_numbers<[1], [0], [0], [1], [0, 0, 1, 1], [], []>} : vector<8x32xf32>, vector<32x128xf32>, vector<8x128xf32> -> vector<8x128xf32>
    %69 = arith.addf %10, %68 : vector<8x128xf32>
    %c1_48 = arith.constant 1 : index
    %c0_49 = arith.constant 0 : index
    %c0_50 = arith.constant 0 : index
    %70 = vector.load %arg4[%c1_48, %c0_49, %c0_50] : memref<4x128x32xf32, #tpu.memory_space<vmem>>, vector<1x128x32xf32>
    %71 = vector.shape_cast %70 : vector<1x128x32xf32> to vector<128x32xf32>
    %cst_51 = arith.constant dense<0.000000e+00> : vector<16x32xf32>
    %72 = tpu.matmul %0, %71, %cst_51 {dimension_numbers = #tpu.dot_dimension_numbers<[1], [0], [0], [1], [0, 0, 1, 1], [], []>} : vector<16x128xf32>, vector<128x32xf32>, vector<16x32xf32> -> vector<16x32xf32>
    %cst_52 = arith.constant 0.176776692 : f32
    %73 = vector.broadcast %cst_52 : f32 to vector<16x32xf32>
    %74 = arith.mulf %72, %73 : vector<16x32xf32>
    %c1_53 = arith.constant 1 : index
    %c0_54 = arith.constant 0 : index
    %c0_55 = arith.constant 0 : index
    %75 = vector.load %arg5[%c1_53, %c0_54, %c0_55] : memref<4x128x32xf32, #tpu.memory_space<vmem>>, vector<1x128x32xf32>
    %76 = vector.shape_cast %75 : vector<1x128x32xf32> to vector<128x32xf32>
    %cst_56 = arith.constant dense<0.000000e+00> : vector<16x32xf32>
    %77 = tpu.matmul %1, %76, %cst_56 {dimension_numbers = #tpu.dot_dimension_numbers<[1], [0], [0], [1], [0, 0, 1, 1], [], []>} : vector<16x128xf32>, vector<128x32xf32>, vector<16x32xf32> -> vector<16x32xf32>
    %c1_57 = arith.constant 1 : index
    %c0_58 = arith.constant 0 : index
    %c0_59 = arith.constant 0 : index
    %78 = vector.load %arg6[%c1_57, %c0_58, %c0_59] : memref<4x128x32xf32, #tpu.memory_space<vmem>>, vector<1x128x32xf32>
    %79 = vector.shape_cast %78 : vector<1x128x32xf32> to vector<128x32xf32>
    %cst_60 = arith.constant dense<0.000000e+00> : vector<16x32xf32>
    %80 = tpu.matmul %2, %79, %cst_60 {dimension_numbers = #tpu.dot_dimension_numbers<[1], [0], [0], [1], [0, 0, 1, 1], [], []>} : vector<16x128xf32>, vector<128x32xf32>, vector<16x32xf32> -> vector<16x32xf32>
    %81 = vector.extract_strided_slice %74 {offsets = [0, 0], sizes = [8, 32], strides = [1, 1]} : vector<16x32xf32> to vector<8x32xf32>
    %82 = vector.extract_strided_slice %77 {offsets = [0, 0], sizes = [8, 32], strides = [1, 1]} : vector<16x32xf32> to vector<8x32xf32>
    %83 = vector.extract_strided_slice %80 {offsets = [0, 0], sizes = [8, 32], strides = [1, 1]} : vector<16x32xf32> to vector<8x32xf32>
    %cst_61 = arith.constant dense<0.000000e+00> : vector<8x8xf32>
    %84 = tpu.matmul %81, %82, %cst_61 {dimension_numbers = #tpu.dot_dimension_numbers<[1], [1], [0], [0], [0, 0, 1, 0], [], []>} : vector<8x32xf32>, vector<8x32xf32>, vector<8x8xf32> -> vector<8x8xf32>
    %c0_62 = arith.constant 0 : index
    %c0_63 = arith.constant 0 : index
    %c0_64 = arith.constant 0 : index
    %85 = vector.load %arg3[%c0_62, %c0_63, %c0_64] : memref<2x8x8xf32, #tpu.memory_space<vmem>>, vector<1x8x8xf32>
    %86 = vector.shape_cast %85 : vector<1x8x8xf32> to vector<8x8xf32>
    %87 = arith.addf %84, %86 : vector<8x8xf32>
    %cst_65 = arith.constant dense<0xFF800000> : vector<8xf32>
    %88 = vector.multi_reduction <maximumf>, %87, %cst_65 [1] : vector<8x8xf32> to vector<8xf32>
    %89 = vector.shape_cast %88 : vector<8xf32> to vector<8x1xf32>
    %90 = vector.broadcast %89 : vector<8x1xf32> to vector<8x8xf32>
    %91 = arith.subf %87, %90 : vector<8x8xf32>
    %92 = math.exp %91 : vector<8x8xf32>
    %cst_66 = arith.constant dense<0.000000e+00> : vector<8xf32>
    %93 = vector.multi_reduction <add>, %92, %cst_66 [1] : vector<8x8xf32> to vector<8xf32>
    %94 = vector.shape_cast %93 : vector<8xf32> to vector<8x1xf32>
    %95 = vector.broadcast %94 : vector<8x1xf32> to vector<8x8xf32>
    %96 = arith.divf %92, %95 : vector<8x8xf32>
    %c2 = arith.constant 2 : index
    %c0_67 = arith.constant 0 : index
    %c0_68 = arith.constant 0 : index
    %97 = vector.load %arg12[%c2, %c0_67, %c0_68] : memref<8x8x8xf32, #tpu.memory_space<vmem>>, vector<1x8x8xf32>
    %98 = vector.shape_cast %97 : vector<1x8x8xf32> to vector<8x8xf32>
    %99 = vector.shape_cast %96 : vector<8x8xf32> to vector<1x8x8xf32>
    tpu.vector_store %arg12[%c2, %c0_67, %c0_68], %99 {strides = array<i32>} : memref<8x8x8xf32, #tpu.memory_space<vmem>>, vector<1x8x8xf32>,
    %cst_69 = arith.constant dense<0.000000e+00> : vector<8x32xf32>
    %100 = tpu.matmul %96, %83, %cst_69 {dimension_numbers = #tpu.dot_dimension_numbers<[1], [0], [0], [1], [0, 0, 1, 1], [], []>} : vector<8x8xf32>, vector<8x32xf32>, vector<8x32xf32> -> vector<8x32xf32>
    %c1_70 = arith.constant 1 : index
    %c0_71 = arith.constant 0 : index
    %c0_72 = arith.constant 0 : index
    %101 = vector.load %arg7[%c1_70, %c0_71, %c0_72] : memref<4x32x128xf32, #tpu.memory_space<vmem>>, vector<1x32x128xf32>
    %102 = vector.shape_cast %101 : vector<1x32x128xf32> to vector<32x128xf32>
    %cst_73 = arith.constant dense<0.000000e+00> : vector<8x128xf32>
    %103 = tpu.matmul %100, %102, %cst_73 {dimension_numbers = #tpu.dot_dimension_numbers<[1], [0], [0], [1], [0, 0, 1, 1], [], []>} : vector<8x32xf32>, vector<32x128xf32>, vector<8x128xf32> -> vector<8x128xf32>
    %104 = arith.addf %45, %103 : vector<8x128xf32>
    %105 = vector.extract_strided_slice %74 {offsets = [8, 0], sizes = [8, 32], strides = [1, 1]} : vector<16x32xf32> to vector<8x32xf32>
    %106 = vector.extract_strided_slice %77 {offsets = [8, 0], sizes = [8, 32], strides = [1, 1]} : vector<16x32xf32> to vector<8x32xf32>
    %107 = vector.extract_strided_slice %80 {offsets = [8, 0], sizes = [8, 32], strides = [1, 1]} : vector<16x32xf32> to vector<8x32xf32>
    %cst_74 = arith.constant dense<0.000000e+00> : vector<8x8xf32>
    %108 = tpu.matmul %105, %106, %cst_74 {dimension_numbers = #tpu.dot_dimension_numbers<[1], [1], [0], [0], [0, 0, 1, 0], [], []>} : vector<8x32xf32>, vector<8x32xf32>, vector<8x8xf32> -> vector<8x8xf32>
    %c1_75 = arith.constant 1 : index
    %c0_76 = arith.constant 0 : index
    %c0_77 = arith.constant 0 : index
    %109 = vector.load %arg3[%c1_75, %c0_76, %c0_77] : memref<2x8x8xf32, #tpu.memory_space<vmem>>, vector<1x8x8xf32>
    %110 = vector.shape_cast %109 : vector<1x8x8xf32> to vector<8x8xf32>
    %111 = arith.addf %108, %110 : vector<8x8xf32>
    %cst_78 = arith.constant dense<0xFF800000> : vector<8xf32>
    %112 = vector.multi_reduction <maximumf>, %111, %cst_78 [1] : vector<8x8xf32> to vector<8xf32>
    %113 = vector.shape_cast %112 : vector<8xf32> to vector<8x1xf32>
    %114 = vector.broadcast %113 : vector<8x1xf32> to vector<8x8xf32>
    %115 = arith.subf %111, %114 : vector<8x8xf32>
    %116 = math.exp %115 : vector<8x8xf32>
    %cst_79 = arith.constant dense<0.000000e+00> : vector<8xf32>
    %117 = vector.multi_reduction <add>, %116, %cst_79 [1] : vector<8x8xf32> to vector<8xf32>
    %118 = vector.shape_cast %117 : vector<8xf32> to vector<8x1xf32>
    %119 = vector.broadcast %118 : vector<8x1xf32> to vector<8x8xf32>
    %120 = arith.divf %116, %119 : vector<8x8xf32>
    %c3 = arith.constant 3 : index
    %c0_80 = arith.constant 0 : index
    %c0_81 = arith.constant 0 : index
    %121 = vector.load %arg12[%c3, %c0_80, %c0_81] : memref<8x8x8xf32, #tpu.memory_space<vmem>>, vector<1x8x8xf32>
    %122 = vector.shape_cast %121 : vector<1x8x8xf32> to vector<8x8xf32>
    %123 = vector.shape_cast %120 : vector<8x8xf32> to vector<1x8x8xf32>
    tpu.vector_store %arg12[%c3, %c0_80, %c0_81], %123 {strides = array<i32>} : memref<8x8x8xf32, #tpu.memory_space<vmem>>, vector<1x8x8xf32>,
    %cst_82 = arith.constant dense<0.000000e+00> : vector<8x32xf32>
    %124 = tpu.matmul %120, %107, %cst_82 {dimension_numbers = #tpu.dot_dimension_numbers<[1], [0], [0], [1], [0, 0, 1, 1], [], []>} : vector<8x8xf32>, vector<8x32xf32>, vector<8x32xf32> -> vector<8x32xf32>
    %c1_83 = arith.constant 1 : index
    %c0_84 = arith.constant 0 : index
    %c0_85 = arith.constant 0 : index
    %125 = vector.load %arg7[%c1_83, %c0_84, %c0_85] : memref<4x32x128xf32, #tpu.memory_space<vmem>>, vector<1x32x128xf32>
    %126 = vector.shape_cast %125 : vector<1x32x128xf32> to vector<32x128xf32>
    %cst_86 = arith.constant dense<0.000000e+00> : vector<8x128xf32>
    %127 = tpu.matmul %124, %126, %cst_86 {dimension_numbers = #tpu.dot_dimension_numbers<[1], [0], [0], [1], [0, 0, 1, 1], [], []>} : vector<8x32xf32>, vector<32x128xf32>, vector<8x128xf32> -> vector<8x128xf32>
    %128 = arith.addf %69, %127 : vector<8x128xf32>
    %c2_87 = arith.constant 2 : index
    %c0_88 = arith.constant 0 : index
    %c0_89 = arith.constant 0 : index
    %129 = vector.load %arg4[%c2_87, %c0_88, %c0_89] : memref<4x128x32xf32, #tpu.memory_space<vmem>>, vector<1x128x32xf32>
    %130 = vector.shape_cast %129 : vector<1x128x32xf32> to vector<128x32xf32>
    %cst_90 = arith.constant dense<0.000000e+00> : vector<16x32xf32>
    %131 = tpu.matmul %0, %130, %cst_90 {dimension_numbers = #tpu.dot_dimension_numbers<[1], [0], [0], [1], [0, 0, 1, 1], [], []>} : vector<16x128xf32>, vector<128x32xf32>, vector<16x32xf32> -> vector<16x32xf32>
    %cst_91 = arith.constant 0.176776692 : f32
    %132 = vector.broadcast %cst_91 : f32 to vector<16x32xf32>
    %133 = arith.mulf %131, %132 : vector<16x32xf32>
    %c2_92 = arith.constant 2 : index
    %c0_93 = arith.constant 0 : index
    %c0_94 = arith.constant 0 : index
    %134 = vector.load %arg5[%c2_92, %c0_93, %c0_94] : memref<4x128x32xf32, #tpu.memory_space<vmem>>, vector<1x128x32xf32>
    %135 = vector.shape_cast %134 : vector<1x128x32xf32> to vector<128x32xf32>
    %cst_95 = arith.constant dense<0.000000e+00> : vector<16x32xf32>
    %136 = tpu.matmul %1, %135, %cst_95 {dimension_numbers = #tpu.dot_dimension_numbers<[1], [0], [0], [1], [0, 0, 1, 1], [], []>} : vector<16x128xf32>, vector<128x32xf32>, vector<16x32xf32> -> vector<16x32xf32>
    %c2_96 = arith.constant 2 : index
    %c0_97 = arith.constant 0 : index
    %c0_98 = arith.constant 0 : index
    %137 = vector.load %arg6[%c2_96, %c0_97, %c0_98] : memref<4x128x32xf32, #tpu.memory_space<vmem>>, vector<1x128x32xf32>
    %138 = vector.shape_cast %137 : vector<1x128x32xf32> to vector<128x32xf32>
    %cst_99 = arith.constant dense<0.000000e+00> : vector<16x32xf32>
    %139 = tpu.matmul %2, %138, %cst_99 {dimension_numbers = #tpu.dot_dimension_numbers<[1], [0], [0], [1], [0, 0, 1, 1], [], []>} : vector<16x128xf32>, vector<128x32xf32>, vector<16x32xf32> -> vector<16x32xf32>
    %140 = vector.extract_strided_slice %133 {offsets = [0, 0], sizes = [8, 32], strides = [1, 1]} : vector<16x32xf32> to vector<8x32xf32>
    %141 = vector.extract_strided_slice %136 {offsets = [0, 0], sizes = [8, 32], strides = [1, 1]} : vector<16x32xf32> to vector<8x32xf32>
    %142 = vector.extract_strided_slice %139 {offsets = [0, 0], sizes = [8, 32], strides = [1, 1]} : vector<16x32xf32> to vector<8x32xf32>
    %cst_100 = arith.constant dense<0.000000e+00> : vector<8x8xf32>
    %143 = tpu.matmul %140, %141, %cst_100 {dimension_numbers = #tpu.dot_dimension_numbers<[1], [1], [0], [0], [0, 0, 1, 0], [], []>} : vector<8x32xf32>, vector<8x32xf32>, vector<8x8xf32> -> vector<8x8xf32>
    %c0_101 = arith.constant 0 : index
    %c0_102 = arith.constant 0 : index
    %c0_103 = arith.constant 0 : index
    %144 = vector.load %arg3[%c0_101, %c0_102, %c0_103] : memref<2x8x8xf32, #tpu.memory_space<vmem>>, vector<1x8x8xf32>
    %145 = vector.shape_cast %144 : vector<1x8x8xf32> to vector<8x8xf32>
    %146 = arith.addf %143, %145 : vector<8x8xf32>
    %cst_104 = arith.constant dense<0xFF800000> : vector<8xf32>
    %147 = vector.multi_reduction <maximumf>, %146, %cst_104 [1] : vector<8x8xf32> to vector<8xf32>
    %148 = vector.shape_cast %147 : vector<8xf32> to vector<8x1xf32>
    %149 = vector.broadcast %148 : vector<8x1xf32> to vector<8x8xf32>
    %150 = arith.subf %146, %149 : vector<8x8xf32>
    %151 = math.exp %150 : vector<8x8xf32>
    %cst_105 = arith.constant dense<0.000000e+00> : vector<8xf32>
    %152 = vector.multi_reduction <add>, %151, %cst_105 [1] : vector<8x8xf32> to vector<8xf32>
    %153 = vector.shape_cast %152 : vector<8xf32> to vector<8x1xf32>
    %154 = vector.broadcast %153 : vector<8x1xf32> to vector<8x8xf32>
    %155 = arith.divf %151, %154 : vector<8x8xf32>
    %c4 = arith.constant 4 : index
    %c0_106 = arith.constant 0 : index
    %c0_107 = arith.constant 0 : index
    %156 = vector.load %arg12[%c4, %c0_106, %c0_107] : memref<8x8x8xf32, #tpu.memory_space<vmem>>, vector<1x8x8xf32>
    %157 = vector.shape_cast %156 : vector<1x8x8xf32> to vector<8x8xf32>
    %158 = vector.shape_cast %155 : vector<8x8xf32> to vector<1x8x8xf32>
    tpu.vector_store %arg12[%c4, %c0_106, %c0_107], %158 {strides = array<i32>} : memref<8x8x8xf32, #tpu.memory_space<vmem>>, vector<1x8x8xf32>,
    %cst_108 = arith.constant dense<0.000000e+00> : vector<8x32xf32>
    %159 = tpu.matmul %155, %142, %cst_108 {dimension_numbers = #tpu.dot_dimension_numbers<[1], [0], [0], [1], [0, 0, 1, 1], [], []>} : vector<8x8xf32>, vector<8x32xf32>, vector<8x32xf32> -> vector<8x32xf32>
    %c2_109 = arith.constant 2 : index
    %c0_110 = arith.constant 0 : index
    %c0_111 = arith.constant 0 : index
    %160 = vector.load %arg7[%c2_109, %c0_110, %c0_111] : memref<4x32x128xf32, #tpu.memory_space<vmem>>, vector<1x32x128xf32>
    %161 = vector.shape_cast %160 : vector<1x32x128xf32> to vector<32x128xf32>
    %cst_112 = arith.constant dense<0.000000e+00> : vector<8x128xf32>
    %162 = tpu.matmul %159, %161, %cst_112 {dimension_numbers = #tpu.dot_dimension_numbers<[1], [0], [0], [1], [0, 0, 1, 1], [], []>} : vector<8x32xf32>, vector<32x128xf32>, vector<8x128xf32> -> vector<8x128xf32>
    %163 = arith.addf %104, %162 : vector<8x128xf32>
    %164 = vector.extract_strided_slice %133 {offsets = [8, 0], sizes = [8, 32], strides = [1, 1]} : vector<16x32xf32> to vector<8x32xf32>
    %165 = vector.extract_strided_slice %136 {offsets = [8, 0], sizes = [8, 32], strides = [1, 1]} : vector<16x32xf32> to vector<8x32xf32>
    %166 = vector.extract_strided_slice %139 {offsets = [8, 0], sizes = [8, 32], strides = [1, 1]} : vector<16x32xf32> to vector<8x32xf32>
    %cst_113 = arith.constant dense<0.000000e+00> : vector<8x8xf32>
    %167 = tpu.matmul %164, %165, %cst_113 {dimension_numbers = #tpu.dot_dimension_numbers<[1], [1], [0], [0], [0, 0, 1, 0], [], []>} : vector<8x32xf32>, vector<8x32xf32>, vector<8x8xf32> -> vector<8x8xf32>
    %c1_114 = arith.constant 1 : index
    %c0_115 = arith.constant 0 : index
    %c0_116 = arith.constant 0 : index
    %168 = vector.load %arg3[%c1_114, %c0_115, %c0_116] : memref<2x8x8xf32, #tpu.memory_space<vmem>>, vector<1x8x8xf32>
    %169 = vector.shape_cast %168 : vector<1x8x8xf32> to vector<8x8xf32>
    %170 = arith.addf %167, %169 : vector<8x8xf32>
    %cst_117 = arith.constant dense<0xFF800000> : vector<8xf32>
    %171 = vector.multi_reduction <maximumf>, %170, %cst_117 [1] : vector<8x8xf32> to vector<8xf32>
    %172 = vector.shape_cast %171 : vector<8xf32> to vector<8x1xf32>
    %173 = vector.broadcast %172 : vector<8x1xf32> to vector<8x8xf32>
    %174 = arith.subf %170, %173 : vector<8x8xf32>
    %175 = math.exp %174 : vector<8x8xf32>
    %cst_118 = arith.constant dense<0.000000e+00> : vector<8xf32>
    %176 = vector.multi_reduction <add>, %175, %cst_118 [1] : vector<8x8xf32> to vector<8xf32>
    %177 = vector.shape_cast %176 : vector<8xf32> to vector<8x1xf32>
    %178 = vector.broadcast %177 : vector<8x1xf32> to vector<8x8xf32>
    %179 = arith.divf %175, %178 : vector<8x8xf32>
    %c5 = arith.constant 5 : index
    %c0_119 = arith.constant 0 : index
    %c0_120 = arith.constant 0 : index
    %180 = vector.load %arg12[%c5, %c0_119, %c0_120] : memref<8x8x8xf32, #tpu.memory_space<vmem>>, vector<1x8x8xf32>
    %181 = vector.shape_cast %180 : vector<1x8x8xf32> to vector<8x8xf32>
    %182 = vector.shape_cast %179 : vector<8x8xf32> to vector<1x8x8xf32>
    tpu.vector_store %arg12[%c5, %c0_119, %c0_120], %182 {strides = array<i32>} : memref<8x8x8xf32, #tpu.memory_space<vmem>>, vector<1x8x8xf32>,
    %cst_121 = arith.constant dense<0.000000e+00> : vector<8x32xf32>
    %183 = tpu.matmul %179, %166, %cst_121 {dimension_numbers = #tpu.dot_dimension_numbers<[1], [0], [0], [1], [0, 0, 1, 1], [], []>} : vector<8x8xf32>, vector<8x32xf32>, vector<8x32xf32> -> vector<8x32xf32>
    %c2_122 = arith.constant 2 : index
    %c0_123 = arith.constant 0 : index
    %c0_124 = arith.constant 0 : index
    %184 = vector.load %arg7[%c2_122, %c0_123, %c0_124] : memref<4x32x128xf32, #tpu.memory_space<vmem>>, vector<1x32x128xf32>
    %185 = vector.shape_cast %184 : vector<1x32x128xf32> to vector<32x128xf32>
    %cst_125 = arith.constant dense<0.000000e+00> : vector<8x128xf32>
    %186 = tpu.matmul %183, %185, %cst_125 {dimension_numbers = #tpu.dot_dimension_numbers<[1], [0], [0], [1], [0, 0, 1, 1], [], []>} : vector<8x32xf32>, vector<32x128xf32>, vector<8x128xf32> -> vector<8x128xf32>
    %187 = arith.addf %128, %186 : vector<8x128xf32>
    %c3_126 = arith.constant 3 : index
    %c0_127 = arith.constant 0 : index
    %c0_128 = arith.constant 0 : index
    %188 = vector.load %arg4[%c3_126, %c0_127, %c0_128] : memref<4x128x32xf32, #tpu.memory_space<vmem>>, vector<1x128x32xf32>
    %189 = vector.shape_cast %188 : vector<1x128x32xf32> to vector<128x32xf32>
    %cst_129 = arith.constant dense<0.000000e+00> : vector<16x32xf32>
    %190 = tpu.matmul %0, %189, %cst_129 {dimension_numbers = #tpu.dot_dimension_numbers<[1], [0], [0], [1], [0, 0, 1, 1], [], []>} : vector<16x128xf32>, vector<128x32xf32>, vector<16x32xf32> -> vector<16x32xf32>
    %cst_130 = arith.constant 0.176776692 : f32
    %191 = vector.broadcast %cst_130 : f32 to vector<16x32xf32>
    %192 = arith.mulf %190, %191 : vector<16x32xf32>
    %c3_131 = arith.constant 3 : index
    %c0_132 = arith.constant 0 : index
    %c0_133 = arith.constant 0 : index
    %193 = vector.load %arg5[%c3_131, %c0_132, %c0_133] : memref<4x128x32xf32, #tpu.memory_space<vmem>>, vector<1x128x32xf32>
    %194 = vector.shape_cast %193 : vector<1x128x32xf32> to vector<128x32xf32>
    %cst_134 = arith.constant dense<0.000000e+00> : vector<16x32xf32>
    %195 = tpu.matmul %1, %194, %cst_134 {dimension_numbers = #tpu.dot_dimension_numbers<[1], [0], [0], [1], [0, 0, 1, 1], [], []>} : vector<16x128xf32>, vector<128x32xf32>, vector<16x32xf32> -> vector<16x32xf32>
    %c3_135 = arith.constant 3 : index
    %c0_136 = arith.constant 0 : index
    %c0_137 = arith.constant 0 : index
    %196 = vector.load %arg6[%c3_135, %c0_136, %c0_137] : memref<4x128x32xf32, #tpu.memory_space<vmem>>, vector<1x128x32xf32>
    %197 = vector.shape_cast %196 : vector<1x128x32xf32> to vector<128x32xf32>
    %cst_138 = arith.constant dense<0.000000e+00> : vector<16x32xf32>
    %198 = tpu.matmul %2, %197, %cst_138 {dimension_numbers = #tpu.dot_dimension_numbers<[1], [0], [0], [1], [0, 0, 1, 1], [], []>} : vector<16x128xf32>, vector<128x32xf32>, vector<16x32xf32> -> vector<16x32xf32>
    %199 = vector.extract_strided_slice %192 {offsets = [0, 0], sizes = [8, 32], strides = [1, 1]} : vector<16x32xf32> to vector<8x32xf32>
    %200 = vector.extract_strided_slice %195 {offsets = [0, 0], sizes = [8, 32], strides = [1, 1]} : vector<16x32xf32> to vector<8x32xf32>
    %201 = vector.extract_strided_slice %198 {offsets = [0, 0], sizes = [8, 32], strides = [1, 1]} : vector<16x32xf32> to vector<8x32xf32>
    %cst_139 = arith.constant dense<0.000000e+00> : vector<8x8xf32>
    %202 = tpu.matmul %199, %200, %cst_139 {dimension_numbers = #tpu.dot_dimension_numbers<[1], [1], [0], [0], [0, 0, 1, 0], [], []>} : vector<8x32xf32>, vector<8x32xf32>, vector<8x8xf32> -> vector<8x8xf32>
    %c0_140 = arith.constant 0 : index
    %c0_141 = arith.constant 0 : index
    %c0_142 = arith.constant 0 : index
    %203 = vector.load %arg3[%c0_140, %c0_141, %c0_142] : memref<2x8x8xf32, #tpu.memory_space<vmem>>, vector<1x8x8xf32>
    %204 = vector.shape_cast %203 : vector<1x8x8xf32> to vector<8x8xf32>
    %205 = arith.addf %202, %204 : vector<8x8xf32>
    %cst_143 = arith.constant dense<0xFF800000> : vector<8xf32>
    %206 = vector.multi_reduction <maximumf>, %205, %cst_143 [1] : vector<8x8xf32> to vector<8xf32>
    %207 = vector.shape_cast %206 : vector<8xf32> to vector<8x1xf32>
    %208 = vector.broadcast %207 : vector<8x1xf32> to vector<8x8xf32>
    %209 = arith.subf %205, %208 : vector<8x8xf32>
    %210 = math.exp %209 : vector<8x8xf32>
    %cst_144 = arith.constant dense<0.000000e+00> : vector<8xf32>
    %211 = vector.multi_reduction <add>, %210, %cst_144 [1] : vector<8x8xf32> to vector<8xf32>
    %212 = vector.shape_cast %211 : vector<8xf32> to vector<8x1xf32>
    %213 = vector.broadcast %212 : vector<8x1xf32> to vector<8x8xf32>
    %214 = arith.divf %210, %213 : vector<8x8xf32>
    %c6 = arith.constant 6 : index
    %c0_145 = arith.constant 0 : index
    %c0_146 = arith.constant 0 : index
    %215 = vector.load %arg12[%c6, %c0_145, %c0_146] : memref<8x8x8xf32, #tpu.memory_space<vmem>>, vector<1x8x8xf32>
    %216 = vector.shape_cast %215 : vector<1x8x8xf32> to vector<8x8xf32>
    %217 = vector.shape_cast %214 : vector<8x8xf32> to vector<1x8x8xf32>
    tpu.vector_store %arg12[%c6, %c0_145, %c0_146], %217 {strides = array<i32>} : memref<8x8x8xf32, #tpu.memory_space<vmem>>, vector<1x8x8xf32>,
    %cst_147 = arith.constant dense<0.000000e+00> : vector<8x32xf32>
    %218 = tpu.matmul %214, %201, %cst_147 {dimension_numbers = #tpu.dot_dimension_numbers<[1], [0], [0], [1], [0, 0, 1, 1], [], []>} : vector<8x8xf32>, vector<8x32xf32>, vector<8x32xf32> -> vector<8x32xf32>
    %c3_148 = arith.constant 3 : index
    %c0_149 = arith.constant 0 : index
    %c0_150 = arith.constant 0 : index
    %219 = vector.load %arg7[%c3_148, %c0_149, %c0_150] : memref<4x32x128xf32, #tpu.memory_space<vmem>>, vector<1x32x128xf32>
    %220 = vector.shape_cast %219 : vector<1x32x128xf32> to vector<32x128xf32>
    %cst_151 = arith.constant dense<0.000000e+00> : vector<8x128xf32>
    %221 = tpu.matmul %218, %220, %cst_151 {dimension_numbers = #tpu.dot_dimension_numbers<[1], [0], [0], [1], [0, 0, 1, 1], [], []>} : vector<8x32xf32>, vector<32x128xf32>, vector<8x128xf32> -> vector<8x128xf32>
    %222 = arith.addf %163, %221 : vector<8x128xf32>
    %223 = vector.extract_strided_slice %192 {offsets = [8, 0], sizes = [8, 32], strides = [1, 1]} : vector<16x32xf32> to vector<8x32xf32>
    %224 = vector.extract_strided_slice %195 {offsets = [8, 0], sizes = [8, 32], strides = [1, 1]} : vector<16x32xf32> to vector<8x32xf32>
    %225 = vector.extract_strided_slice %198 {offsets = [8, 0], sizes = [8, 32], strides = [1, 1]} : vector<16x32xf32> to vector<8x32xf32>
    %cst_152 = arith.constant dense<0.000000e+00> : vector<8x8xf32>
    %226 = tpu.matmul %223, %224, %cst_152 {dimension_numbers = #tpu.dot_dimension_numbers<[1], [1], [0], [0], [0, 0, 1, 0], [], []>} : vector<8x32xf32>, vector<8x32xf32>, vector<8x8xf32> -> vector<8x8xf32>
    %c1_153 = arith.constant 1 : index
    %c0_154 = arith.constant 0 : index
    %c0_155 = arith.constant 0 : index
    %227 = vector.load %arg3[%c1_153, %c0_154, %c0_155] : memref<2x8x8xf32, #tpu.memory_space<vmem>>, vector<1x8x8xf32>
    %228 = vector.shape_cast %227 : vector<1x8x8xf32> to vector<8x8xf32>
    %229 = arith.addf %226, %228 : vector<8x8xf32>
    %cst_156 = arith.constant dense<0xFF800000> : vector<8xf32>
    %230 = vector.multi_reduction <maximumf>, %229, %cst_156 [1] : vector<8x8xf32> to vector<8xf32>
    %231 = vector.shape_cast %230 : vector<8xf32> to vector<8x1xf32>
    %232 = vector.broadcast %231 : vector<8x1xf32> to vector<8x8xf32>
    %233 = arith.subf %229, %232 : vector<8x8xf32>
    %234 = math.exp %233 : vector<8x8xf32>
    %cst_157 = arith.constant dense<0.000000e+00> : vector<8xf32>
    %235 = vector.multi_reduction <add>, %234, %cst_157 [1] : vector<8x8xf32> to vector<8xf32>
    %236 = vector.shape_cast %235 : vector<8xf32> to vector<8x1xf32>
    %237 = vector.broadcast %236 : vector<8x1xf32> to vector<8x8xf32>
    %238 = arith.divf %234, %237 : vector<8x8xf32>
    %c7 = arith.constant 7 : index
    %c0_158 = arith.constant 0 : index
    %c0_159 = arith.constant 0 : index
    %239 = vector.load %arg12[%c7, %c0_158, %c0_159] : memref<8x8x8xf32, #tpu.memory_space<vmem>>, vector<1x8x8xf32>
    %240 = vector.shape_cast %239 : vector<1x8x8xf32> to vector<8x8xf32>
    %241 = vector.shape_cast %238 : vector<8x8xf32> to vector<1x8x8xf32>
    tpu.vector_store %arg12[%c7, %c0_158, %c0_159], %241 {strides = array<i32>} : memref<8x8x8xf32, #tpu.memory_space<vmem>>, vector<1x8x8xf32>,
    %cst_160 = arith.constant dense<0.000000e+00> : vector<8x32xf32>
    %242 = tpu.matmul %238, %225, %cst_160 {dimension_numbers = #tpu.dot_dimension_numbers<[1], [0], [0], [1], [0, 0, 1, 1], [], []>} : vector<8x8xf32>, vector<8x32xf32>, vector<8x32xf32> -> vector<8x32xf32>
    %c3_161 = arith.constant 3 : index
    %c0_162 = arith.constant 0 : index
    %c0_163 = arith.constant 0 : index
    %243 = vector.load %arg7[%c3_161, %c0_162, %c0_163] : memref<4x32x128xf32, #tpu.memory_space<vmem>>, vector<1x32x128xf32>
    %244 = vector.shape_cast %243 : vector<1x32x128xf32> to vector<32x128xf32>
    %cst_164 = arith.constant dense<0.000000e+00> : vector<8x128xf32>
    %245 = tpu.matmul %242, %244, %cst_164 {dimension_numbers = #tpu.dot_dimension_numbers<[1], [0], [0], [1], [0, 0, 1, 1], [], []>} : vector<8x32xf32>, vector<32x128xf32>, vector<8x128xf32> -> vector<8x128xf32>
    %246 = arith.addf %187, %245 : vector<8x128xf32>
    %cst_165 = arith.constant dense<0.000000e+00> : vector<8xf32>
    %247 = vector.multi_reduction <add>, %222, %cst_165 [1] : vector<8x128xf32> to vector<8xf32>
    %248 = vector.shape_cast %247 : vector<8xf32> to vector<8x1xf32>
    %cst_166 = arith.constant 1.280000e+02 : f32
    %249 = vector.broadcast %cst_166 : f32 to vector<8x1xf32>
    %250 = arith.divf %248, %249 : vector<8x1xf32>
    %251 = vector.broadcast %250 : vector<8x1xf32> to vector<8x128xf32>
    %252 = arith.subf %222, %251 : vector<8x128xf32>
    %253 = arith.mulf %252, %252 : vector<8x128xf32>
    %cst_167 = arith.constant dense<0.000000e+00> : vector<8xf32>
    %254 = vector.multi_reduction <add>, %253, %cst_167 [1] : vector<8x128xf32> to vector<8xf32>
    %255 = vector.shape_cast %254 : vector<8xf32> to vector<8x1xf32>
    %cst_168 = arith.constant 1.280000e+02 : f32
    %256 = vector.broadcast %cst_168 : f32 to vector<8x1xf32>
    %257 = arith.divf %255, %256 : vector<8x1xf32>
    %cst_169 = arith.constant 9.99999974E-6 : f32
    %258 = vector.broadcast %cst_169 : f32 to vector<8x1xf32>
    %259 = arith.addf %257, %258 : vector<8x1xf32>
    %260 = math.rsqrt %259 : vector<8x1xf32>
    %261 = vector.broadcast %260 : vector<8x1xf32> to vector<8x128xf32>
    %262 = arith.mulf %252, %261 : vector<8x128xf32>
    %c0_170 = arith.constant 0 : index
    %c0_171 = arith.constant 0 : index
    %263 = vector.load %arg9[%c0_170, %c0_171] : memref<1x128xf32, #tpu.memory_space<vmem>>, vector<1x128xf32>
    %264 = vector.broadcast %263 : vector<1x128xf32> to vector<8x128xf32>
    %265 = arith.mulf %262, %264 : vector<8x128xf32>
    %c0_172 = arith.constant 0 : index
    %c0_173 = arith.constant 0 : index
    %266 = vector.load %arg10[%c0_172, %c0_173] : memref<1x128xf32, #tpu.memory_space<vmem>>, vector<1x128xf32>
    %267 = vector.broadcast %266 : vector<1x128xf32> to vector<8x128xf32>
    %268 = arith.addf %265, %267 : vector<8x128xf32>
    %c0_174 = arith.constant 0 : index
    %c0_175 = arith.constant 0 : index
    %c0_176 = arith.constant 0 : index
    %269 = vector.load %arg11[%c0_174, %c0_175, %c0_176] : memref<2x8x128xf32, #tpu.memory_space<vmem>>, vector<1x8x128xf32>
    %270 = vector.shape_cast %269 : vector<1x8x128xf32> to vector<8x128xf32>
    %271 = vector.shape_cast %268 : vector<8x128xf32> to vector<1x8x128xf32>
    tpu.vector_store %arg11[%c0_174, %c0_175, %c0_176], %271 {strides = array<i32>} : memref<2x8x128xf32, #tpu.memory_space<vmem>>, vector<1x8x128xf32>,
    %cst_177 = arith.constant dense<0.000000e+00> : vector<8xf32>
    %272 = vector.multi_reduction <add>, %246, %cst_177 [1] : vector<8x128xf32> to vector<8xf32>
    %273 = vector.shape_cast %272 : vector<8xf32> to vector<8x1xf32>
    %cst_178 = arith.constant 1.280000e+02 : f32
    %274 = vector.broadcast %cst_178 : f32 to vector<8x1xf32>
    %275 = arith.divf %273, %274 : vector<8x1xf32>
    %276 = vector.broadcast %275 : vector<8x1xf32> to vector<8x128xf32>
    %277 = arith.subf %246, %276 : vector<8x128xf32>
    %278 = arith.mulf %277, %277 : vector<8x128xf32>
    %cst_179 = arith.constant dense<0.000000e+00> : vector<8xf32>
    %279 = vector.multi_reduction <add>, %278, %cst_179 [1] : vector<8x128xf32> to vector<8xf32>
    %280 = vector.shape_cast %279 : vector<8xf32> to vector<8x1xf32>
    %cst_180 = arith.constant 1.280000e+02 : f32
    %281 = vector.broadcast %cst_180 : f32 to vector<8x1xf32>
    %282 = arith.divf %280, %281 : vector<8x1xf32>
    %cst_181 = arith.constant 9.99999974E-6 : f32
    %283 = vector.broadcast %cst_181 : f32 to vector<8x1xf32>
    %284 = arith.addf %282, %283 : vector<8x1xf32>
    %285 = math.rsqrt %284 : vector<8x1xf32>
    %286 = vector.broadcast %285 : vector<8x1xf32> to vector<8x128xf32>
    %287 = arith.mulf %277, %286 : vector<8x128xf32>
    %c0_182 = arith.constant 0 : index
    %c0_183 = arith.constant 0 : index
    %288 = vector.load %arg9[%c0_182, %c0_183] : memref<1x128xf32, #tpu.memory_space<vmem>>, vector<1x128xf32>
    %289 = vector.broadcast %288 : vector<1x128xf32> to vector<8x128xf32>
    %290 = arith.mulf %287, %289 : vector<8x128xf32>
    %c0_184 = arith.constant 0 : index
    %c0_185 = arith.constant 0 : index
    %291 = vector.load %arg10[%c0_184, %c0_185] : memref<1x128xf32, #tpu.memory_space<vmem>>, vector<1x128xf32>
    %292 = vector.broadcast %291 : vector<1x128xf32> to vector<8x128xf32>
    %293 = arith.addf %290, %292 : vector<8x128xf32>
    %c1_186 = arith.constant 1 : index
    %c0_187 = arith.constant 0 : index
    %c0_188 = arith.constant 0 : index
    %294 = vector.load %arg11[%c1_186, %c0_187, %c0_188] : memref<2x8x128xf32, #tpu.memory_space<vmem>>, vector<1x8x128xf32>
    %295 = vector.shape_cast %294 : vector<1x8x128xf32> to vector<8x128xf32>
    %296 = vector.shape_cast %293 : vector<8x128xf32> to vector<1x8x128xf32>
    tpu.vector_store %arg11[%c1_186, %c0_187, %c0_188], %296 {strides = array<i32>} : memref<2x8x128xf32, #tpu.memory_space<vmem>>, vector<1x8x128xf32>,
    return
  }
}

</mosaic_0001>

<llo_original>
// kernel: tpu_custom_call.1
$region0: #{tpu_custom_call.1}
  #allocation0 [shape = 'u32[]', space=smem, size = 0x4, offset = 0x4, fixed_abs, tag = 'smem constant byte address 0x4 - core index']
  #allocation1 [shape = 'u32[144,128]{1,0:T(1,128)}', space=vmem, size = 0x12000, scoped, tag = 'internal scratch']
  %s0 = inlined_call_operand.vmem [shape: f32[16,128], index: 0, kind: input, shape index: {}]
  %s1 = inlined_call_operand.vmem [shape: f32[16,128], index: 1, kind: input, shape index: {}]
  %s2 = inlined_call_operand.vmem [shape: f32[16,128], index: 2, kind: input, shape index: {}]
  %s3 = inlined_call_operand.vmem [shape: f32[2,8,8], index: 3, kind: input, shape index: {}]
  %s4 = inlined_call_operand.vmem [shape: f32[4,128,32], index: 4, kind: input, shape index: {}]
  %s5 = inlined_call_operand.vmem [shape: f32[4,128,32], index: 5, kind: input, shape index: {}]
  %s6 = inlined_call_operand.vmem [shape: f32[4,128,32], index: 6, kind: input, shape index: {}]
  %s7 = inlined_call_operand.vmem [shape: f32[4,32,128], index: 7, kind: input, shape index: {}]
  %s8 = inlined_call_operand.vmem [shape: f32[1,128], index: 8, kind: input, shape index: {}]
  %s9 = inlined_call_operand.vmem [shape: f32[1,128], index: 9, kind: input, shape index: {}]
  %s10 = inlined_call_operand.vmem [shape: f32[1,128], index: 10, kind: input, shape index: {}]
  %s11 = inlined_call_operand.hbm [shape: f32[2,8,128], index: 11, kind: output, shape index: {0}]
  %s12 = inlined_call_operand.hbm [shape: f32[8,8,8], index: 12, kind: output, shape index: {1}]
  %13 = xla_tuple %s11, %s12
  %s14 = sld [smem:[#allocation0]]
  $region62: #{tpu_custom_call.1} parent=0
    _
  %s16 = ssub.s32 1, %s14
  %s17 = scalar_select 0, %s16, %s14
  $region1: #{tpu_custom_call.1} parent=0
    #allocation2 [shape = 'u8[8192]{0}', space=vmem, size = 0x2000, scoped, tag = 'output window, operand 0, single buffered']
    #allocation3 [shape = 's32[1]{0}', space=sflag, size = 0x4, scoped, tag = 'scoped memory for tpu_custom_call.1']
    #allocation4 [shape = 'u8[32768]{0}', space=vmem, size = 0x8000, scoped, tag = 'output window, operand 1, single buffered']
    #allocation5 [shape = 's32[1]{0}', space=sflag, size = 0x4, scoped, tag = 'scoped memory for tpu_custom_call.1']
    %18 = vsyncpa [#allocation3], 0
    %19 = vsyncpa [#allocation5], 0
    // Predicated region
    $region2: #{tpu_custom_call.1} parent=1 // pred_check
      _
    $region3: #{tpu_custom_call.1} parent=1 // pred_check_branch
      %21 = sbr.rel (0) target = $region5
    $region4: #{tpu_custom_call.1} parent=1 // pred_region
      _
    $region5: #{tpu_custom_call.1} parent=1 // pred_fallthru
      _
    // Predicated region
    $region6: #{tpu_custom_call.1} parent=1 // pred_check
      _
    $region7: #{tpu_custom_call.1} parent=1 // pred_check_branch
      %23 = sbr.rel (0) target = $region9
    $region8: #{tpu_custom_call.1} parent=1 // pred_region
      _
    $region9: #{tpu_custom_call.1} parent=1 // pred_fallthru
      _
    // Predicated region
    $region10: #{tpu_custom_call.1} parent=1 // pred_check
      _
    $region11: #{tpu_custom_call.1} parent=1 // pred_check_branch
      %25 = sbr.rel (0) target = $region13
    $region12: #{tpu_custom_call.1} parent=1 // pred_region
      _
    $region13: #{tpu_custom_call.1} parent=1 // pred_fallthru
      _
    // Predicated region
    $region14: #{tpu_custom_call.1} parent=1 // pred_check
      _
    $region15: #{tpu_custom_call.1} parent=1 // pred_check_branch
      %27 = sbr.rel (0) target = $region17
    $region16: #{tpu_custom_call.1} parent=1 // pred_region
      _
    $region17: #{tpu_custom_call.1} parent=1 // pred_fallthru
      _
    // Predicated region
    $region18: #{tpu_custom_call.1} parent=1 // pred_check
      _
    $region19: #{tpu_custom_call.1} parent=1 // pred_check_branch
      %29 = sbr.rel (0) target = $region21
    $region20: #{tpu_custom_call.1} parent=1 // pred_region
      _
    $region21: #{tpu_custom_call.1} parent=1 // pred_fallthru
      _
    // Predicated region
    $region22: #{tpu_custom_call.1} parent=1 // pred_check
      _
    $region23: #{tpu_custom_call.1} parent=1 // pred_check_branch
      %31 = sbr.rel (0) target = $region25
    $region24: #{tpu_custom_call.1} parent=1 // pred_region
      _
    $region25: #{tpu_custom_call.1} parent=1 // pred_fallthru
      _
    // Predicated region
    $region26: #{tpu_custom_call.1} parent=1 // pred_check
      _
    $region27: #{tpu_custom_call.1} parent=1 // pred_check_branch
      %33 = sbr.rel (0) target = $region29
    $region28: #{tpu_custom_call.1} parent=1 // pred_region
      _
    $region29: #{tpu_custom_call.1} parent=1 // pred_fallthru
      _
    // Predicated region
    $region30: #{tpu_custom_call.1} parent=1 // pred_check
      _
    $region31: #{tpu_custom_call.1} parent=1 // pred_check_branch
      %35 = sbr.rel (0) target = $region33
    $region32: #{tpu_custom_call.1} parent=1 // pred_region
      _
    $region33: #{tpu_custom_call.1} parent=1 // pred_fallthru
      _
    // Predicated region
    $region34: #{tpu_custom_call.1} parent=1 // pred_check
      _
    $region35: #{tpu_custom_call.1} parent=1 // pred_check_branch
      %37 = sbr.rel (0) target = $region37
    $region36: #{tpu_custom_call.1} parent=1 // pred_region
      _
    $region37: #{tpu_custom_call.1} parent=1 // pred_fallthru
      _
    // Predicated region
    $region38: #{tpu_custom_call.1} parent=1 // pred_check
      _
    $region39: #{tpu_custom_call.1} parent=1 // pred_check_branch
      %39 = sbr.rel (0) target = $region41
    $region40: #{tpu_custom_call.1} parent=1 // pred_region
      _
    $region41: #{tpu_custom_call.1} parent=1 // pred_fallthru
      _
    // Predicated region
    $region42: #{tpu_custom_call.1} parent=1 // pred_check
      _
    $region43: #{tpu_custom_call.1} parent=1 // pred_check_branch
      %41 = sbr.rel (0) target = $region45
    $region44: #{tpu_custom_call.1} parent=1 // pred_region
      _
    $region45: #{tpu_custom_call.1} parent=1 // pred_fallthru
      _
    %v42 = vld [vmem:[%s0] sm:$0xff]
    %v43 = vld [vmem:[%s0 + $0x8] sm:$0xff]
    %v44 = vld [vmem:[%s1] sm:$0xff]
    %v45 = vld [vmem:[%s1 + $0x8] sm:$0xff]
    %v46 = vld [vmem:[%s2] sm:$0xff]
    %v47 = vld [vmem:[%s2 + $0x8] sm:$0xff]
    %v48 = vld [vmem:[%s8] sm:$0x1]
    %v50 = vlaneseq
    %v51 = vshrl.u32 %v50, 7
    %v52 = vsub.s32 0, %v51
    %v53 = vrot.slane %v48, %v52
    %v55 = vadd.f32 %v42, %v53
    %v56 = vadd.f32 %v43, %v53
    %v57 = vld [vmem:[%s4] sm:$0xff]
    %v58 = vld [vmem:[%s4 + $0x8] sm:$0xff]
    %v59 = vld [vmem:[%s4 + $0x10] sm:$0xff]
    %v60 = vld [vmem:[%s4 + $0x18] sm:$0xff]
    %v61 = vld [vmem:[%s4 + $0x20] sm:$0xff]
    %v62 = vld [vmem:[%s4 + $0x28] sm:$0xff]
    %v63 = vld [vmem:[%s4 + $0x30] sm:$0xff]
    %v64 = vld [vmem:[%s4 + $0x38] sm:$0xff]
    %v65 = vld [vmem:[%s4 + $0x40] sm:$0xff]
    %v66 = vld [vmem:[%s4 + $0x48] sm:$0xff]
    %v67 = vld [vmem:[%s4 + $0x50] sm:$0xff]
    %v68 = vld [vmem:[%s4 + $0x58] sm:$0xff]
    %v69 = vld [vmem:[%s4 + $0x60] sm:$0xff]
    %v70 = vld [vmem:[%s4 + $0x68] sm:$0xff]
    %v71 = vld [vmem:[%s4 + $0x70] sm:$0xff]
    %v72 = vld [vmem:[%s4 + $0x78] sm:$0xff]
    %73 = vmatprep.subr.mxu0 0.0
    %74 = vmatpush1.msra.mxu0 %v72
    %75 = vmatprep.subr.mxu0 0.0
    %76 = vmatpush1.msra.mxu0 %v71
    %77 = vmatprep.subr.mxu0 0.0
    %78 = vmatpush1.msra.mxu0 %v70
    %79 = vmatprep.subr.mxu0 0.0
    %80 = vmatpush1.msra.mxu0 %v69
    %81 = vmatprep.subr.mxu0 0.0
    %82 = vmatpush1.msra.mxu0 %v68
    %83 = vmatprep.subr.mxu0 0.0
    %84 = vmatpush1.msra.mxu0 %v67
    %85 = vmatprep.subr.mxu0 0.0
    %86 = vmatpush1.msra.mxu0 %v66
    %87 = vmatprep.subr.mxu0 0.0
    %88 = vmatpush1.msra.mxu0 %v65
    %89 = vmatprep.subr.mxu0 0.0
    %90 = vmatpush1.msra.mxu0 %v64
    %91 = vmatprep.subr.mxu0 0.0
    %92 = vmatpush1.msra.mxu0 %v63
    %93 = vmatprep.subr.mxu0 0.0
    %94 = vmatpush1.msra.mxu0 %v62
    %95 = vmatprep.subr.mxu0 0.0
    %96 = vmatpush1.msra.mxu0 %v61
    %97 = vmatprep.subr.mxu0 0.0
    %98 = vmatpush1.msra.mxu0 %v60
    %99 = vmatprep.subr.mxu0 0.0
    %100 = vmatpush1.msra.mxu0 %v59
    %101 = vmatprep.subr.mxu0 0.0
    %102 = vmatpush1.msra.mxu0 %v58
    %103 = vmatprep.subr.mxu0 0.0
    %104 = vmatpush1.msra.mxu0 %v57
    %105 = vmatprep.subr.mxu0 0.0
    %106 = vmatpush2.msra.mxu0 0.0
    %107 = vmatprep.subr.mxu0 0.0
    %108 = vmatpush2.msra.mxu0 0.0
    %109 = vmatprep.subr.mxu0 0.0
    %110 = vmatpush2.msra.mxu0 0.0
    %111 = vmatprep.subr.mxu0 0.0
    %112 = vmatpush2.msra.mxu0 0.0
    %113 = vmatprep.subr.mxu0 0.0
    %114 = vmatpush2.msra.mxu0 0.0
    %115 = vmatprep.subr.mxu0 0.0
    %116 = vmatpush2.msra.mxu0 0.0
    %117 = vmatprep.subr.mxu0 0.0
    %118 = vmatpush2.msra.mxu0 0.0
    %119 = vmatprep.subr.mxu0 0.0
    %120 = vmatpush2.msra.mxu0 0.0
    %121 = vmatprep.subr.mxu0 0.0
    %122 = vmatpush2.msra.mxu0 0.0
    %123 = vmatprep.subr.mxu0 0.0
    %124 = vmatpush2.msra.mxu0 0.0
    %125 = vmatprep.subr.mxu0 0.0
    %126 = vmatpush2.msra.mxu0 0.0
    %127 = vmatprep.subr.mxu0 0.0
    %128 = vmatpush2.msra.mxu0 0.0
    %129 = vmatprep.subr.mxu0 0.0
    %130 = vmatpush2.msra.mxu0 0.0
    %131 = vmatprep.subr.mxu0 0.0
    %132 = vmatpush2.msra.mxu0 0.0
    %133 = vmatprep.subr.mxu0 0.0
    %134 = vmatpush2.msra.mxu0 0.0
    %135 = vmatprep.subr.mxu0 0.0
    %136 = vmatpush2.msra.mxu0 0.0
    %137 = vmatprep.mubr.f32.mxu0 0.0
    %138 = vmatmul.mubr.f32.gmra.mxu0 %v42
    %v139 = vpop.f32.mrf.mxu0
    %v140 = vadd.f32 0.0, %v139
    %v141 = vpop.f32.mrf.mxu0
    %142 = vmatprep.mubr.f32.mxu0 0.0
    %143 = vmatmul.mubr.f32.gmra.mxu0 %v43
    %v144 = vpop.f32.mrf.mxu0
    %v145 = vadd.f32 0.0, %v144
    %v146 = vpop.f32.mrf.mxu0
    %147 = vdwg.mxu0
    %v148 = vmul.f32 %v140, 0.17677669
    %v149 = vmul.f32 %v145, 0.17677669
    %v150 = vld [vmem:[%s5] sm:$0xff]
    %v151 = vld [vmem:[%s5 + $0x8] sm:$0xff]
    %v152 = vld [vmem:[%s5 + $0x10] sm:$0xff]
    %v153 = vld [vmem:[%s5 + $0x18] sm:$0xff]
    %v154 = vld [vmem:[%s5 + $0x20] sm:$0xff]
    %v155 = vld [vmem:[%s5 + $0x28] sm:$0xff]
    %v156 = vld [vmem:[%s5 + $0x30] sm:$0xff]
    %v157 = vld [vmem:[%s5 + $0x38] sm:$0xff]
    %v158 = vld [vmem:[%s5 + $0x40] sm:$0xff]
    %v159 = vld [vmem:[%s5 + $0x48] sm:$0xff]
    %v160 = vld [vmem:[%s5 + $0x50] sm:$0xff]
    %v161 = vld [vmem:[%s5 + $0x58] sm:$0xff]
    %v162 = vld [vmem:[%s5 + $0x60] sm:$0xff]
    %v163 = vld [vmem:[%s5 + $0x68] sm:$0xff]
    %v164 = vld [vmem:[%s5 + $0x70] sm:$0xff]
    %v165 = vld [vmem:[%s5 + $0x78] sm:$0xff]
    %166 = vmatprep.subr.mxu0 0.0
    %167 = vmatpush1.msra.mxu0 %v165
    %168 = vmatprep.subr.mxu0 0.0
    %169 = vmatpush1.msra.mxu0 %v164
    %170 = vmatprep.subr.mxu0 0.0
    %171 = vmatpush1.msra.mxu0 %v163
    %172 = vmatprep.subr.mxu0 0.0
    %173 = vmatpush1.msra.mxu0 %v162
    %174 = vmatprep.subr.mxu0 0.0
    %175 = vmatpush1.msra.mxu0 %v161
    %176 = vmatprep.subr.mxu0 0.0
    %177 = vmatpush1.msra.mxu0 %v160
    %178 = vmatprep.subr.mxu0 0.0
    %179 = vmatpush1.msra.mxu0 %v159
    %180 = vmatprep.subr.mxu0 0.0
    %181 = vmatpush1.msra.mxu0 %v158
    %182 = vmatprep.subr.mxu0 0.0
    %183 = vmatpush1.msra.mxu0 %v157
    %184 = vmatprep.subr.mxu0 0.0
    %185 = vmatpush1.msra.mxu0 %v156
    %186 = vmatprep.subr.mxu0 0.0
    %187 = vmatpush1.msra.mxu0 %v155
    %188 = vmatprep.subr.mxu0 0.0
    %189 = vmatpush1.msra.mxu0 %v154
    %190 = vmatprep.subr.mxu0 0.0
    %191 = vmatpush1.msra.mxu0 %v153
    %192 = vmatprep.subr.mxu0 0.0
    %193 = vmatpush1.msra.mxu0 %v152
    %194 = vmatprep.subr.mxu0 0.0
    %195 = vmatpush1.msra.mxu0 %v151
    %196 = vmatprep.subr.mxu0 0.0
    %197 = vmatpush1.msra.mxu0 %v150
    %198 = vmatprep.subr.mxu0 0.0
    %199 = vmatpush2.msra.mxu0 0.0
    %200 = vmatprep.subr.mxu0 0.0
    %201 = vmatpush2.msra.mxu0 0.0
    %202 = vmatprep.subr.mxu0 0.0
    %203 = vmatpush2.msra.mxu0 0.0
    %204 = vmatprep.subr.mxu0 0.0
    %205 = vmatpush2.msra.mxu0 0.0
    %206 = vmatprep.subr.mxu0 0.0
    %207 = vmatpush2.msra.mxu0 0.0
    %208 = vmatprep.subr.mxu0 0.0
    %209 = vmatpush2.msra.mxu0 0.0
    %210 = vmatprep.subr.mxu0 0.0
    %211 = vmatpush2.msra.mxu0 0.0
    %212 = vmatprep.subr.mxu0 0.0
    %213 = vmatpush2.msra.mxu0 0.0
    %214 = vmatprep.subr.mxu0 0.0
    %215 = vmatpush2.msra.mxu0 0.0
    %216 = vmatprep.subr.mxu0 0.0
    %217 = vmatpush2.msra.mxu0 0.0
    %218 = vmatprep.subr.mxu0 0.0
    %219 = vmatpush2.msra.mxu0 0.0
    %220 = vmatprep.subr.mxu0 0.0
    %221 = vmatpush2.msra.mxu0 0.0
    %222 = vmatprep.subr.mxu0 0.0
    %223 = vmatpush2.msra.mxu0 0.0
    %224 = vmatprep.subr.mxu0 0.0
    %225 = vmatpush2.msra.mxu0 0.0
    %226 = vmatprep.subr.mxu0 0.0
    %227 = vmatpush2.msra.mxu0 0.0
    %228 = vmatprep.subr.mxu0 0.0
    %229 = vmatpush2.msra.mxu0 0.0
    %230 = vmatprep.mubr.f32.mxu0 0.0
    %231 = vmatmul.mubr.f32.gmra.mxu0 %v44
    %v232 = vpop.f32.mrf.mxu0
    %v233 = vadd.f32 0.0, %v232
    %v234 = vpop.f32.mrf.mxu0
    %235 = vmatprep.mubr.f32.mxu0 0.0
    %236 = vmatmul.mubr.f32.gmra.mxu0 %v45
    %v237 = vpop.f32.mrf.mxu0
    %v238 = vadd.f32 0.0, %v237
    %v239 = vpop.f32.mrf.mxu0
    %240 = vdwg.mxu0
    %v241 = vld [vmem:[%s6] sm:$0xff]
    %v242 = vld [vmem:[%s6 + $0x8] sm:$0xff]
    %v243 = vld [vmem:[%s6 + $0x10] sm:$0xff]
    %v244 = vld [vmem:[%s6 + $0x18] sm:$0xff]
    %v245 = vld [vmem:[%s6 + $0x20] sm:$0xff]
    %v246 = vld [vmem:[%s6 + $0x28] sm:$0xff]
    %v247 = vld [vmem:[%s6 + $0x30] sm:$0xff]
    %v248 = vld [vmem:[%s6 + $0x38] sm:$0xff]
    %v249 = vld [vmem:[%s6 + $0x40] sm:$0xff]
    %v250 = vld [vmem:[%s6 + $0x48] sm:$0xff]
    %v251 = vld [vmem:[%s6 + $0x50] sm:$0xff]
    %v252 = vld [vmem:[%s6 + $0x58] sm:$0xff]
    %v253 = vld [vmem:[%s6 + $0x60] sm:$0xff]
    %v254 = vld [vmem:[%s6 + $0x68] sm:$0xff]
    %v255 = vld [vmem:[%s6 + $0x70] sm:$0xff]
    %v256 = vld [vmem:[%s6 + $0x78] sm:$0xff]
    %257 = vmatprep.subr.mxu0 0.0
    %258 = vmatpush1.msra.mxu0 %v256
    %259 = vmatprep.subr.mxu0 0.0
    %260 = vmatpush1.msra.mxu0 %v255
    %261 = vmatprep.subr.mxu0 0.0
    %262 = vmatpush1.msra.mxu0 %v254
    %263 = vmatprep.subr.mxu0 0.0
    %264 = vmatpush1.msra.mxu0 %v253
    %265 = vmatprep.subr.mxu0 0.0
    %266 = vmatpush1.msra.mxu0 %v252
    %267 = vmatprep.subr.mxu0 0.0
    %268 = vmatpush1.msra.mxu0 %v251
    %269 = vmatprep.subr.mxu0 0.0
    %270 = vmatpush1.msra.mxu0 %v250
    %271 = vmatprep.subr.mxu0 0.0
    %272 = vmatpush1.msra.mxu0 %v249
    %273 = vmatprep.subr.mxu0 0.0
    %274 = vmatpush1.msra.mxu0 %v248
    %275 = vmatprep.subr.mxu0 0.0
    %276 = vmatpush1.msra.mxu0 %v247
    %277 = vmatprep.subr.mxu0 0.0
    %278 = vmatpush1.msra.mxu0 %v246
    %279 = vmatprep.subr.mxu0 0.0
    %280 = vmatpush1.msra.mxu0 %v245
    %281 = vmatprep.subr.mxu0 0.0
    %282 = vmatpush1.msra.mxu0 %v244
    %283 = vmatprep.subr.mxu0 0.0
    %284 = vmatpush1.msra.mxu0 %v243
    %285 = vmatprep.subr.mxu0 0.0
    %286 = vmatpush1.msra.mxu0 %v242
    %287 = vmatprep.subr.mxu0 0.0
    %288 = vmatpush1.msra.mxu0 %v241
    %289 = vmatprep.subr.mxu0 0.0
    %290 = vmatpush2.msra.mxu0 0.0
    %291 = vmatprep.subr.mxu0 0.0
    %292 = vmatpush2.msra.mxu0 0.0
    %293 = vmatprep.subr.mxu0 0.0
    %294 = vmatpush2.msra.mxu0 0.0
    %295 = vmatprep.subr.mxu0 0.0
    %296 = vmatpush2.msra.mxu0 0.0
    %297 = vmatprep.subr.mxu0 0.0
    %298 = vmatpush2.msra.mxu0 0.0
    %299 = vmatprep.subr.mxu0 0.0
    %300 = vmatpush2.msra.mxu0 0.0
    %301 = vmatprep.subr.mxu0 0.0
    %302 = vmatpush2.msra.mxu0 0.0
    %303 = vmatprep.subr.mxu0 0.0
    %304 = vmatpush2.msra.mxu0 0.0
    %305 = vmatprep.subr.mxu0 0.0
    %306 = vmatpush2.msra.mxu0 0.0
    %307 = vmatprep.subr.mxu0 0.0
    %308 = vmatpush2.msra.mxu0 0.0
    %309 = vmatprep.subr.mxu0 0.0
    %310 = vmatpush2.msra.mxu0 0.0
    %311 = vmatprep.subr.mxu0 0.0
    %312 = vmatpush2.msra.mxu0 0.0
    %313 = vmatprep.subr.mxu0 0.0
    %314 = vmatpush2.msra.mxu0 0.0
    %315 = vmatprep.subr.mxu0 0.0
    %316 = vmatpush2.msra.mxu0 0.0
    %317 = vmatprep.subr.mxu0 0.0
    %318 = vmatpush2.msra.mxu0 0.0
    %319 = vmatprep.subr.mxu0 0.0
    %320 = vmatpush2.msra.mxu0 0.0
    %321 = vmatprep.mubr.f32.mxu0 0.0
    %322 = vmatmul.mubr.f32.gmra.mxu0 %v46
    %v323 = vpop.f32.mrf.mxu0
    %v324 = vadd.f32 0.0, %v323
    %v325 = vpop.f32.mrf.mxu0
    %326 = vmatprep.mubr.f32.mxu0 0.0
    %327 = vmatmul.mubr.f32.gmra.mxu0 %v47
    %v328 = vpop.f32.mrf.mxu0
    %v329 = vadd.f32 0.0, %v328
    %v330 = vpop.f32.mrf.mxu0
    %331 = vdwg.mxu0
    %v332 = vld [vmem:[%s3] sm:$0xff]
    %vm333 = vcmask 261120
    %v335 = vsel %vm333, %v148, 0
    %v338 = vsel %vm333, %v233, 0
    %340 = vmatprep.subr.mxu0 0.0
    %341 = vmatpush1.xpose.msra.mxu0 0.0
    %342 = vmatprep.subr.mxu0 0.0
    %343 = vmatpush1.xpose.msra.mxu0 0.0
    %344 = vmatprep.subr.mxu0 0.0
    %345 = vmatpush1.xpose.msra.mxu0 0.0
    %346 = vmatprep.subr.mxu0 0.0
    %347 = vmatpush1.xpose.msra.mxu0 0.0
    %348 = vmatprep.subr.mxu0 0.0
    %349 = vmatpush1.xpose.msra.mxu0 0.0
    %350 = vmatprep.subr.mxu0 0.0
    %351 = vmatpush1.xpose.msra.mxu0 0.0
    %352 = vmatprep.subr.mxu0 0.0
    %353 = vmatpush1.xpose.msra.mxu0 0.0
    %354 = vmatprep.subr.mxu0 0.0
    %355 = vmatpush1.xpose.msra.mxu0 0.0
    %356 = vmatprep.subr.mxu0 0.0
    %357 = vmatpush1.xpose.msra.mxu0 0.0
    %358 = vmatprep.subr.mxu0 0.0
    %359 = vmatpush1.xpose.msra.mxu0 0.0
    %360 = vmatprep.subr.mxu0 0.0
    %361 = vmatpush1.xpose.msra.mxu0 0.0
    %362 = vmatprep.subr.mxu0 0.0
    %363 = vmatpush1.xpose.msra.mxu0 0.0
    %364 = vmatprep.subr.mxu0 0.0
    %365 = vmatpush1.xpose.msra.mxu0 0.0
    %366 = vmatprep.subr.mxu0 0.0
    %367 = vmatpush1.xpose.msra.mxu0 0.0
    %368 = vmatprep.subr.mxu0 0.0
    %369 = vmatpush1.xpose.msra.mxu0 0.0
    %370 = vmatprep.subr.mxu0 0.0
    %371 = vmatpush1.xpose.msra.mxu0 %v338
    %372 = vmatprep.subr.mxu0 0.0
    %373 = vmatpush2.xpose.msra.mxu0 0.0
    %374 = vmatprep.subr.mxu0 0.0
    %375 = vmatpush2.xpose.msra.mxu0 0.0
    %376 = vmatprep.subr.mxu0 0.0
    %377 = vmatpush2.xpose.msra.mxu0 0.0
    %378 = vmatprep.subr.mxu0 0.0
    %379 = vmatpush2.xpose.msra.mxu0 0.0
    %380 = vmatprep.subr.mxu0 0.0
    %381 = vmatpush2.xpose.msra.mxu0 0.0
    %382 = vmatprep.subr.mxu0 0.0
    %383 = vmatpush2.xpose.msra.mxu0 0.0
    %384 = vmatprep.subr.mxu0 0.0
    %385 = vmatpush2.xpose.msra.mxu0 0.0
    %386 = vmatprep.subr.mxu0 0.0
    %387 = vmatpush2.xpose.msra.mxu0 0.0
    %388 = vmatprep.subr.mxu0 0.0
    %389 = vmatpush2.xpose.msra.mxu0 0.0
    %390 = vmatprep.subr.mxu0 0.0
    %391 = vmatpush2.xpose.msra.mxu0 0.0
    %392 = vmatprep.subr.mxu0 0.0
    %393 = vmatpush2.xpose.msra.mxu0 0.0
    %394 = vmatprep.subr.mxu0 0.0
    %395 = vmatpush2.xpose.msra.mxu0 0.0
    %396 = vmatprep.subr.mxu0 0.0
    %397 = vmatpush2.xpose.msra.mxu0 0.0
    %398 = vmatprep.subr.mxu0 0.0
    %399 = vmatpush2.xpose.msra.mxu0 0.0
    %400 = vmatprep.subr.mxu0 0.0
    %401 = vmatpush2.xpose.msra.mxu0 0.0
    %402 = vmatprep.subr.mxu0 0.0
    %403 = vmatpush2.xpose.msra.mxu0 0.0
    %404 = vmatprep.mubr.f32.mxu0 0.0
    %405 = vmatmul.mubr.f32.gmra.mxu0 %v335
    %v406 = vpop.f32.mrf.mxu0
    %v407 = vadd.f32 %v332, %v406
    %v408 = vpop.f32.mrf.mxu0
    %409 = vdwg.mxu0
    %vm410 = vcmask 64512
    %v411 = vsel %vm410, %v407, -inf
    %412 = vmax.xlane.f32.xlu0 %v411
    %v413 = vpop.xlane.xlu0 %412
    %v414 = vsub.f32 %v407, %v413
    %v415 = vmul.f32 %v414, 1.442695
    %v416 = vpow.pop %v415
    %v417 = vsel %vm410, %v416, 0.0
    %418 = vadd.xlane.f32.xlu0 %v417
    %v419 = vpop.xlane.xlu0 %418
    %v420 = vrcp.pop %v419
    %v421 = vmul.f32 %v416, %v420
    %422 = vst.msk [vmem:[#allocation4] sm:$0xff] %vm410, %v421
    %v424 = vsel %vm410, %v421, 0
    %426 = vmatprep.subr.mxu0 0.0
    %427 = vmatpush1.msra.mxu0 0.0
    %428 = vmatprep.subr.mxu0 0.0
    %429 = vmatpush1.msra.mxu0 0.0
    %430 = vmatprep.subr.mxu0 0.0
    %431 = vmatpush1.msra.mxu0 0.0
    %432 = vmatprep.subr.mxu0 0.0
    %433 = vmatpush1.msra.mxu0 0.0
    %434 = vmatprep.subr.mxu0 0.0
    %435 = vmatpush1.msra.mxu0 0.0
    %436 = vmatprep.subr.mxu0 0.0
    %437 = vmatpush1.msra.mxu0 0.0
    %438 = vmatprep.subr.mxu0 0.0
    %439 = vmatpush1.msra.mxu0 0.0
    %440 = vmatprep.subr.mxu0 0.0
    %441 = vmatpush1.msra.mxu0 0.0
    %442 = vmatprep.subr.mxu0 0.0
    %443 = vmatpush1.msra.mxu0 0.0
    %444 = vmatprep.subr.mxu0 0.0
    %445 = vmatpush1.msra.mxu0 0.0
    %446 = vmatprep.subr.mxu0 0.0
    %447 = vmatpush1.msra.mxu0 0.0
    %448 = vmatprep.subr.mxu0 0.0
    %449 = vmatpush1.msra.mxu0 0.0
    %450 = vmatprep.subr.mxu0 0.0
    %451 = vmatpush1.msra.mxu0 0.0
    %452 = vmatprep.subr.mxu0 0.0
    %453 = vmatpush1.msra.mxu0 0.0
    %454 = vmatprep.subr.mxu0 0.0
    %455 = vmatpush1.msra.mxu0 0.0
    %456 = vmatprep.subr.mxu0 0.0
    %457 = vmatpush1.msra.mxu0 %v324
    %458 = vmatprep.subr.mxu0 0.0
    %459 = vmatpush2.msra.mxu0 0.0
    %460 = vmatprep.subr.mxu0 0.0
    %461 = vmatpush2.msra.mxu0 0.0
    %462 = vmatprep.subr.mxu0 0.0
    %463 = vmatpush2.msra.mxu0 0.0
    %464 = vmatprep.subr.mxu0 0.0
    %465 = vmatpush2.msra.mxu0 0.0
    %466 = vmatprep.subr.mxu0 0.0
    %467 = vmatpush2.msra.mxu0 0.0
    %468 = vmatprep.subr.mxu0 0.0
    %469 = vmatpush2.msra.mxu0 0.0
    %470 = vmatprep.subr.mxu0 0.0
    %471 = vmatpush2.msra.mxu0 0.0
    %472 = vmatprep.subr.mxu0 0.0
    %473 = vmatpush2.msra.mxu0 0.0
    %474 = vmatprep.subr.mxu0 0.0
    %475 = vmatpush2.msra.mxu0 0.0
    %476 = vmatprep.subr.mxu0 0.0
    %477 = vmatpush2.msra.mxu0 0.0
    %478 = vmatprep.subr.mxu0 0.0
    %479 = vmatpush2.msra.mxu0 0.0
    %480 = vmatprep.subr.mxu0 0.0
    %481 = vmatpush2.msra.mxu0 0.0
    %482 = vmatprep.subr.mxu0 0.0
    %483 = vmatpush2.msra.mxu0 0.0
    %484 = vmatprep.subr.mxu0 0.0
    %485 = vmatpush2.msra.mxu0 0.0
    %486 = vmatprep.subr.mxu0 0.0
    %487 = vmatpush2.msra.mxu0 0.0
    %488 = vmatprep.subr.mxu0 0.0
    %489 = vmatpush2.msra.mxu0 0.0
    %490 = vmatprep.mubr.f32.mxu0 0.0
    %491 = vmatmul.mubr.f32.gmra.mxu0 %v424
    %v492 = vpop.f32.mrf.mxu0
    %v493 = vadd.f32 0.0, %v492
    %v494 = vpop.f32.mrf.mxu0
    %495 = vdwg.mxu0
    %v496 = vld [vmem:[%s7] sm:$0xff]
    %v497 = vld [vmem:[%s7 + $0x8] sm:$0xff]
    %v498 = vld [vmem:[%s7 + $0x10] sm:$0xff]
    %v499 = vld [vmem:[%s7 + $0x18] sm:$0xff]
    %v501 = vsel %vm333, %v493, 0
    %503 = vmatprep.subr.mxu0 0.0
    %504 = vmatpush1.msra.mxu0 0.0
    %505 = vmatprep.subr.mxu0 0.0
    %506 = vmatpush1.msra.mxu0 0.0
    %507 = vmatprep.subr.mxu0 0.0
    %508 = vmatpush1.msra.mxu0 0.0
    %509 = vmatprep.subr.mxu0 0.0
    %510 = vmatpush1.msra.mxu0 0.0
    %511 = vmatprep.subr.mxu0 0.0
    %512 = vmatpush1.msra.mxu0 0.0
    %513 = vmatprep.subr.mxu0 0.0
    %514 = vmatpush1.msra.mxu0 0.0
    %515 = vmatprep.subr.mxu0 0.0
    %516 = vmatpush1.msra.mxu0 0.0
    %517 = vmatprep.subr.mxu0 0.0
    %518 = vmatpush1.msra.mxu0 0.0
    %519 = vmatprep.subr.mxu0 0.0
    %520 = vmatpush1.msra.mxu0 0.0
    %521 = vmatprep.subr.mxu0 0.0
    %522 = vmatpush1.msra.mxu0 0.0
    %523 = vmatprep.subr.mxu0 0.0
    %524 = vmatpush1.msra.mxu0 0.0
    %525 = vmatprep.subr.mxu0 0.0
    %526 = vmatpush1.msra.mxu0 0.0
    %527 = vmatprep.subr.mxu0 0.0
    %528 = vmatpush1.msra.mxu0 %v499
    %529 = vmatprep.subr.mxu0 0.0
    %530 = vmatpush1.msra.mxu0 %v498
    %531 = vmatprep.subr.mxu0 0.0
    %532 = vmatpush1.msra.mxu0 %v497
    %533 = vmatprep.subr.mxu0 0.0
    %534 = vmatpush1.msra.mxu0 %v496
    %535 = vmatprep.subr.mxu0 0.0
    %536 = vmatpush2.msra.mxu0 0.0
    %537 = vmatprep.subr.mxu0 0.0
    %538 = vmatpush2.msra.mxu0 0.0
    %539 = vmatprep.subr.mxu0 0.0
    %540 = vmatpush2.msra.mxu0 0.0
    %541 = vmatprep.subr.mxu0 0.0
    %542 = vmatpush2.msra.mxu0 0.0
    %543 = vmatprep.subr.mxu0 0.0
    %544 = vmatpush2.msra.mxu0 0.0
    %545 = vmatprep.subr.mxu0 0.0
    %546 = vmatpush2.msra.mxu0 0.0
    %547 = vmatprep.subr.mxu0 0.0
    %548 = vmatpush2.msra.mxu0 0.0
    %549 = vmatprep.subr.mxu0 0.0
    %550 = vmatpush2.msra.mxu0 0.0
    %551 = vmatprep.subr.mxu0 0.0
    %552 = vmatpush2.msra.mxu0 0.0
    %553 = vmatprep.subr.mxu0 0.0
    %554 = vmatpush2.msra.mxu0 0.0
    %555 = vmatprep.subr.mxu0 0.0
    %556 = vmatpush2.msra.mxu0 0.0
    %557 = vmatprep.subr.mxu0 0.0
    %558 = vmatpush2.msra.mxu0 0.0
    %559 = vmatprep.subr.mxu0 0.0
    %560 = vmatpush2.msra.mxu0 0.0
    %561 = vmatprep.subr.mxu0 0.0
    %562 = vmatpush2.msra.mxu0 0.0
    %563 = vmatprep.subr.mxu0 0.0
    %564 = vmatpush2.msra.mxu0 0.0
    %565 = vmatprep.subr.mxu0 0.0
    %566 = vmatpush2.msra.mxu0 0.0
    %567 = vmatprep.mubr.f32.mxu0 0.0
    %568 = vmatmul.mubr.f32.gmra.mxu0 %v501
    %v569 = vpop.f32.mrf.mxu0
    %v570 = vadd.f32 0.0, %v569
    %v571 = vpop.f32.mrf.mxu0
    %572 = vdwg.mxu0
    %v573 = vadd.f32 %v55, %v570
    %s574 = scalar_lea.vmem %s3, 8
    %v575 = vld [vmem:[%s574] sm:$0xff]
    %v577 = vsel %vm333, %v149, 0
    %v580 = vsel %vm333, %v238, 0
    %582 = vmatprep.subr.mxu0 0.0
    %583 = vmatpush1.xpose.msra.mxu0 0.0
    %584 = vmatprep.subr.mxu0 0.0
    %585 = vmatpush1.xpose.msra.mxu0 0.0
    %586 = vmatprep.subr.mxu0 0.0
    %587 = vmatpush1.xpose.msra.mxu0 0.0
    %588 = vmatprep.subr.mxu0 0.0
    %589 = vmatpush1.xpose.msra.mxu0 0.0
    %590 = vmatprep.subr.mxu0 0.0
    %591 = vmatpush1.xpose.msra.mxu0 0.0
    %592 = vmatprep.subr.mxu0 0.0
    %593 = vmatpush1.xpose.msra.mxu0 0.0
    %594 = vmatprep.subr.mxu0 0.0
    %595 = vmatpush1.xpose.msra.mxu0 0.0
    %596 = vmatprep.subr.mxu0 0.0
    %597 = vmatpush1.xpose.msra.mxu0 0.0
    %598 = vmatprep.subr.mxu0 0.0
    %599 = vmatpush1.xpose.msra.mxu0 0.0
    %600 = vmatprep.subr.mxu0 0.0
    %601 = vmatpush1.xpose.msra.mxu0 0.0
    %602 = vmatprep.subr.mxu0 0.0
    %603 = vmatpush1.xpose.msra.mxu0 0.0
    %604 = vmatprep.subr.mxu0 0.0
    %605 = vmatpush1.xpose.msra.mxu0 0.0
    %606 = vmatprep.subr.mxu0 0.0
    %607 = vmatpush1.xpose.msra.mxu0 0.0
    %608 = vmatprep.subr.mxu0 0.0
    %609 = vmatpush1.xpose.msra.mxu0 0.0
    %610 = vmatprep.subr.mxu0 0.0
    %611 = vmatpush1.xpose.msra.mxu0 0.0
    %612 = vmatprep.subr.mxu0 0.0
    %613 = vmatpush1.xpose.msra.mxu0 %v580
    %614 = vmatprep.subr.mxu0 0.0
    %615 = vmatpush2.xpose.msra.mxu0 0.0
    %616 = vmatprep.subr.mxu0 0.0
    %617 = vmatpush2.xpose.msra.mxu0 0.0
    %618 = vmatprep.subr.mxu0 0.0
    %619 = vmatpush2.xpose.msra.mxu0 0.0
    %620 = vmatprep.subr.mxu0 0.0
    %621 = vmatpush2.xpose.msra.mxu0 0.0
    %622 = vmatprep.subr.mxu0 0.0
    %623 = vmatpush2.xpose.msra.mxu0 0.0
    %624 = vmatprep.subr.mxu0 0.0
    %625 = vmatpush2.xpose.msra.mxu0 0.0
    %626 = vmatprep.subr.mxu0 0.0
    %627 = vmatpush2.xpose.msra.mxu0 0.0
    %628 = vmatprep.subr.mxu0 0.0
    %629 = vmatpush2.xpose.msra.mxu0 0.0
    %630 = vmatprep.subr.mxu0 0.0
    %631 = vmatpush2.xpose.msra.mxu0 0.0
    %632 = vmatprep.subr.mxu0 0.0
    %633 = vmatpush2.xpose.msra.mxu0 0.0
    %634 = vmatprep.subr.mxu0 0.0
    %635 = vmatpush2.xpose.msra.mxu0 0.0
    %636 = vmatprep.subr.mxu0 0.0
    %637 = vmatpush2.xpose.msra.mxu0 0.0
    %638 = vmatprep.subr.mxu0 0.0
    %639 = vmatpush2.xpose.msra.mxu0 0.0
    %640 = vmatprep.subr.mxu0 0.0
    %641 = vmatpush2.xpose.msra.mxu0 0.0
    %642 = vmatprep.subr.mxu0 0.0
    %643 = vmatpush2.xpose.msra.mxu0 0.0
    %644 = vmatprep.subr.mxu0 0.0
    %645 = vmatpush2.xpose.msra.mxu0 0.0
    %646 = vmatprep.mubr.f32.mxu0 0.0
    %647 = vmatmul.mubr.f32.gmra.mxu0 %v577
    %v648 = vpop.f32.mrf.mxu0
    %v649 = vadd.f32 %v575, %v648
    %v650 = vpop.f32.mrf.mxu0
    %651 = vdwg.mxu0
    %v652 = vsel %vm410, %v649, -inf
    %653 = vmax.xlane.f32.xlu0 %v652
    %v654 = vpop.xlane.xlu0 %653
    %v655 = vsub.f32 %v649, %v654
    %v656 = vmul.f32 %v655, 1.442695
    %v657 = vpow.pop %v656
    %v658 = vsel %vm410, %v657, 0.0
    %659 = vadd.xlane.f32.xlu0 %v658
    %v660 = vpop.xlane.xlu0 %659
    %v661 = vrcp.pop %v660
    %v662 = vmul.f32 %v657, %v661
    %s663 = scalar_lea.vmem [#allocation4], 8
    %664 = vst.msk [vmem:[%s663] sm:$0xff] %vm410, %v662
    %v666 = vsel %vm410, %v662, 0
    %668 = vmatprep.subr.mxu0 0.0
    %669 = vmatpush1.msra.mxu0 0.0
    %670 = vmatprep.subr.mxu0 0.0
    %671 = vmatpush1.msra.mxu0 0.0
    %672 = vmatprep.subr.mxu0 0.0
    %673 = vmatpush1.msra.mxu0 0.0
    %674 = vmatprep.subr.mxu0 0.0
    %675 = vmatpush1.msra.mxu0 0.0
    %676 = vmatprep.subr.mxu0 0.0
    %677 = vmatpush1.msra.mxu0 0.0
    %678 = vmatprep.subr.mxu0 0.0
    %679 = vmatpush1.msra.mxu0 0.0
    %680 = vmatprep.subr.mxu0 0.0
    %681 = vmatpush1.msra.mxu0 0.0
    %682 = vmatprep.subr.mxu0 0.0
    %683 = vmatpush1.msra.mxu0 0.0
    %684 = vmatprep.subr.mxu0 0.0
    %685 = vmatpush1.msra.mxu0 0.0
    %686 = vmatprep.subr.mxu0 0.0
    %687 = vmatpush1.msra.mxu0 0.0
    %688 = vmatprep.subr.mxu0 0.0
    %689 = vmatpush1.msra.mxu0 0.0
    %690 = vmatprep.subr.mxu0 0.0
    %691 = vmatpush1.msra.mxu0 0.0
    %692 = vmatprep.subr.mxu0 0.0
    %693 = vmatpush1.msra.mxu0 0.0
    %694 = vmatprep.subr.mxu0 0.0
    %695 = vmatpush1.msra.mxu0 0.0
    %696 = vmatprep.subr.mxu0 0.0
    %697 = vmatpush1.msra.mxu0 0.0
    %698 = vmatprep.subr.mxu0 0.0
    %699 = vmatpush1.msra.mxu0 %v329
    %700 = vmatprep.subr.mxu0 0.0
    %701 = vmatpush2.msra.mxu0 0.0
    %702 = vmatprep.subr.mxu0 0.0
    %703 = vmatpush2.msra.mxu0 0.0
    %704 = vmatprep.subr.mxu0 0.0
    %705 = vmatpush2.msra.mxu0 0.0
    %706 = vmatprep.subr.mxu0 0.0
    %707 = vmatpush2.msra.mxu0 0.0
    %708 = vmatprep.subr.mxu0 0.0
    %709 = vmatpush2.msra.mxu0 0.0
    %710 = vmatprep.subr.mxu0 0.0
    %711 = vmatpush2.msra.mxu0 0.0
    %712 = vmatprep.subr.mxu0 0.0
    %713 = vmatpush2.msra.mxu0 0.0
    %714 = vmatprep.subr.mxu0 0.0
    %715 = vmatpush2.msra.mxu0 0.0
    %716 = vmatprep.subr.mxu0 0.0
    %717 = vmatpush2.msra.mxu0 0.0
    %718 = vmatprep.subr.mxu0 0.0
    %719 = vmatpush2.msra.mxu0 0.0
    %720 = vmatprep.subr.mxu0 0.0
    %721 = vmatpush2.msra.mxu0 0.0
    %722 = vmatprep.subr.mxu0 0.0
    %723 = vmatpush2.msra.mxu0 0.0
    %724 = vmatprep.subr.mxu0 0.0
    %725 = vmatpush2.msra.mxu0 0.0
    %726 = vmatprep.subr.mxu0 0.0
    %727 = vmatpush2.msra.mxu0 0.0
    %728 = vmatprep.subr.mxu0 0.0
    %729 = vmatpush2.msra.mxu0 0.0
    %730 = vmatprep.subr.mxu0 0.0
    %731 = vmatpush2.msra.mxu0 0.0
    %732 = vmatprep.mubr.f32.mxu0 0.0
    %733 = vmatmul.mubr.f32.gmra.mxu0 %v666
    %v734 = vpop.f32.mrf.mxu0
    %v735 = vadd.f32 0.0, %v734
    %v736 = vpop.f32.mrf.mxu0
    %737 = vdwg.mxu0
    %v738 = vld [vmem:[%s7] sm:$0xff]
    %v739 = vld [vmem:[%s7 + $0x8] sm:$0xff]
    %v740 = vld [vmem:[%s7 + $0x10] sm:$0xff]
    %v741 = vld [vmem:[%s7 + $0x18] sm:$0xff]
    %v743 = vsel %vm333, %v735, 0
    %745 = vmatprep.subr.mxu0 0.0
    %746 = vmatpush1.msra.mxu0 0.0
    %747 = vmatprep.subr.mxu0 0.0
    %748 = vmatpush1.msra.mxu0 0.0
    %749 = vmatprep.subr.mxu0 0.0
    %750 = vmatpush1.msra.mxu0 0.0
    %751 = vmatprep.subr.mxu0 0.0
    %752 = vmatpush1.msra.mxu0 0.0
    %753 = vmatprep.subr.mxu0 0.0
    %754 = vmatpush1.msra.mxu0 0.0
    %755 = vmatprep.subr.mxu0 0.0
    %756 = vmatpush1.msra.mxu0 0.0
    %757 = vmatprep.subr.mxu0 0.0
    %758 = vmatpush1.msra.mxu0 0.0
    %759 = vmatprep.subr.mxu0 0.0
    %760 = vmatpush1.msra.mxu0 0.0
    %761 = vmatprep.subr.mxu0 0.0
    %762 = vmatpush1.msra.mxu0 0.0
    %763 = vmatprep.subr.mxu0 0.0
    %764 = vmatpush1.msra.mxu0 0.0
    %765 = vmatprep.subr.mxu0 0.0
    %766 = vmatpush1.msra.mxu0 0.0
    %767 = vmatprep.subr.mxu0 0.0
    %768 = vmatpush1.msra.mxu0 0.0
    %769 = vmatprep.subr.mxu0 0.0
    %770 = vmatpush1.msra.mxu0 %v741
    %771 = vmatprep.subr.mxu0 0.0
    %772 = vmatpush1.msra.mxu0 %v740
    %773 = vmatprep.subr.mxu0 0.0
    %774 = vmatpush1.msra.mxu0 %v739
    %775 = vmatprep.subr.mxu0 0.0
    %776 = vmatpush1.msra.mxu0 %v738
    %777 = vmatprep.subr.mxu0 0.0
    %778 = vmatpush2.msra.mxu0 0.0
    %779 = vmatprep.subr.mxu0 0.0
    %780 = vmatpush2.msra.mxu0 0.0
    %781 = vmatprep.subr.mxu0 0.0
    %782 = vmatpush2.msra.mxu0 0.0
    %783 = vmatprep.subr.mxu0 0.0
    %784 = vmatpush2.msra.mxu0 0.0
    %785 = vmatprep.subr.mxu0 0.0
    %786 = vmatpush2.msra.mxu0 0.0
    %787 = vmatprep.subr.mxu0 0.0
    %788 = vmatpush2.msra.mxu0 0.0
    %789 = vmatprep.subr.mxu0 0.0
    %790 = vmatpush2.msra.mxu0 0.0
    %791 = vmatprep.subr.mxu0 0.0
    %792 = vmatpush2.msra.mxu0 0.0
    %793 = vmatprep.subr.mxu0 0.0
    %794 = vmatpush2.msra.mxu0 0.0
    %795 = vmatprep.subr.mxu0 0.0
    %796 = vmatpush2.msra.mxu0 0.0
    %797 = vmatprep.subr.mxu0 0.0
    %798 = vmatpush2.msra.mxu0 0.0
    %799 = vmatprep.subr.mxu0 0.0
    %800 = vmatpush2.msra.mxu0 0.0
    %801 = vmatprep.subr.mxu0 0.0
    %802 = vmatpush2.msra.mxu0 0.0
    %803 = vmatprep.subr.mxu0 0.0
    %804 = vmatpush2.msra.mxu0 0.0
    %805 = vmatprep.subr.mxu0 0.0
    %806 = vmatpush2.msra.mxu0 0.0
    %807 = vmatprep.subr.mxu0 0.0
    %808 = vmatpush2.msra.mxu0 0.0
    %809 = vmatprep.mubr.f32.mxu0 0.0
    %810 = vmatmul.mubr.f32.gmra.mxu0 %v743
    %v811 = vpop.f32.mrf.mxu0
    %v812 = vadd.f32 0.0, %v811
    %v813 = vpop.f32.mrf.mxu0
    %814 = vdwg.mxu0
    %v815 = vadd.f32 %v56, %v812
    %s816 = scalar_lea.vmem %s4, 128
    %v817 = vld [vmem:[%s816] sm:$0xff]
    %v818 = vld [vmem:[%s816 + $0x8] sm:$0xff]
    %v819 = vld [vmem:[%s816 + $0x10] sm:$0xff]
    %v820 = vld [vmem:[%s816 + $0x18] sm:$0xff]
    %v821 = vld [vmem:[%s816 + $0x20] sm:$0xff]
    %v822 = vld [vmem:[%s816 + $0x28] sm:$0xff]
    %v823 = vld [vmem:[%s816 + $0x30] sm:$0xff]
    %v824 = vld [vmem:[%s816 + $0x38] sm:$0xff]
    %v825 = vld [vmem:[%s816 + $0x40] sm:$0xff]
    %v826 = vld [vmem:[%s816 + $0x48] sm:$0xff]
    %v827 = vld [vmem:[%s816 + $0x50] sm:$0xff]
    %v828 = vld [vmem:[%s816 + $0x58] sm:$0xff]
    %v829 = vld [vmem:[%s816 + $0x60] sm:$0xff]
    %v830 = vld [vmem:[%s816 + $0x68] sm:$0xff]
    %v831 = vld [vmem:[%s816 + $0x70] sm:$0xff]
    %v832 = vld [vmem:[%s816 + $0x78] sm:$0xff]
    %833 = vmatprep.subr.mxu0 0.0
    %834 = vmatpush1.msra.mxu0 %v832
    %835 = vmatprep.subr.mxu0 0.0
    %836 = vmatpush1.msra.mxu0 %v831
    %837 = vmatprep.subr.mxu0 0.0
    %838 = vmatpush1.msra.mxu0 %v830
    %839 = vmatprep.subr.mxu0 0.0
    %840 = vmatpush1.msra.mxu0 %v829
    %841 = vmatprep.subr.mxu0 0.0
    %842 = vmatpush1.msra.mxu0 %v828
    %843 = vmatprep.subr.mxu0 0.0
    %844 = vmatpush1.msra.mxu0 %v827
    %845 = vmatprep.subr.mxu0 0.0
    %846 = vmatpush1.msra.mxu0 %v826
    %847 = vmatprep.subr.mxu0 0.0
    %848 = vmatpush1.msra.mxu0 %v825
    %849 = vmatprep.subr.mxu0 0.0
    %850 = vmatpush1.msra.mxu0 %v824
    %851 = vmatprep.subr.mxu0 0.0
    %852 = vmatpush1.msra.mxu0 %v823
    %853 = vmatprep.subr.mxu0 0.0
    %854 = vmatpush1.msra.mxu0 %v822
    %855 = vmatprep.subr.mxu0 0.0
    %856 = vmatpush1.msra.mxu0 %v821
    %857 = vmatprep.subr.mxu0 0.0
    %858 = vmatpush1.msra.mxu0 %v820
    %859 = vmatprep.subr.mxu0 0.0
    %860 = vmatpush1.msra.mxu0 %v819
    %861 = vmatprep.subr.mxu0 0.0
    %862 = vmatpush1.msra.mxu0 %v818
    %863 = vmatprep.subr.mxu0 0.0
    %864 = vmatpush1.msra.mxu0 %v817
    %865 = vmatprep.subr.mxu0 0.0
    %866 = vmatpush2.msra.mxu0 0.0
    %867 = vmatprep.subr.mxu0 0.0
    %868 = vmatpush2.msra.mxu0 0.0
    %869 = vmatprep.subr.mxu0 0.0
    %870 = vmatpush2.msra.mxu0 0.0
    %871 = vmatprep.subr.mxu0 0.0
    %872 = vmatpush2.msra.mxu0 0.0
    %873 = vmatprep.subr.mxu0 0.0
    %874 = vmatpush2.msra.mxu0 0.0
    %875 = vmatprep.subr.mxu0 0.0
    %876 = vmatpush2.msra.mxu0 0.0
    %877 = vmatprep.subr.mxu0 0.0
    %878 = vmatpush2.msra.mxu0 0.0
    %879 = vmatprep.subr.mxu0 0.0
    %880 = vmatpush2.msra.mxu0 0.0
    %881 = vmatprep.subr.mxu0 0.0
    %882 = vmatpush2.msra.mxu0 0.0
    %883 = vmatprep.subr.mxu0 0.0
    %884 = vmatpush2.msra.mxu0 0.0
    %885 = vmatprep.subr.mxu0 0.0
    %886 = vmatpush2.msra.mxu0 0.0
    %887 = vmatprep.subr.mxu0 0.0
    %888 = vmatpush2.msra.mxu0 0.0
    %889 = vmatprep.subr.mxu0 0.0
    %890 = vmatpush2.msra.mxu0 0.0
    %891 = vmatprep.subr.mxu0 0.0
    %892 = vmatpush2.msra.mxu0 0.0
    %893 = vmatprep.subr.mxu0 0.0
    %894 = vmatpush2.msra.mxu0 0.0
    %895 = vmatprep.subr.mxu0 0.0
    %896 = vmatpush2.msra.mxu0 0.0
    %897 = vmatprep.mubr.f32.mxu0 0.0
    %898 = vmatmul.mubr.f32.gmra.mxu0 %v42
    %v899 = vpop.f32.mrf.mxu0
    %v900 = vadd.f32 0.0, %v899
    %v901 = vpop.f32.mrf.mxu0
    %902 = vmatprep.mubr.f32.mxu0 0.0
    %903 = vmatmul.mubr.f32.gmra.mxu0 %v43
    %v904 = vpop.f32.mrf.mxu0
    %v905 = vadd.f32 0.0, %v904
    %v906 = vpop.f32.mrf.mxu0
    %907 = vdwg.mxu0
    %v908 = vmul.f32 %v900, 0.17677669
    %v909 = vmul.f32 %v905, 0.17677669
    %s910 = scalar_lea.vmem %s5, 128
    %v911 = vld [vmem:[%s910] sm:$0xff]
    %v912 = vld [vmem:[%s910 + $0x8] sm:$0xff]
    %v913 = vld [vmem:[%s910 + $0x10] sm:$0xff]
    %v914 = vld [vmem:[%s910 + $0x18] sm:$0xff]
    %v915 = vld [vmem:[%s910 + $0x20] sm:$0xff]
    %v916 = vld [vmem:[%s910 + $0x28] sm:$0xff]
    %v917 = vld [vmem:[%s910 + $0x30] sm:$0xff]
    %v918 = vld [vmem:[%s910 + $0x38] sm:$0xff]
    %v919 = vld [vmem:[%s910 + $0x40] sm:$0xff]
    %v920 = vld [vmem:[%s910 + $0x48] sm:$0xff]
    %v921 = vld [vmem:[%s910 + $0x50] sm:$0xff]
    %v922 = vld [vmem:[%s910 + $0x58] sm:$0xff]
    %v923 = vld [vmem:[%s910 + $0x60] sm:$0xff]
    %v924 = vld [vmem:[%s910 + $0x68] sm:$0xff]
    %v925 = vld [vmem:[%s910 + $0x70] sm:$0xff]
    %v926 = vld [vmem:[%s910 + $0x78] sm:$0xff]
    %927 = vmatprep.subr.mxu0 0.0
    %928 = vmatpush1.msra.mxu0 %v926
    %929 = vmatprep.subr.mxu0 0.0
    %930 = vmatpush1.msra.mxu0 %v925
    %931 = vmatprep.subr.mxu0 0.0
    %932 = vmatpush1.msra.mxu0 %v924
    %933 = vmatprep.subr.mxu0 0.0
    %934 = vmatpush1.msra.mxu0 %v923
    %935 = vmatprep.subr.mxu0 0.0
    %936 = vmatpush1.msra.mxu0 %v922
    %937 = vmatprep.subr.mxu0 0.0
    %938 = vmatpush1.msra.mxu0 %v921
    %939 = vmatprep.subr.mxu0 0.0
    %940 = vmatpush1.msra.mxu0 %v920
    %941 = vmatprep.subr.mxu0 0.0
    %942 = vmatpush1.msra.mxu0 %v919
    %943 = vmatprep.subr.mxu0 0.0
    %944 = vmatpush1.msra.mxu0 %v918
    %945 = vmatprep.subr.mxu0 0.0
    %946 = vmatpush1.msra.mxu0 %v917
    %947 = vmatprep.subr.mxu0 0.0
    %948 = vmatpush1.msra.mxu0 %v916
    %949 = vmatprep.subr.mxu0 0.0
    %950 = vmatpush1.msra.mxu0 %v915
    %951 = vmatprep.subr.mxu0 0.0
    %952 = vmatpush1.msra.mxu0 %v914
    %953 = vmatprep.subr.mxu0 0.0
    %954 = vmatpush1.msra.mxu0 %v913
    %955 = vmatprep.subr.mxu0 0.0
    %956 = vmatpush1.msra.mxu0 %v912
    %957 = vmatprep.subr.mxu0 0.0
    %958 = vmatpush1.msra.mxu0 %v911
    %959 = vmatprep.subr.mxu0 0.0
    %960 = vmatpush2.msra.mxu0 0.0
    %961 = vmatprep.subr.mxu0 0.0
    %962 = vmatpush2.msra.mxu0 0.0
    %963 = vmatprep.subr.mxu0 0.0
    %964 = vmatpush2.msra.mxu0 0.0
    %965 = vmatprep.subr.mxu0 0.0
    %966 = vmatpush2.msra.mxu0 0.0
    %967 = vmatprep.subr.mxu0 0.0
    %968 = vmatpush2.msra.mxu0 0.0
    %969 = vmatprep.subr.mxu0 0.0
    %970 = vmatpush2.msra.mxu0 0.0
    %971 = vmatprep.subr.mxu0 0.0
    %972 = vmatpush2.msra.mxu0 0.0
    %973 = vmatprep.subr.mxu0 0.0
    %974 = vmatpush2.msra.mxu0 0.0
    %975 = vmatprep.subr.mxu0 0.0
    %976 = vmatpush2.msra.mxu0 0.0
    %977 = vmatprep.subr.mxu0 0.0
    %978 = vmatpush2.msra.mxu0 0.0
    %979 = vmatprep.subr.mxu0 0.0
    %980 = vmatpush2.msra.mxu0 0.0
    %981 = vmatprep.subr.mxu0 0.0
    %982 = vmatpush2.msra.mxu0 0.0
    %983 = vmatprep.subr.mxu0 0.0
    %984 = vmatpush2.msra.mxu0 0.0
    %985 = vmatprep.subr.mxu0 0.0
    %986 = vmatpush2.msra.mxu0 0.0
    %987 = vmatprep.subr.mxu0 0.0
    %988 = vmatpush2.msra.mxu0 0.0
    %989 = vmatprep.subr.mxu0 0.0
    %990 = vmatpush2.msra.mxu0 0.0
    %991 = vmatprep.mubr.f32.mxu0 0.0
    %992 = vmatmul.mubr.f32.gmra.mxu0 %v44
    %v993 = vpop.f32.mrf.mxu0
    %v994 = vadd.f32 0.0, %v993
    %v995 = vpop.f32.mrf.mxu0
    %996 = vmatprep.mubr.f32.mxu0 0.0
    %997 = vmatmul.mubr.f32.gmra.mxu0 %v45
    %v998 = vpop.f32.mrf.mxu0
    %v999 = vadd.f32 0.0, %v998
    %v1000 = vpop.f32.mrf.mxu0
    %1001 = vdwg.mxu0
    %s1002 = scalar_lea.vmem %s6, 128
    %v1003 = vld [vmem:[%s1002] sm:$0xff]
    %v1004 = vld [vmem:[%s1002 + $0x8] sm:$0xff]
    %v1005 = vld [vmem:[%s1002 + $0x10] sm:$0xff]
    %v1006 = vld [vmem:[%s1002 + $0x18] sm:$0xff]
    %v1007 = vld [vmem:[%s1002 + $0x20] sm:$0xff]
    %v1008 = vld [vmem:[%s1002 + $0x28] sm:$0xff]
    %v1009 = vld [vmem:[%s1002 + $0x30] sm:$0xff]
    %v1010 = vld [vmem:[%s1002 + $0x38] sm:$0xff]
    %v1011 = vld [vmem:[%s1002 + $0x40] sm:$0xff]
    %v1012 = vld [vmem:[%s1002 + $0x48] sm:$0xff]
    %v1013 = vld [vmem:[%s1002 + $0x50] sm:$0xff]
    %v1014 = vld [vmem:[%s1002 + $0x58] sm:$0xff]
    %v1015 = vld [vmem:[%s1002 + $0x60] sm:$0xff]
    %v1016 = vld [vmem:[%s1002 + $0x68] sm:$0xff]
    %v1017 = vld [vmem:[%s1002 + $0x70] sm:$0xff]
    %v1018 = vld [vmem:[%s1002 + $0x78] sm:$0xff]
    %1019 = vmatprep.subr.mxu0 0.0
    %1020 = vmatpush1.msra.mxu0 %v1018
    %1021 = vmatprep.subr.mxu0 0.0
    %1022 = vmatpush1.msra.mxu0 %v1017
    %1023 = vmatprep.subr.mxu0 0.0
    %1024 = vmatpush1.msra.mxu0 %v1016
    %1025 = vmatprep.subr.mxu0 0.0
    %1026 = vmatpush1.msra.mxu0 %v1015
    %1027 = vmatprep.subr.mxu0 0.0
    %1028 = vmatpush1.msra.mxu0 %v1014
    %1029 = vmatprep.subr.mxu0 0.0
    %1030 = vmatpush1.msra.mxu0 %v1013
    %1031 = vmatprep.subr.mxu0 0.0
    %1032 = vmatpush1.msra.mxu0 %v1012
    %1033 = vmatprep.subr.mxu0 0.0
    %1034 = vmatpush1.msra.mxu0 %v1011
    %1035 = vmatprep.subr.mxu0 0.0
    %1036 = vmatpush1.msra.mxu0 %v1010
    %1037 = vmatprep.subr.mxu0 0.0
    %1038 = vmatpush1.msra.mxu0 %v1009
    %1039 = vmatprep.subr.mxu0 0.0
    %1040 = vmatpush1.msra.mxu0 %v1008
    %1041 = vmatprep.subr.mxu0 0.0
    %1042 = vmatpush1.msra.mxu0 %v1007
    %1043 = vmatprep.subr.mxu0 0.0
    %1044 = vmatpush1.msra.mxu0 %v1006
    %1045 = vmatprep.subr.mxu0 0.0
    %1046 = vmatpush1.msra.mxu0 %v1005
    %1047 = vmatprep.subr.mxu0 0.0
    %1048 = vmatpush1.msra.mxu0 %v1004
    %1049 = vmatprep.subr.mxu0 0.0
    %1050 = vmatpush1.msra.mxu0 %v1003
    %1051 = vmatprep.subr.mxu0 0.0
    %1052 = vmatpush2.msra.mxu0 0.0
    %1053 = vmatprep.subr.mxu0 0.0
    %1054 = vmatpush2.msra.mxu0 0.0
    %1055 = vmatprep.subr.mxu0 0.0
    %1056 = vmatpush2.msra.mxu0 0.0
    %1057 = vmatprep.subr.mxu0 0.0
    %1058 = vmatpush2.msra.mxu0 0.0
    %1059 = vmatprep.subr.mxu0 0.0
    %1060 = vmatpush2.msra.mxu0 0.0
    %1061 = vmatprep.subr.mxu0 0.0
    %1062 = vmatpush2.msra.mxu0 0.0
    %1063 = vmatprep.subr.mxu0 0.0
    %1064 = vmatpush2.msra.mxu0 0.0
    %1065 = vmatprep.subr.mxu0 0.0
    %1066 = vmatpush2.msra.mxu0 0.0
    %1067 = vmatprep.subr.mxu0 0.0
    %1068 = vmatpush2.msra.mxu0 0.0
    %1069 = vmatprep.subr.mxu0 0.0
    %1070 = vmatpush2.msra.mxu0 0.0
    %1071 = vmatprep.subr.mxu0 0.0
    %1072 = vmatpush2.msra.mxu0 0.0
    %1073 = vmatprep.subr.mxu0 0.0
    %1074 = vmatpush2.msra.mxu0 0.0
    %1075 = vmatprep.subr.mxu0 0.0
    %1076 = vmatpush2.msra.mxu0 0.0
    %1077 = vmatprep.subr.mxu0 0.0
    %1078 = vmatpush2.msra.mxu0 0.0
    %1079 = vmatprep.subr.mxu0 0.0
    %1080 = vmatpush2.msra.mxu0 0.0
    %1081 = vmatprep.subr.mxu0 0.0
    %1082 = vmatpush2.msra.mxu0 0.0
    %1083 = vmatprep.mubr.f32.mxu0 0.0
    %1084 = vmatmul.mubr.f32.gmra.mxu0 %v46
    %v1085 = vpop.f32.mrf.mxu0
    %v1086 = vadd.f32 0.0, %v1085
    %v1087 = vpop.f32.mrf.mxu0
    %1088 = vmatprep.mubr.f32.mxu0 0.0
    %1089 = vmatmul.mubr.f32.gmra.mxu0 %v47
    %v1090 = vpop.f32.mrf.mxu0
    %v1091 = vadd.f32 0.0, %v1090
    %v1092 = vpop.f32.mrf.mxu0
    %1093 = vdwg.mxu0
    %v1094 = vld [vmem:[%s3] sm:$0xff]
    %v1096 = vsel %vm333, %v908, 0
    %v1099 = vsel %vm333, %v994, 0
    %1101 = vmatprep.subr.mxu0 0.0
    %1102 = vmatpush1.xpose.msra.mxu0 0.0
    %1103 = vmatprep.subr.mxu0 0.0
    %1104 = vmatpush1.xpose.msra.mxu0 0.0
    %1105 = vmatprep.subr.mxu0 0.0
    %1106 = vmatpush1.xpose.msra.mxu0 0.0
    %1107 = vmatprep.subr.mxu0 0.0
    %1108 = vmatpush1.xpose.msra.mxu0 0.0
    %1109 = vmatprep.subr.mxu0 0.0
    %1110 = vmatpush1.xpose.msra.mxu0 0.0
    %1111 = vmatprep.subr.mxu0 0.0
    %1112 = vmatpush1.xpose.msra.mxu0 0.0
    %1113 = vmatprep.subr.mxu0 0.0
    %1114 = vmatpush1.xpose.msra.mxu0 0.0
    %1115 = vmatprep.subr.mxu0 0.0
    %1116 = vmatpush1.xpose.msra.mxu0 0.0
    %1117 = vmatprep.subr.mxu0 0.0
    %1118 = vmatpush1.xpose.msra.mxu0 0.0
    %1119 = vmatprep.subr.mxu0 0.0
    %1120 = vmatpush1.xpose.msra.mxu0 0.0
    %1121 = vmatprep.subr.mxu0 0.0
    %1122 = vmatpush1.xpose.msra.mxu0 0.0
    %1123 = vmatprep.subr.mxu0 0.0
    %1124 = vmatpush1.xpose.msra.mxu0 0.0
    %1125 = vmatprep.subr.mxu0 0.0
    %1126 = vmatpush1.xpose.msra.mxu0 0.0
    %1127 = vmatprep.subr.mxu0 0.0
    %1128 = vmatpush1.xpose.msra.mxu0 0.0
    %1129 = vmatprep.subr.mxu0 0.0
    %1130 = vmatpush1.xpose.msra.mxu0 0.0
    %1131 = vmatprep.subr.mxu0 0.0
    %1132 = vmatpush1.xpose.msra.mxu0 %v1099
    %1133 = vmatprep.subr.mxu0 0.0
    %1134 = vmatpush2.xpose.msra.mxu0 0.0
    %1135 = vmatprep.subr.mxu0 0.0
    %1136 = vmatpush2.xpose.msra.mxu0 0.0
    %1137 = vmatprep.subr.mxu0 0.0
    %1138 = vmatpush2.xpose.msra.mxu0 0.0
    %1139 = vmatprep.subr.mxu0 0.0
    %1140 = vmatpush2.xpose.msra.mxu0 0.0
    %1141 = vmatprep.subr.mxu0 0.0
    %1142 = vmatpush2.xpose.msra.mxu0 0.0
    %1143 = vmatprep.subr.mxu0 0.0
    %1144 = vmatpush2.xpose.msra.mxu0 0.0
    %1145 = vmatprep.subr.mxu0 0.0
    %1146 = vmatpush2.xpose.msra.mxu0 0.0
    %1147 = vmatprep.subr.mxu0 0.0
    %1148 = vmatpush2.xpose.msra.mxu0 0.0
    %1149 = vmatprep.subr.mxu0 0.0
    %1150 = vmatpush2.xpose.msra.mxu0 0.0
    %1151 = vmatprep.subr.mxu0 0.0
    %1152 = vmatpush2.xpose.msra.mxu0 0.0
    %1153 = vmatprep.subr.mxu0 0.0
    %1154 = vmatpush2.xpose.msra.mxu0 0.0
    %1155 = vmatprep.subr.mxu0 0.0
    %1156 = vmatpush2.xpose.msra.mxu0 0.0
    %1157 = vmatprep.subr.mxu0 0.0
    %1158 = vmatpush2.xpose.msra.mxu0 0.0
    %1159 = vmatprep.subr.mxu0 0.0
    %1160 = vmatpush2.xpose.msra.mxu0 0.0
    %1161 = vmatprep.subr.mxu0 0.0
    %1162 = vmatpush2.xpose.msra.mxu0 0.0
    %1163 = vmatprep.subr.mxu0 0.0
    %1164 = vmatpush2.xpose.msra.mxu0 0.0
    %1165 = vmatprep.mubr.f32.mxu0 0.0
    %1166 = vmatmul.mubr.f32.gmra.mxu0 %v1096
    %v1167 = vpop.f32.mrf.mxu0
    %v1168 = vadd.f32 %v1094, %v1167
    %v1169 = vpop.f32.mrf.mxu0
    %1170 = vdwg.mxu0
    %v1171 = vsel %vm410, %v1168, -inf
    %1172 = vmax.xlane.f32.xlu0 %v1171
    %v1173 = vpop.xlane.xlu0 %1172
    %v1174 = vsub.f32 %v1168, %v1173
    %v1175 = vmul.f32 %v1174, 1.442695
    %v1176 = vpow.pop %v1175
    %v1177 = vsel %vm410, %v1176, 0.0
    %1178 = vadd.xlane.f32.xlu0 %v1177
    %v1179 = vpop.xlane.xlu0 %1178
    %v1180 = vrcp.pop %v1179
    %v1181 = vmul.f32 %v1176, %v1180
    %s1182 = scalar_lea.vmem [#allocation4], 16
    %1183 = vst.msk [vmem:[%s1182] sm:$0xff] %vm410, %v1181
    %v1185 = vsel %vm410, %v1181, 0
    %1187 = vmatprep.subr.mxu0 0.0
    %1188 = vmatpush1.msra.mxu0 0.0
    %1189 = vmatprep.subr.mxu0 0.0
    %1190 = vmatpush1.msra.mxu0 0.0
    %1191 = vmatprep.subr.mxu0 0.0
    %1192 = vmatpush1.msra.mxu0 0.0
    %1193 = vmatprep.subr.mxu0 0.0
    %1194 = vmatpush1.msra.mxu0 0.0
    %1195 = vmatprep.subr.mxu0 0.0
    %1196 = vmatpush1.msra.mxu0 0.0
    %1197 = vmatprep.subr.mxu0 0.0
    %1198 = vmatpush1.msra.mxu0 0.0
    %1199 = vmatprep.subr.mxu0 0.0
    %1200 = vmatpush1.msra.mxu0 0.0
    %1201 = vmatprep.subr.mxu0 0.0
    %1202 = vmatpush1.msra.mxu0 0.0
    %1203 = vmatprep.subr.mxu0 0.0
    %1204 = vmatpush1.msra.mxu0 0.0
    %1205 = vmatprep.subr.mxu0 0.0
    %1206 = vmatpush1.msra.mxu0 0.0
    %1207 = vmatprep.subr.mxu0 0.0
    %1208 = vmatpush1.msra.mxu0 0.0
    %1209 = vmatprep.subr.mxu0 0.0
    %1210 = vmatpush1.msra.mxu0 0.0
    %1211 = vmatprep.subr.mxu0 0.0
    %1212 = vmatpush1.msra.mxu0 0.0
    %1213 = vmatprep.subr.mxu0 0.0
    %1214 = vmatpush1.msra.mxu0 0.0
    %1215 = vmatprep.subr.mxu0 0.0
    %1216 = vmatpush1.msra.mxu0 0.0
    %1217 = vmatprep.subr.mxu0 0.0
    %1218 = vmatpush1.msra.mxu0 %v1086
    %1219 = vmatprep.subr.mxu0 0.0
    %1220 = vmatpush2.msra.mxu0 0.0
    %1221 = vmatprep.subr.mxu0 0.0
    %1222 = vmatpush2.msra.mxu0 0.0
    %1223 = vmatprep.subr.mxu0 0.0
    %1224 = vmatpush2.msra.mxu0 0.0
    %1225 = vmatprep.subr.mxu0 0.0
    %1226 = vmatpush2.msra.mxu0 0.0
    %1227 = vmatprep.subr.mxu0 0.0
    %1228 = vmatpush2.msra.mxu0 0.0
    %1229 = vmatprep.subr.mxu0 0.0
    %1230 = vmatpush2.msra.mxu0 0.0
    %1231 = vmatprep.subr.mxu0 0.0
    %1232 = vmatpush2.msra.mxu0 0.0
    %1233 = vmatprep.subr.mxu0 0.0
    %1234 = vmatpush2.msra.mxu0 0.0
    %1235 = vmatprep.subr.mxu0 0.0
    %1236 = vmatpush2.msra.mxu0 0.0
    %1237 = vmatprep.subr.mxu0 0.0
    %1238 = vmatpush2.msra.mxu0 0.0
    %1239 = vmatprep.subr.mxu0 0.0
    %1240 = vmatpush2.msra.mxu0 0.0
    %1241 = vmatprep.subr.mxu0 0.0
    %1242 = vmatpush2.msra.mxu0 0.0
    %1243 = vmatprep.subr.mxu0 0.0
    %1244 = vmatpush2.msra.mxu0 0.0
    %1245 = vmatprep.subr.mxu0 0.0
    %1246 = vmatpush2.msra.mxu0 0.0
    %1247 = vmatprep.subr.mxu0 0.0
    %1248 = vmatpush2.msra.mxu0 0.0
    %1249 = vmatprep.subr.mxu0 0.0
    %1250 = vmatpush2.msra.mxu0 0.0
    %1251 = vmatprep.mubr.f32.mxu0 0.0
    %1252 = vmatmul.mubr.f32.gmra.mxu0 %v1185
    %v1253 = vpop.f32.mrf.mxu0
    %v1254 = vadd.f32 0.0, %v1253
    %v1255 = vpop.f32.mrf.mxu0
    %1256 = vdwg.mxu0
    %s1257 = scalar_lea.vmem %s7, 32
    %v1258 = vld [vmem:[%s1257] sm:$0xff]
    %v1259 = vld [vmem:[%s1257 + $0x8] sm:$0xff]
    %v1260 = vld [vmem:[%s1257 + $0x10] sm:$0xff]
    %v1261 = vld [vmem:[%s1257 + $0x18] sm:$0xff]
    %v1263 = vsel %vm333, %v1254, 0
    %1265 = vmatprep.subr.mxu0 0.0
    %1266 = vmatpush1.msra.mxu0 0.0
    %1267 = vmatprep.subr.mxu0 0.0
    %1268 = vmatpush1.msra.mxu0 0.0
    %1269 = vmatprep.subr.mxu0 0.0
    %1270 = vmatpush1.msra.mxu0 0.0
    %1271 = vmatprep.subr.mxu0 0.0
    %1272 = vmatpush1.msra.mxu0 0.0
    %1273 = vmatprep.subr.mxu0 0.0
    %1274 = vmatpush1.msra.mxu0 0.0
    %1275 = vmatprep.subr.mxu0 0.0
    %1276 = vmatpush1.msra.mxu0 0.0
    %1277 = vmatprep.subr.mxu0 0.0
    %1278 = vmatpush1.msra.mxu0 0.0
    %1279 = vmatprep.subr.mxu0 0.0
    %1280 = vmatpush1.msra.mxu0 0.0
    %1281 = vmatprep.subr.mxu0 0.0
    %1282 = vmatpush1.msra.mxu0 0.0
    %1283 = vmatprep.subr.mxu0 0.0
    %1284 = vmatpush1.msra.mxu0 0.0
    %1285 = vmatprep.subr.mxu0 0.0
    %1286 = vmatpush1.msra.mxu0 0.0
    %1287 = vmatprep.subr.mxu0 0.0
    %1288 = vmatpush1.msra.mxu0 0.0
    %1289 = vmatprep.subr.mxu0 0.0
    %1290 = vmatpush1.msra.mxu0 %v1261
    %1291 = vmatprep.subr.mxu0 0.0
    %1292 = vmatpush1.msra.mxu0 %v1260
    %1293 = vmatprep.subr.mxu0 0.0
    %1294 = vmatpush1.msra.mxu0 %v1259
    %1295 = vmatprep.subr.mxu0 0.0
    %1296 = vmatpush1.msra.mxu0 %v1258
    %1297 = vmatprep.subr.mxu0 0.0
    %1298 = vmatpush2.msra.mxu0 0.0
    %1299 = vmatprep.subr.mxu0 0.0
    %1300 = vmatpush2.msra.mxu0 0.0
    %1301 = vmatprep.subr.mxu0 0.0
    %1302 = vmatpush2.msra.mxu0 0.0
    %1303 = vmatprep.subr.mxu0 0.0
    %1304 = vmatpush2.msra.mxu0 0.0
    %1305 = vmatprep.subr.mxu0 0.0
    %1306 = vmatpush2.msra.mxu0 0.0
    %1307 = vmatprep.subr.mxu0 0.0
    %1308 = vmatpush2.msra.mxu0 0.0
    %1309 = vmatprep.subr.mxu0 0.0
    %1310 = vmatpush2.msra.mxu0 0.0
    %1311 = vmatprep.subr.mxu0 0.0
    %1312 = vmatpush2.msra.mxu0 0.0
    %1313 = vmatprep.subr.mxu0 0.0
    %1314 = vmatpush2.msra.mxu0 0.0
    %1315 = vmatprep.subr.mxu0 0.0
    %1316 = vmatpush2.msra.mxu0 0.0
    %1317 = vmatprep.subr.mxu0 0.0
    %1318 = vmatpush2.msra.mxu0 0.0
    %1319 = vmatprep.subr.mxu0 0.0
    %1320 = vmatpush2.msra.mxu0 0.0
    %1321 = vmatprep.subr.mxu0 0.0
    %1322 = vmatpush2.msra.mxu0 0.0
    %1323 = vmatprep.subr.mxu0 0.0
    %1324 = vmatpush2.msra.mxu0 0.0
    %1325 = vmatprep.subr.mxu0 0.0
    %1326 = vmatpush2.msra.mxu0 0.0
    %1327 = vmatprep.subr.mxu0 0.0
    %1328 = vmatpush2.msra.mxu0 0.0
    %1329 = vmatprep.mubr.f32.mxu0 0.0
    %1330 = vmatmul.mubr.f32.gmra.mxu0 %v1263
    %v1331 = vpop.f32.mrf.mxu0
    %v1332 = vadd.f32 0.0, %v1331
    %v1333 = vpop.f32.mrf.mxu0
    %1334 = vdwg.mxu0
    %v1335 = vadd.f32 %v573, %v1332
    %v1336 = vld [vmem:[%s574] sm:$0xff]
    %v1338 = vsel %vm333, %v909, 0
    %v1341 = vsel %vm333, %v999, 0
    %1343 = vmatprep.subr.mxu0 0.0
    %1344 = vmatpush1.xpose.msra.mxu0 0.0
    %1345 = vmatprep.subr.mxu0 0.0
    %1346 = vmatpush1.xpose.msra.mxu0 0.0
    %1347 = vmatprep.subr.mxu0 0.0
    %1348 = vmatpush1.xpose.msra.mxu0 0.0
    %1349 = vmatprep.subr.mxu0 0.0
    %1350 = vmatpush1.xpose.msra.mxu0 0.0
    %1351 = vmatprep.subr.mxu0 0.0
    %1352 = vmatpush1.xpose.msra.mxu0 0.0
    %1353 = vmatprep.subr.mxu0 0.0
    %1354 = vmatpush1.xpose.msra.mxu0 0.0
    %1355 = vmatprep.subr.mxu0 0.0
    %1356 = vmatpush1.xpose.msra.mxu0 0.0
    %1357 = vmatprep.subr.mxu0 0.0
    %1358 = vmatpush1.xpose.msra.mxu0 0.0
    %1359 = vmatprep.subr.mxu0 0.0
    %1360 = vmatpush1.xpose.msra.mxu0 0.0
    %1361 = vmatprep.subr.mxu0 0.0
    %1362 = vmatpush1.xpose.msra.mxu0 0.0
    %1363 = vmatprep.subr.mxu0 0.0
    %1364 = vmatpush1.xpose.msra.mxu0 0.0
    %1365 = vmatprep.subr.mxu0 0.0
    %1366 = vmatpush1.xpose.msra.mxu0 0.0
    %1367 = vmatprep.subr.mxu0 0.0
    %1368 = vmatpush1.xpose.msra.mxu0 0.0
    %1369 = vmatprep.subr.mxu0 0.0
    %1370 = vmatpush1.xpose.msra.mxu0 0.0
    %1371 = vmatprep.subr.mxu0 0.0
    %1372 = vmatpush1.xpose.msra.mxu0 0.0
    %1373 = vmatprep.subr.mxu0 0.0
    %1374 = vmatpush1.xpose.msra.mxu0 %v1341
    %1375 = vmatprep.subr.mxu0 0.0
    %1376 = vmatpush2.xpose.msra.mxu0 0.0
    %1377 = vmatprep.subr.mxu0 0.0
    %1378 = vmatpush2.xpose.msra.mxu0 0.0
    %1379 = vmatprep.subr.mxu0 0.0
    %1380 = vmatpush2.xpose.msra.mxu0 0.0
    %1381 = vmatprep.subr.mxu0 0.0
    %1382 = vmatpush2.xpose.msra.mxu0 0.0
    %1383 = vmatprep.subr.mxu0 0.0
    %1384 = vmatpush2.xpose.msra.mxu0 0.0
    %1385 = vmatprep.subr.mxu0 0.0
    %1386 = vmatpush2.xpose.msra.mxu0 0.0
    %1387 = vmatprep.subr.mxu0 0.0
    %1388 = vmatpush2.xpose.msra.mxu0 0.0
    %1389 = vmatprep.subr.mxu0 0.0
    %1390 = vmatpush2.xpose.msra.mxu0 0.0
    %1391 = vmatprep.subr.mxu0 0.0
    %1392 = vmatpush2.xpose.msra.mxu0 0.0
    %1393 = vmatprep.subr.mxu0 0.0
    %1394 = vmatpush2.xpose.msra.mxu0 0.0
    %1395 = vmatprep.subr.mxu0 0.0
    %1396 = vmatpush2.xpose.msra.mxu0 0.0
    %1397 = vmatprep.subr.mxu0 0.0
    %1398 = vmatpush2.xpose.msra.mxu0 0.0
    %1399 = vmatprep.subr.mxu0 0.0
    %1400 = vmatpush2.xpose.msra.mxu0 0.0
    %1401 = vmatprep.subr.mxu0 0.0
    %1402 = vmatpush2.xpose.msra.mxu0 0.0
    %1403 = vmatprep.subr.mxu0 0.0
    %1404 = vmatpush2.xpose.msra.mxu0 0.0
    %1405 = vmatprep.subr.mxu0 0.0
    %1406 = vmatpush2.xpose.msra.mxu0 0.0
    %1407 = vmatprep.mubr.f32.mxu0 0.0
    %1408 = vmatmul.mubr.f32.gmra.mxu0 %v1338
    %v1409 = vpop.f32.mrf.mxu0
    %v1410 = vadd.f32 %v1336, %v1409
    %v1411 = vpop.f32.mrf.mxu0
    %1412 = vdwg.mxu0
    %v1413 = vsel %vm410, %v1410, -inf
    %1414 = vmax.xlane.f32.xlu0 %v1413
    %v1415 = vpop.xlane.xlu0 %1414
    %v1416 = vsub.f32 %v1410, %v1415
    %v1417 = vmul.f32 %v1416, 1.442695
    %v1418 = vpow.pop %v1417
    %v1419 = vsel %vm410, %v1418, 0.0
    %1420 = vadd.xlane.f32.xlu0 %v1419
    %v1421 = vpop.xlane.xlu0 %1420
    %v1422 = vrcp.pop %v1421
    %v1423 = vmul.f32 %v1418, %v1422
    %s1424 = scalar_lea.vmem [#allocation4], 24
    %1425 = vst.msk [vmem:[%s1424] sm:$0xff] %vm410, %v1423
    %v1427 = vsel %vm410, %v1423, 0
    %1429 = vmatprep.subr.mxu0 0.0
    %1430 = vmatpush1.msra.mxu0 0.0
    %1431 = vmatprep.subr.mxu0 0.0
    %1432 = vmatpush1.msra.mxu0 0.0
    %1433 = vmatprep.subr.mxu0 0.0
    %1434 = vmatpush1.msra.mxu0 0.0
    %1435 = vmatprep.subr.mxu0 0.0
    %1436 = vmatpush1.msra.mxu0 0.0
    %1437 = vmatprep.subr.mxu0 0.0
    %1438 = vmatpush1.msra.mxu0 0.0
    %1439 = vmatprep.subr.mxu0 0.0
    %1440 = vmatpush1.msra.mxu0 0.0
    %1441 = vmatprep.subr.mxu0 0.0
    %1442 = vmatpush1.msra.mxu0 0.0
    %1443 = vmatprep.subr.mxu0 0.0
    %1444 = vmatpush1.msra.mxu0 0.0
    %1445 = vmatprep.subr.mxu0 0.0
    %1446 = vmatpush1.msra.mxu0 0.0
    %1447 = vmatprep.subr.mxu0 0.0
    %1448 = vmatpush1.msra.mxu0 0.0
    %1449 = vmatprep.subr.mxu0 0.0
    %1450 = vmatpush1.msra.mxu0 0.0
    %1451 = vmatprep.subr.mxu0 0.0
    %1452 = vmatpush1.msra.mxu0 0.0
    %1453 = vmatprep.subr.mxu0 0.0
    %1454 = vmatpush1.msra.mxu0 0.0
    %1455 = vmatprep.subr.mxu0 0.0
    %1456 = vmatpush1.msra.mxu0 0.0
    %1457 = vmatprep.subr.mxu0 0.0
    %1458 = vmatpush1.msra.mxu0 0.0
    %1459 = vmatprep.subr.mxu0 0.0
    %1460 = vmatpush1.msra.mxu0 %v1091
    %1461 = vmatprep.subr.mxu0 0.0
    %1462 = vmatpush2.msra.mxu0 0.0
    %1463 = vmatprep.subr.mxu0 0.0
    %1464 = vmatpush2.msra.mxu0 0.0
    %1465 = vmatprep.subr.mxu0 0.0
    %1466 = vmatpush2.msra.mxu0 0.0
    %1467 = vmatprep.subr.mxu0 0.0
    %1468 = vmatpush2.msra.mxu0 0.0
    %1469 = vmatprep.subr.mxu0 0.0
    %1470 = vmatpush2.msra.mxu0 0.0
    %1471 = vmatprep.subr.mxu0 0.0
    %1472 = vmatpush2.msra.mxu0 0.0
    %1473 = vmatprep.subr.mxu0 0.0
    %1474 = vmatpush2.msra.mxu0 0.0
    %1475 = vmatprep.subr.mxu0 0.0
    %1476 = vmatpush2.msra.mxu0 0.0
    %1477 = vmatprep.subr.mxu0 0.0
    %1478 = vmatpush2.msra.mxu0 0.0
    %1479 = vmatprep.subr.mxu0 0.0
    %1480 = vmatpush2.msra.mxu0 0.0
    %1481 = vmatprep.subr.mxu0 0.0
    %1482 = vmatpush2.msra.mxu0 0.0
    %1483 = vmatprep.subr.mxu0 0.0
    %1484 = vmatpush2.msra.mxu0 0.0
    %1485 = vmatprep.subr.mxu0 0.0
    %1486 = vmatpush2.msra.mxu0 0.0
    %1487 = vmatprep.subr.mxu0 0.0
    %1488 = vmatpush2.msra.mxu0 0.0
    %1489 = vmatprep.subr.mxu0 0.0
    %1490 = vmatpush2.msra.mxu0 0.0
    %1491 = vmatprep.subr.mxu0 0.0
    %1492 = vmatpush2.msra.mxu0 0.0
    %1493 = vmatprep.mubr.f32.mxu0 0.0
    %1494 = vmatmul.mubr.f32.gmra.mxu0 %v1427
    %v1495 = vpop.f32.mrf.mxu0
    %v1496 = vadd.f32 0.0, %v1495
    %v1497 = vpop.f32.mrf.mxu0
    %1498 = vdwg.mxu0
    %v1499 = vld [vmem:[%s1257] sm:$0xff]
    %v1500 = vld [vmem:[%s1257 + $0x8] sm:$0xff]
    %v1501 = vld [vmem:[%s1257 + $0x10] sm:$0xff]
    %v1502 = vld [vmem:[%s1257 + $0x18] sm:$0xff]
    %v1504 = vsel %vm333, %v1496, 0
    %1506 = vmatprep.subr.mxu0 0.0
    %1507 = vmatpush1.msra.mxu0 0.0
    %1508 = vmatprep.subr.mxu0 0.0
    %1509 = vmatpush1.msra.mxu0 0.0
    %1510 = vmatprep.subr.mxu0 0.0
    %1511 = vmatpush1.msra.mxu0 0.0
    %1512 = vmatprep.subr.mxu0 0.0
    %1513 = vmatpush1.msra.mxu0 0.0
    %1514 = vmatprep.subr.mxu0 0.0
    %1515 = vmatpush1.msra.mxu0 0.0
    %1516 = vmatprep.subr.mxu0 0.0
    %1517 = vmatpush1.msra.mxu0 0.0
    %1518 = vmatprep.subr.mxu0 0.0
    %1519 = vmatpush1.msra.mxu0 0.0
    %1520 = vmatprep.subr.mxu0 0.0
    %1521 = vmatpush1.msra.mxu0 0.0
    %1522 = vmatprep.subr.mxu0 0.0
    %1523 = vmatpush1.msra.mxu0 0.0
    %1524 = vmatprep.subr.mxu0 0.0
    %1525 = vmatpush1.msra.mxu0 0.0
    %1526 = vmatprep.subr.mxu0 0.0
    %1527 = vmatpush1.msra.mxu0 0.0
    %1528 = vmatprep.subr.mxu0 0.0
    %1529 = vmatpush1.msra.mxu0 0.0
    %1530 = vmatprep.subr.mxu0 0.0
    %1531 = vmatpush1.msra.mxu0 %v1502
    %1532 = vmatprep.subr.mxu0 0.0
    %1533 = vmatpush1.msra.mxu0 %v1501
    %1534 = vmatprep.subr.mxu0 0.0
    %1535 = vmatpush1.msra.mxu0 %v1500
    %1536 = vmatprep.subr.mxu0 0.0
    %1537 = vmatpush1.msra.mxu0 %v1499
    %1538 = vmatprep.subr.mxu0 0.0
    %1539 = vmatpush2.msra.mxu0 0.0
    %1540 = vmatprep.subr.mxu0 0.0
    %1541 = vmatpush2.msra.mxu0 0.0
    %1542 = vmatprep.subr.mxu0 0.0
    %1543 = vmatpush2.msra.mxu0 0.0
    %1544 = vmatprep.subr.mxu0 0.0
    %1545 = vmatpush2.msra.mxu0 0.0
    %1546 = vmatprep.subr.mxu0 0.0
    %1547 = vmatpush2.msra.mxu0 0.0
    %1548 = vmatprep.subr.mxu0 0.0
    %1549 = vmatpush2.msra.mxu0 0.0
    %1550 = vmatprep.subr.mxu0 0.0
    %1551 = vmatpush2.msra.mxu0 0.0
    %1552 = vmatprep.subr.mxu0 0.0
    %1553 = vmatpush2.msra.mxu0 0.0
    %1554 = vmatprep.subr.mxu0 0.0
    %1555 = vmatpush2.msra.mxu0 0.0
    %1556 = vmatprep.subr.mxu0 0.0
    %1557 = vmatpush2.msra.mxu0 0.0
    %1558 = vmatprep.subr.mxu0 0.0
    %1559 = vmatpush2.msra.mxu0 0.0
    %1560 = vmatprep.subr.mxu0 0.0
    %1561 = vmatpush2.msra.mxu0 0.0
    %1562 = vmatprep.subr.mxu0 0.0
    %1563 = vmatpush2.msra.mxu0 0.0
    %1564 = vmatprep.subr.mxu0 0.0
    %1565 = vmatpush2.msra.mxu0 0.0
    %1566 = vmatprep.subr.mxu0 0.0
    %1567 = vmatpush2.msra.mxu0 0.0
    %1568 = vmatprep.subr.mxu0 0.0
    %1569 = vmatpush2.msra.mxu0 0.0
    %1570 = vmatprep.mubr.f32.mxu0 0.0
    %1571 = vmatmul.mubr.f32.gmra.mxu0 %v1504
    %v1572 = vpop.f32.mrf.mxu0
    %v1573 = vadd.f32 0.0, %v1572
    %v1574 = vpop.f32.mrf.mxu0
    %1575 = vdwg.mxu0
    %v1576 = vadd.f32 %v815, %v1573
    %s1577 = scalar_lea.vmem %s4, 256
    %v1578 = vld [vmem:[%s1577] sm:$0xff]
    %v1579 = vld [vmem:[%s1577 + $0x8] sm:$0xff]
    %v1580 = vld [vmem:[%s1577 + $0x10] sm:$0xff]
    %v1581 = vld [vmem:[%s1577 + $0x18] sm:$0xff]
    %v1582 = vld [vmem:[%s1577 + $0x20] sm:$0xff]
    %v1583 = vld [vmem:[%s1577 + $0x28] sm:$0xff]
    %v1584 = vld [vmem:[%s1577 + $0x30] sm:$0xff]
    %v1585 = vld [vmem:[%s1577 + $0x38] sm:$0xff]
    %v1586 = vld [vmem:[%s1577 + $0x40] sm:$0xff]
    %v1587 = vld [vmem:[%s1577 + $0x48] sm:$0xff]
    %v1588 = vld [vmem:[%s1577 + $0x50] sm:$0xff]
    %v1589 = vld [vmem:[%s1577 + $0x58] sm:$0xff]
    %v1590 = vld [vmem:[%s1577 + $0x60] sm:$0xff]
    %v1591 = vld [vmem:[%s1577 + $0x68] sm:$0xff]
    %v1592 = vld [vmem:[%s1577 + $0x70] sm:$0xff]
    %v1593 = vld [vmem:[%s1577 + $0x78] sm:$0xff]
    %1594 = vmatprep.subr.mxu0 0.0
    %1595 = vmatpush1.msra.mxu0 %v1593
    %1596 = vmatprep.subr.mxu0 0.0
    %1597 = vmatpush1.msra.mxu0 %v1592
    %1598 = vmatprep.subr.mxu0 0.0
    %1599 = vmatpush1.msra.mxu0 %v1591
    %1600 = vmatprep.subr.mxu0 0.0
    %1601 = vmatpush1.msra.mxu0 %v1590
    %1602 = vmatprep.subr.mxu0 0.0
    %1603 = vmatpush1.msra.mxu0 %v1589
    %1604 = vmatprep.subr.mxu0 0.0
    %1605 = vmatpush1.msra.mxu0 %v1588
    %1606 = vmatprep.subr.mxu0 0.0
    %1607 = vmatpush1.msra.mxu0 %v1587
    %1608 = vmatprep.subr.mxu0 0.0
    %1609 = vmatpush1.msra.mxu0 %v1586
    %1610 = vmatprep.subr.mxu0 0.0
    %1611 = vmatpush1.msra.mxu0 %v1585
    %1612 = vmatprep.subr.mxu0 0.0
    %1613 = vmatpush1.msra.mxu0 %v1584
    %1614 = vmatprep.subr.mxu0 0.0
    %1615 = vmatpush1.msra.mxu0 %v1583
    %1616 = vmatprep.subr.mxu0 0.0
    %1617 = vmatpush1.msra.mxu0 %v1582
    %1618 = vmatprep.subr.mxu0 0.0
    %1619 = vmatpush1.msra.mxu0 %v1581
    %1620 = vmatprep.subr.mxu0 0.0
    %1621 = vmatpush1.msra.mxu0 %v1580
    %1622 = vmatprep.subr.mxu0 0.0
    %1623 = vmatpush1.msra.mxu0 %v1579
    %1624 = vmatprep.subr.mxu0 0.0
    %1625 = vmatpush1.msra.mxu0 %v1578
    %1626 = vmatprep.subr.mxu0 0.0
    %1627 = vmatpush2.msra.mxu0 0.0
    %1628 = vmatprep.subr.mxu0 0.0
    %1629 = vmatpush2.msra.mxu0 0.0
    %1630 = vmatprep.subr.mxu0 0.0
    %1631 = vmatpush2.msra.mxu0 0.0
    %1632 = vmatprep.subr.mxu0 0.0
    %1633 = vmatpush2.msra.mxu0 0.0
    %1634 = vmatprep.subr.mxu0 0.0
    %1635 = vmatpush2.msra.mxu0 0.0
    %1636 = vmatprep.subr.mxu0 0.0
    %1637 = vmatpush2.msra.mxu0 0.0
    %1638 = vmatprep.subr.mxu0 0.0
    %1639 = vmatpush2.msra.mxu0 0.0
    %1640 = vmatprep.subr.mxu0 0.0
    %1641 = vmatpush2.msra.mxu0 0.0
    %1642 = vmatprep.subr.mxu0 0.0
    %1643 = vmatpush2.msra.mxu0 0.0
    %1644 = vmatprep.subr.mxu0 0.0
    %1645 = vmatpush2.msra.mxu0 0.0
    %1646 = vmatprep.subr.mxu0 0.0
    %1647 = vmatpush2.msra.mxu0 0.0
    %1648 = vmatprep.subr.mxu0 0.0
    %1649 = vmatpush2.msra.mxu0 0.0
    %1650 = vmatprep.subr.mxu0 0.0
    %1651 = vmatpush2.msra.mxu0 0.0
    %1652 = vmatprep.subr.mxu0 0.0
    %1653 = vmatpush2.msra.mxu0 0.0
    %1654 = vmatprep.subr.mxu0 0.0
    %1655 = vmatpush2.msra.mxu0 0.0
    %1656 = vmatprep.subr.mxu0 0.0
    %1657 = vmatpush2.msra.mxu0 0.0
    %1658 = vmatprep.mubr.f32.mxu0 0.0
    %1659 = vmatmul.mubr.f32.gmra.mxu0 %v42
    %v1660 = vpop.f32.mrf.mxu0
    %v1661 = vadd.f32 0.0, %v1660
    %v1662 = vpop.f32.mrf.mxu0
    %1663 = vmatprep.mubr.f32.mxu0 0.0
    %1664 = vmatmul.mubr.f32.gmra.mxu0 %v43
    %v1665 = vpop.f32.mrf.mxu0
    %v1666 = vadd.f32 0.0, %v1665
    %v1667 = vpop.f32.mrf.mxu0
    %1668 = vdwg.mxu0
    %v1669 = vmul.f32 %v1661, 0.17677669
    %v1670 = vmul.f32 %v1666, 0.17677669
    %s1671 = scalar_lea.vmem %s5, 256
    %v1672 = vld [vmem:[%s1671] sm:$0xff]
    %v1673 = vld [vmem:[%s1671 + $0x8] sm:$0xff]
    %v1674 = vld [vmem:[%s1671 + $0x10] sm:$0xff]
    %v1675 = vld [vmem:[%s1671 + $0x18] sm:$0xff]
    %v1676 = vld [vmem:[%s1671 + $0x20] sm:$0xff]
    %v1677 = vld [vmem:[%s1671 + $0x28] sm:$0xff]
    %v1678 = vld [vmem:[%s1671 + $0x30] sm:$0xff]
    %v1679 = vld [vmem:[%s1671 + $0x38] sm:$0xff]
    %v1680 = vld [vmem:[%s1671 + $0x40] sm:$0xff]
    %v1681 = vld [vmem:[%s1671 + $0x48] sm:$0xff]
    %v1682 = vld [vmem:[%s1671 + $0x50] sm:$0xff]
    %v1683 = vld [vmem:[%s1671 + $0x58] sm:$0xff]
    %v1684 = vld [vmem:[%s1671 + $0x60] sm:$0xff]
    %v1685 = vld [vmem:[%s1671 + $0x68] sm:$0xff]
    %v1686 = vld [vmem:[%s1671 + $0x70] sm:$0xff]
    %v1687 = vld [vmem:[%s1671 + $0x78] sm:$0xff]
    %1688 = vmatprep.subr.mxu0 0.0
    %1689 = vmatpush1.msra.mxu0 %v1687
    %1690 = vmatprep.subr.mxu0 0.0
    %1691 = vmatpush1.msra.mxu0 %v1686
    %1692 = vmatprep.subr.mxu0 0.0
    %1693 = vmatpush1.msra.mxu0 %v1685
    %1694 = vmatprep.subr.mxu0 0.0
    %1695 = vmatpush1.msra.mxu0 %v1684
    %1696 = vmatprep.subr.mxu0 0.0
    %1697 = vmatpush1.msra.mxu0 %v1683
    %1698 = vmatprep.subr.mxu0 0.0
    %1699 = vmatpush1.msra.mxu0 %v1682
    %1700 = vmatprep.subr.mxu0 0.0
    %1701 = vmatpush1.msra.mxu0 %v1681
    %1702 = vmatprep.subr.mxu0 0.0
    %1703 = vmatpush1.msra.mxu0 %v1680
    %1704 = vmatprep.subr.mxu0 0.0
    %1705 = vmatpush1.msra.mxu0 %v1679
    %1706 = vmatprep.subr.mxu0 0.0
    %1707 = vmatpush1.msra.mxu0 %v1678
    %1708 = vmatprep.subr.mxu0 0.0
    %1709 = vmatpush1.msra.mxu0 %v1677
    %1710 = vmatprep.subr.mxu0 0.0
    %1711 = vmatpush1.msra.mxu0 %v1676
    %1712 = vmatprep.subr.mxu0 0.0
    %1713 = vmatpush1.msra.mxu0 %v1675
    %1714 = vmatprep.subr.mxu0 0.0
    %1715 = vmatpush1.msra.mxu0 %v1674
    %1716 = vmatprep.subr.mxu0 0.0
    %1717 = vmatpush1.msra.mxu0 %v1673
    %1718 = vmatprep.subr.mxu0 0.0
    %1719 = vmatpush1.msra.mxu0 %v1672
    %1720 = vmatprep.subr.mxu0 0.0
    %1721 = vmatpush2.msra.mxu0 0.0
    %1722 = vmatprep.subr.mxu0 0.0
    %1723 = vmatpush2.msra.mxu0 0.0
    %1724 = vmatprep.subr.mxu0 0.0
    %1725 = vmatpush2.msra.mxu0 0.0
    %1726 = vmatprep.subr.mxu0 0.0
    %1727 = vmatpush2.msra.mxu0 0.0
    %1728 = vmatprep.subr.mxu0 0.0
    %1729 = vmatpush2.msra.mxu0 0.0
    %1730 = vmatprep.subr.mxu0 0.0
    %1731 = vmatpush2.msra.mxu0 0.0
    %1732 = vmatprep.subr.mxu0 0.0
    %1733 = vmatpush2.msra.mxu0 0.0
    %1734 = vmatprep.subr.mxu0 0.0
    %1735 = vmatpush2.msra.mxu0 0.0
    %1736 = vmatprep.subr.mxu0 0.0
    %1737 = vmatpush2.msra.mxu0 0.0
    %1738 = vmatprep.subr.mxu0 0.0
    %1739 = vmatpush2.msra.mxu0 0.0
    %1740 = vmatprep.subr.mxu0 0.0
    %1741 = vmatpush2.msra.mxu0 0.0
    %1742 = vmatprep.subr.mxu0 0.0
    %1743 = vmatpush2.msra.mxu0 0.0
    %1744 = vmatprep.subr.mxu0 0.0
    %1745 = vmatpush2.msra.mxu0 0.0
    %1746 = vmatprep.subr.mxu0 0.0
    %1747 = vmatpush2.msra.mxu0 0.0
    %1748 = vmatprep.subr.mxu0 0.0
    %1749 = vmatpush2.msra.mxu0 0.0
    %1750 = vmatprep.subr.mxu0 0.0
    %1751 = vmatpush2.msra.mxu0 0.0
    %1752 = vmatprep.mubr.f32.mxu0 0.0
    %1753 = vmatmul.mubr.f32.gmra.mxu0 %v44
    %v1754 = vpop.f32.mrf.mxu0
    %v1755 = vadd.f32 0.0, %v1754
    %v1756 = vpop.f32.mrf.mxu0
    %1757 = vmatprep.mubr.f32.mxu0 0.0
    %1758 = vmatmul.mubr.f32.gmra.mxu0 %v45
    %v1759 = vpop.f32.mrf.mxu0
    %v1760 = vadd.f32 0.0, %v1759
    %v1761 = vpop.f32.mrf.mxu0
    %1762 = vdwg.mxu0
    %s1763 = scalar_lea.vmem %s6, 256
    %v1764 = vld [vmem:[%s1763] sm:$0xff]
    %v1765 = vld [vmem:[%s1763 + $0x8] sm:$0xff]
    %v1766 = vld [vmem:[%s1763 + $0x10] sm:$0xff]
    %v1767 = vld [vmem:[%s1763 + $0x18] sm:$0xff]
    %v1768 = vld [vmem:[%s1763 + $0x20] sm:$0xff]
    %v1769 = vld [vmem:[%s1763 + $0x28] sm:$0xff]
    %v1770 = vld [vmem:[%s1763 + $0x30] sm:$0xff]
    %v1771 = vld [vmem:[%s1763 + $0x38] sm:$0xff]
    %v1772 = vld [vmem:[%s1763 + $0x40] sm:$0xff]
    %v1773 = vld [vmem:[%s1763 + $0x48] sm:$0xff]
    %v1774 = vld [vmem:[%s1763 + $0x50] sm:$0xff]
    %v1775 = vld [vmem:[%s1763 + $0x58] sm:$0xff]
    %v1776 = vld [vmem:[%s1763 + $0x60] sm:$0xff]
    %v1777 = vld [vmem:[%s1763 + $0x68] sm:$0xff]
    %v1778 = vld [vmem:[%s1763 + $0x70] sm:$0xff]
    %v1779 = vld [vmem:[%s1763 + $0x78] sm:$0xff]
    %1780 = vmatprep.subr.mxu0 0.0
    %1781 = vmatpush1.msra.mxu0 %v1779
    %1782 = vmatprep.subr.mxu0 0.0
    %1783 = vmatpush1.msra.mxu0 %v1778
    %1784 = vmatprep.subr.mxu0 0.0
    %1785 = vmatpush1.msra.mxu0 %v1777
    %1786 = vmatprep.subr.mxu0 0.0
    %1787 = vmatpush1.msra.mxu0 %v1776
    %1788 = vmatprep.subr.mxu0 0.0
    %1789 = vmatpush1.msra.mxu0 %v1775
    %1790 = vmatprep.subr.mxu0 0.0
    %1791 = vmatpush1.msra.mxu0 %v1774
    %1792 = vmatprep.subr.mxu0 0.0
    %1793 = vmatpush1.msra.mxu0 %v1773
    %1794 = vmatprep.subr.mxu0 0.0
    %1795 = vmatpush1.msra.mxu0 %v1772
    %1796 = vmatprep.subr.mxu0 0.0
    %1797 = vmatpush1.msra.mxu0 %v1771
    %1798 = vmatprep.subr.mxu0 0.0
    %1799 = vmatpush1.msra.mxu0 %v1770
    %1800 = vmatprep.subr.mxu0 0.0
    %1801 = vmatpush1.msra.mxu0 %v1769
    %1802 = vmatprep.subr.mxu0 0.0
    %1803 = vmatpush1.msra.mxu0 %v1768
    %1804 = vmatprep.subr.mxu0 0.0
    %1805 = vmatpush1.msra.mxu0 %v1767
    %1806 = vmatprep.subr.mxu0 0.0
    %1807 = vmatpush1.msra.mxu0 %v1766
    %1808 = vmatprep.subr.mxu0 0.0
    %1809 = vmatpush1.msra.mxu0 %v1765
    %1810 = vmatprep.subr.mxu0 0.0
    %1811 = vmatpush1.msra.mxu0 %v1764
    %1812 = vmatprep.subr.mxu0 0.0
    %1813 = vmatpush2.msra.mxu0 0.0
    %1814 = vmatprep.subr.mxu0 0.0
    %1815 = vmatpush2.msra.mxu0 0.0
    %1816 = vmatprep.subr.mxu0 0.0
    %1817 = vmatpush2.msra.mxu0 0.0
    %1818 = vmatprep.subr.mxu0 0.0
    %1819 = vmatpush2.msra.mxu0 0.0
    %1820 = vmatprep.subr.mxu0 0.0
    %1821 = vmatpush2.msra.mxu0 0.0
    %1822 = vmatprep.subr.mxu0 0.0
    %1823 = vmatpush2.msra.mxu0 0.0
    %1824 = vmatprep.subr.mxu0 0.0
    %1825 = vmatpush2.msra.mxu0 0.0
    %1826 = vmatprep.subr.mxu0 0.0
    %1827 = vmatpush2.msra.mxu0 0.0
    %1828 = vmatprep.subr.mxu0 0.0
    %1829 = vmatpush2.msra.mxu0 0.0
    %1830 = vmatprep.subr.mxu0 0.0
    %1831 = vmatpush2.msra.mxu0 0.0
    %1832 = vmatprep.subr.mxu0 0.0
    %1833 = vmatpush2.msra.mxu0 0.0
    %1834 = vmatprep.subr.mxu0 0.0
    %1835 = vmatpush2.msra.mxu0 0.0
    %1836 = vmatprep.subr.mxu0 0.0
    %1837 = vmatpush2.msra.mxu0 0.0
    %1838 = vmatprep.subr.mxu0 0.0
    %1839 = vmatpush2.msra.mxu0 0.0
    %1840 = vmatprep.subr.mxu0 0.0
    %1841 = vmatpush2.msra.mxu0 0.0
    %1842 = vmatprep.subr.mxu0 0.0
    %1843 = vmatpush2.msra.mxu0 0.0
    %1844 = vmatprep.mubr.f32.mxu0 0.0
    %1845 = vmatmul.mubr.f32.gmra.mxu0 %v46
    %v1846 = vpop.f32.mrf.mxu0
    %v1847 = vadd.f32 0.0, %v1846
    %v1848 = vpop.f32.mrf.mxu0
    %1849 = vmatprep.mubr.f32.mxu0 0.0
    %1850 = vmatmul.mubr.f32.gmra.mxu0 %v47
    %v1851 = vpop.f32.mrf.mxu0
    %v1852 = vadd.f32 0.0, %v1851
    %v1853 = vpop.f32.mrf.mxu0
    %1854 = vdwg.mxu0
    %v1855 = vld [vmem:[%s3] sm:$0xff]
    %v1857 = vsel %vm333, %v1669, 0
    %v1860 = vsel %vm333, %v1755, 0
    %1862 = vmatprep.subr.mxu0 0.0
    %1863 = vmatpush1.xpose.msra.mxu0 0.0
    %1864 = vmatprep.subr.mxu0 0.0
    %1865 = vmatpush1.xpose.msra.mxu0 0.0
    %1866 = vmatprep.subr.mxu0 0.0
    %1867 = vmatpush1.xpose.msra.mxu0 0.0
    %1868 = vmatprep.subr.mxu0 0.0
    %1869 = vmatpush1.xpose.msra.mxu0 0.0
    %1870 = vmatprep.subr.mxu0 0.0
    %1871 = vmatpush1.xpose.msra.mxu0 0.0
    %1872 = vmatprep.subr.mxu0 0.0
    %1873 = vmatpush1.xpose.msra.mxu0 0.0
    %1874 = vmatprep.subr.mxu0 0.0
    %1875 = vmatpush1.xpose.msra.mxu0 0.0
    %1876 = vmatprep.subr.mxu0 0.0
    %1877 = vmatpush1.xpose.msra.mxu0 0.0
    %1878 = vmatprep.subr.mxu0 0.0
    %1879 = vmatpush1.xpose.msra.mxu0 0.0
    %1880 = vmatprep.subr.mxu0 0.0
    %1881 = vmatpush1.xpose.msra.mxu0 0.0
    %1882 = vmatprep.subr.mxu0 0.0
    %1883 = vmatpush1.xpose.msra.mxu0 0.0
    %1884 = vmatprep.subr.mxu0 0.0
    %1885 = vmatpush1.xpose.msra.mxu0 0.0
    %1886 = vmatprep.subr.mxu0 0.0
    %1887 = vmatpush1.xpose.msra.mxu0 0.0
    %1888 = vmatprep.subr.mxu0 0.0
    %1889 = vmatpush1.xpose.msra.mxu0 0.0
    %1890 = vmatprep.subr.mxu0 0.0
    %1891 = vmatpush1.xpose.msra.mxu0 0.0
    %1892 = vmatprep.subr.mxu0 0.0
    %1893 = vmatpush1.xpose.msra.mxu0 %v1860
    %1894 = vmatprep.subr.mxu0 0.0
    %1895 = vmatpush2.xpose.msra.mxu0 0.0
    %1896 = vmatprep.subr.mxu0 0.0
    %1897 = vmatpush2.xpose.msra.mxu0 0.0
    %1898 = vmatprep.subr.mxu0 0.0
    %1899 = vmatpush2.xpose.msra.mxu0 0.0
    %1900 = vmatprep.subr.mxu0 0.0
    %1901 = vmatpush2.xpose.msra.mxu0 0.0
    %1902 = vmatprep.subr.mxu0 0.0
    %1903 = vmatpush2.xpose.msra.mxu0 0.0
    %1904 = vmatprep.subr.mxu0 0.0
    %1905 = vmatpush2.xpose.msra.mxu0 0.0
    %1906 = vmatprep.subr.mxu0 0.0
    %1907 = vmatpush2.xpose.msra.mxu0 0.0
    %1908 = vmatprep.subr.mxu0 0.0
    %1909 = vmatpush2.xpose.msra.mxu0 0.0
    %1910 = vmatprep.subr.mxu0 0.0
    %1911 = vmatpush2.xpose.msra.mxu0 0.0
    %1912 = vmatprep.subr.mxu0 0.0
    %1913 = vmatpush2.xpose.msra.mxu0 0.0
    %1914 = vmatprep.subr.mxu0 0.0
    %1915 = vmatpush2.xpose.msra.mxu0 0.0
    %1916 = vmatprep.subr.mxu0 0.0
    %1917 = vmatpush2.xpose.msra.mxu0 0.0
    %1918 = vmatprep.subr.mxu0 0.0
    %1919 = vmatpush2.xpose.msra.mxu0 0.0
    %1920 = vmatprep.subr.mxu0 0.0
    %1921 = vmatpush2.xpose.msra.mxu0 0.0
    %1922 = vmatprep.subr.mxu0 0.0
    %1923 = vmatpush2.xpose.msra.mxu0 0.0
    %1924 = vmatprep.subr.mxu0 0.0
    %1925 = vmatpush2.xpose.msra.mxu0 0.0
    %1926 = vmatprep.mubr.f32.mxu0 0.0
    %1927 = vmatmul.mubr.f32.gmra.mxu0 %v1857
    %v1928 = vpop.f32.mrf.mxu0
    %v1929 = vadd.f32 %v1855, %v1928
    %v1930 = vpop.f32.mrf.mxu0
    %1931 = vdwg.mxu0
    %v1932 = vsel %vm410, %v1929, -inf
    %1933 = vmax.xlane.f32.xlu0 %v1932
    %v1934 = vpop.xlane.xlu0 %1933
    %v1935 = vsub.f32 %v1929, %v1934
    %v1936 = vmul.f32 %v1935, 1.442695
    %v1937 = vpow.pop %v1936
    %v1938 = vsel %vm410, %v1937, 0.0
    %1939 = vadd.xlane.f32.xlu0 %v1938
    %v1940 = vpop.xlane.xlu0 %1939
    %v1941 = vrcp.pop %v1940
    %v1942 = vmul.f32 %v1937, %v1941
    %s1943 = scalar_lea.vmem [#allocation4], 32
    %1944 = vst.msk [vmem:[%s1943] sm:$0xff] %vm410, %v1942
    %v1946 = vsel %vm410, %v1942, 0
    %1948 = vmatprep.subr.mxu0 0.0
    %1949 = vmatpush1.msra.mxu0 0.0
    %1950 = vmatprep.subr.mxu0 0.0
    %1951 = vmatpush1.msra.mxu0 0.0
    %1952 = vmatprep.subr.mxu0 0.0
    %1953 = vmatpush1.msra.mxu0 0.0
    %1954 = vmatprep.subr.mxu0 0.0
    %1955 = vmatpush1.msra.mxu0 0.0
    %1956 = vmatprep.subr.mxu0 0.0
    %1957 = vmatpush1.msra.mxu0 0.0
    %1958 = vmatprep.subr.mxu0 0.0
    %1959 = vmatpush1.msra.mxu0 0.0
    %1960 = vmatprep.subr.mxu0 0.0
    %1961 = vmatpush1.msra.mxu0 0.0
    %1962 = vmatprep.subr.mxu0 0.0
    %1963 = vmatpush1.msra.mxu0 0.0
    %1964 = vmatprep.subr.mxu0 0.0
    %1965 = vmatpush1.msra.mxu0 0.0
    %1966 = vmatprep.subr.mxu0 0.0
    %1967 = vmatpush1.msra.mxu0 0.0
    %1968 = vmatprep.subr.mxu0 0.0
    %1969 = vmatpush1.msra.mxu0 0.0
    %1970 = vmatprep.subr.mxu0 0.0
    %1971 = vmatpush1.msra.mxu0 0.0
    %1972 = vmatprep.subr.mxu0 0.0
    %1973 = vmatpush1.msra.mxu0 0.0
    %1974 = vmatprep.subr.mxu0 0.0
    %1975 = vmatpush1.msra.mxu0 0.0
    %1976 = vmatprep.subr.mxu0 0.0
    %1977 = vmatpush1.msra.mxu0 0.0
    %1978 = vmatprep.subr.mxu0 0.0
    %1979 = vmatpush1.msra.mxu0 %v1847
    %1980 = vmatprep.subr.mxu0 0.0
    %1981 = vmatpush2.msra.mxu0 0.0
    %1982 = vmatprep.subr.mxu0 0.0
    %1983 = vmatpush2.msra.mxu0 0.0
    %1984 = vmatprep.subr.mxu0 0.0
    %1985 = vmatpush2.msra.mxu0 0.0
    %1986 = vmatprep.subr.mxu0 0.0
    %1987 = vmatpush2.msra.mxu0 0.0
    %1988 = vmatprep.subr.mxu0 0.0
    %1989 = vmatpush2.msra.mxu0 0.0
    %1990 = vmatprep.subr.mxu0 0.0
    %1991 = vmatpush2.msra.mxu0 0.0
    %1992 = vmatprep.subr.mxu0 0.0
    %1993 = vmatpush2.msra.mxu0 0.0
    %1994 = vmatprep.subr.mxu0 0.0
    %1995 = vmatpush2.msra.mxu0 0.0
    %1996 = vmatprep.subr.mxu0 0.0
    %1997 = vmatpush2.msra.mxu0 0.0
    %1998 = vmatprep.subr.mxu0 0.0
    %1999 = vmatpush2.msra.mxu0 0.0
    %2000 = vmatprep.subr.mxu0 0.0
    %2001 = vmatpush2.msra.mxu0 0.0
    %2002 = vmatprep.subr.mxu0 0.0
    %2003 = vmatpush2.msra.mxu0 0.0
    %2004 = vmatprep.subr.mxu0 0.0
    %2005 = vmatpush2.msra.mxu0 0.0
    %2006 = vmatprep.subr.mxu0 0.0
    %2007 = vmatpush2.msra.mxu0 0.0
    %2008 = vmatprep.subr.mxu0 0.0
    %2009 = vmatpush2.msra.mxu0 0.0
    %2010 = vmatprep.subr.mxu0 0.0
    %2011 = vmatpush2.msra.mxu0 0.0
    %2012 = vmatprep.mubr.f32.mxu0 0.0
    %2013 = vmatmul.mubr.f32.gmra.mxu0 %v1946
    %v2014 = vpop.f32.mrf.mxu0
    %v2015 = vadd.f32 0.0, %v2014
    %v2016 = vpop.f32.mrf.mxu0
    %2017 = vdwg.mxu0
    %s2018 = scalar_lea.vmem %s7, 64
    %v2019 = vld [vmem:[%s2018] sm:$0xff]
    %v2020 = vld [vmem:[%s2018 + $0x8] sm:$0xff]
    %v2021 = vld [vmem:[%s2018 + $0x10] sm:$0xff]
    %v2022 = vld [vmem:[%s2018 + $0x18] sm:$0xff]
    %v2024 = vsel %vm333, %v2015, 0
    %2026 = vmatprep.subr.mxu0 0.0
    %2027 = vmatpush1.msra.mxu0 0.0
    %2028 = vmatprep.subr.mxu0 0.0
    %2029 = vmatpush1.msra.mxu0 0.0
    %2030 = vmatprep.subr.mxu0 0.0
    %2031 = vmatpush1.msra.mxu0 0.0
    %2032 = vmatprep.subr.mxu0 0.0
    %2033 = vmatpush1.msra.mxu0 0.0
    %2034 = vmatprep.subr.mxu0 0.0
    %2035 = vmatpush1.msra.mxu0 0.0
    %2036 = vmatprep.subr.mxu0 0.0
    %2037 = vmatpush1.msra.mxu0 0.0
    %2038 = vmatprep.subr.mxu0 0.0
    %2039 = vmatpush1.msra.mxu0 0.0
    %2040 = vmatprep.subr.mxu0 0.0
    %2041 = vmatpush1.msra.mxu0 0.0
    %2042 = vmatprep.subr.mxu0 0.0
    %2043 = vmatpush1.msra.mxu0 0.0
    %2044 = vmatprep.subr.mxu0 0.0
    %2045 = vmatpush1.msra.mxu0 0.0
    %2046 = vmatprep.subr.mxu0 0.0
    %2047 = vmatpush1.msra.mxu0 0.0
    %2048 = vmatprep.subr.mxu0 0.0
    %2049 = vmatpush1.msra.mxu0 0.0
    %2050 = vmatprep.subr.mxu0 0.0
    %2051 = vmatpush1.msra.mxu0 %v2022
    %2052 = vmatprep.subr.mxu0 0.0
    %2053 = vmatpush1.msra.mxu0 %v2021
    %2054 = vmatprep.subr.mxu0 0.0
    %2055 = vmatpush1.msra.mxu0 %v2020
    %2056 = vmatprep.subr.mxu0 0.0
    %2057 = vmatpush1.msra.mxu0 %v2019
    %2058 = vmatprep.subr.mxu0 0.0
    %2059 = vmatpush2.msra.mxu0 0.0
    %2060 = vmatprep.subr.mxu0 0.0
    %2061 = vmatpush2.msra.mxu0 0.0
    %2062 = vmatprep.subr.mxu0 0.0
    %2063 = vmatpush2.msra.mxu0 0.0
    %2064 = vmatprep.subr.mxu0 0.0
    %2065 = vmatpush2.msra.mxu0 0.0
    %2066 = vmatprep.subr.mxu0 0.0
    %2067 = vmatpush2.msra.mxu0 0.0
    %2068 = vmatprep.subr.mxu0 0.0
    %2069 = vmatpush2.msra.mxu0 0.0
    %2070 = vmatprep.subr.mxu0 0.0
    %2071 = vmatpush2.msra.mxu0 0.0
    %2072 = vmatprep.subr.mxu0 0.0
    %2073 = vmatpush2.msra.mxu0 0.0
    %2074 = vmatprep.subr.mxu0 0.0
    %2075 = vmatpush2.msra.mxu0 0.0
    %2076 = vmatprep.subr.mxu0 0.0
    %2077 = vmatpush2.msra.mxu0 0.0
    %2078 = vmatprep.subr.mxu0 0.0
    %2079 = vmatpush2.msra.mxu0 0.0
    %2080 = vmatprep.subr.mxu0 0.0
    %2081 = vmatpush2.msra.mxu0 0.0
    %2082 = vmatprep.subr.mxu0 0.0
    %2083 = vmatpush2.msra.mxu0 0.0
    %2084 = vmatprep.subr.mxu0 0.0
    %2085 = vmatpush2.msra.mxu0 0.0
    %2086 = vmatprep.subr.mxu0 0.0
    %2087 = vmatpush2.msra.mxu0 0.0
    %2088 = vmatprep.subr.mxu0 0.0
    %2089 = vmatpush2.msra.mxu0 0.0
    %2090 = vmatprep.mubr.f32.mxu0 0.0
    %2091 = vmatmul.mubr.f32.gmra.mxu0 %v2024
    %v2092 = vpop.f32.mrf.mxu0
    %v2093 = vadd.f32 0.0, %v2092
    %v2094 = vpop.f32.mrf.mxu0
    %2095 = vdwg.mxu0
    %v2096 = vadd.f32 %v1335, %v2093
    %v2097 = vld [vmem:[%s574] sm:$0xff]
    %v2099 = vsel %vm333, %v1670, 0
    %v2102 = vsel %vm333, %v1760, 0
    %2104 = vmatprep.subr.mxu0 0.0
    %2105 = vmatpush1.xpose.msra.mxu0 0.0
    %2106 = vmatprep.subr.mxu0 0.0
    %2107 = vmatpush1.xpose.msra.mxu0 0.0
    %2108 = vmatprep.subr.mxu0 0.0
    %2109 = vmatpush1.xpose.msra.mxu0 0.0
    %2110 = vmatprep.subr.mxu0 0.0
    %2111 = vmatpush1.xpose.msra.mxu0 0.0
    %2112 = vmatprep.subr.mxu0 0.0
    %2113 = vmatpush1.xpose.msra.mxu0 0.0
    %2114 = vmatprep.subr.mxu0 0.0
    %2115 = vmatpush1.xpose.msra.mxu0 0.0
    %2116 = vmatprep.subr.mxu0 0.0
    %2117 = vmatpush1.xpose.msra.mxu0 0.0
    %2118 = vmatprep.subr.mxu0 0.0
    %2119 = vmatpush1.xpose.msra.mxu0 0.0
    %2120 = vmatprep.subr.mxu0 0.0
    %2121 = vmatpush1.xpose.msra.mxu0 0.0
    %2122 = vmatprep.subr.mxu0 0.0
    %2123 = vmatpush1.xpose.msra.mxu0 0.0
    %2124 = vmatprep.subr.mxu0 0.0
    %2125 = vmatpush1.xpose.msra.mxu0 0.0
    %2126 = vmatprep.subr.mxu0 0.0
    %2127 = vmatpush1.xpose.msra.mxu0 0.0
    %2128 = vmatprep.subr.mxu0 0.0
    %2129 = vmatpush1.xpose.msra.mxu0 0.0
    %2130 = vmatprep.subr.mxu0 0.0
    %2131 = vmatpush1.xpose.msra.mxu0 0.0
    %2132 = vmatprep.subr.mxu0 0.0
    %2133 = vmatpush1.xpose.msra.mxu0 0.0
    %2134 = vmatprep.subr.mxu0 0.0
    %2135 = vmatpush1.xpose.msra.mxu0 %v2102
    %2136 = vmatprep.subr.mxu0 0.0
    %2137 = vmatpush2.xpose.msra.mxu0 0.0
    %2138 = vmatprep.subr.mxu0 0.0
    %2139 = vmatpush2.xpose.msra.mxu0 0.0
    %2140 = vmatprep.subr.mxu0 0.0
    %2141 = vmatpush2.xpose.msra.mxu0 0.0
    %2142 = vmatprep.subr.mxu0 0.0
    %2143 = vmatpush2.xpose.msra.mxu0 0.0
    %2144 = vmatprep.subr.mxu0 0.0
    %2145 = vmatpush2.xpose.msra.mxu0 0.0
    %2146 = vmatprep.subr.mxu0 0.0
    %2147 = vmatpush2.xpose.msra.mxu0 0.0
    %2148 = vmatprep.subr.mxu0 0.0
    %2149 = vmatpush2.xpose.msra.mxu0 0.0
    %2150 = vmatprep.subr.mxu0 0.0
    %2151 = vmatpush2.xpose.msra.mxu0 0.0
    %2152 = vmatprep.subr.mxu0 0.0
    %2153 = vmatpush2.xpose.msra.mxu0 0.0
    %2154 = vmatprep.subr.mxu0 0.0
    %2155 = vmatpush2.xpose.msra.mxu0 0.0
    %2156 = vmatprep.subr.mxu0 0.0
    %2157 = vmatpush2.xpose.msra.mxu0 0.0
    %2158 = vmatprep.subr.mxu0 0.0
    %2159 = vmatpush2.xpose.msra.mxu0 0.0
    %2160 = vmatprep.subr.mxu0 0.0
    %2161 = vmatpush2.xpose.msra.mxu0 0.0
    %2162 = vmatprep.subr.mxu0 0.0
    %2163 = vmatpush2.xpose.msra.mxu0 0.0
    %2164 = vmatprep.subr.mxu0 0.0
    %2165 = vmatpush2.xpose.msra.mxu0 0.0
    %2166 = vmatprep.subr.mxu0 0.0
    %2167 = vmatpush2.xpose.msra.mxu0 0.0
    %2168 = vmatprep.mubr.f32.mxu0 0.0
    %2169 = vmatmul.mubr.f32.gmra.mxu0 %v2099
    %v2170 = vpop.f32.mrf.mxu0
    %v2171 = vadd.f32 %v2097, %v2170
    %v2172 = vpop.f32.mrf.mxu0
    %2173 = vdwg.mxu0
    %v2174 = vsel %vm410, %v2171, -inf
    %2175 = vmax.xlane.f32.xlu0 %v2174
    %v2176 = vpop.xlane.xlu0 %2175
    %v2177 = vsub.f32 %v2171, %v2176
    %v2178 = vmul.f32 %v2177, 1.442695
    %v2179 = vpow.pop %v2178
    %v2180 = vsel %vm410, %v2179, 0.0
    %2181 = vadd.xlane.f32.xlu0 %v2180
    %v2182 = vpop.xlane.xlu0 %2181
    %v2183 = vrcp.pop %v2182
    %v2184 = vmul.f32 %v2179, %v2183
    %s2185 = scalar_lea.vmem [#allocation4], 40
    %2186 = vst.msk [vmem:[%s2185] sm:$0xff] %vm410, %v2184
    %v2188 = vsel %vm410, %v2184, 0
    %2190 = vmatprep.subr.mxu0 0.0
    %2191 = vmatpush1.msra.mxu0 0.0
    %2192 = vmatprep.subr.mxu0 0.0
    %2193 = vmatpush1.msra.mxu0 0.0
    %2194 = vmatprep.subr.mxu0 0.0
    %2195 = vmatpush1.msra.mxu0 0.0
    %2196 = vmatprep.subr.mxu0 0.0
    %2197 = vmatpush1.msra.mxu0 0.0
    %2198 = vmatprep.subr.mxu0 0.0
    %2199 = vmatpush1.msra.mxu0 0.0
    %2200 = vmatprep.subr.mxu0 0.0
    %2201 = vmatpush1.msra.mxu0 0.0
    %2202 = vmatprep.subr.mxu0 0.0
    %2203 = vmatpush1.msra.mxu0 0.0
    %2204 = vmatprep.subr.mxu0 0.0
    %2205 = vmatpush1.msra.mxu0 0.0
    %2206 = vmatprep.subr.mxu0 0.0
    %2207 = vmatpush1.msra.mxu0 0.0
    %2208 = vmatprep.subr.mxu0 0.0
    %2209 = vmatpush1.msra.mxu0 0.0
    %2210 = vmatprep.subr.mxu0 0.0
    %2211 = vmatpush1.msra.mxu0 0.0
    %2212 = vmatprep.subr.mxu0 0.0
    %2213 = vmatpush1.msra.mxu0 0.0
    %2214 = vmatprep.subr.mxu0 0.0
    %2215 = vmatpush1.msra.mxu0 0.0
    %2216 = vmatprep.subr.mxu0 0.0
    %2217 = vmatpush1.msra.mxu0 0.0
    %2218 = vmatprep.subr.mxu0 0.0
    %2219 = vmatpush1.msra.mxu0 0.0
    %2220 = vmatprep.subr.mxu0 0.0
    %2221 = vmatpush1.msra.mxu0 %v1852
    %2222 = vmatprep.subr.mxu0 0.0
    %2223 = vmatpush2.msra.mxu0 0.0
    %2224 = vmatprep.subr.mxu0 0.0
    %2225 = vmatpush2.msra.mxu0 0.0
    %2226 = vmatprep.subr.mxu0 0.0
    %2227 = vmatpush2.msra.mxu0 0.0
    %2228 = vmatprep.subr.mxu0 0.0
    %2229 = vmatpush2.msra.mxu0 0.0
    %2230 = vmatprep.subr.mxu0 0.0
    %2231 = vmatpush2.msra.mxu0 0.0
    %2232 = vmatprep.subr.mxu0 0.0
    %2233 = vmatpush2.msra.mxu0 0.0
    %2234 = vmatprep.subr.mxu0 0.0
    %2235 = vmatpush2.msra.mxu0 0.0
    %2236 = vmatprep.subr.mxu0 0.0
    %2237 = vmatpush2.msra.mxu0 0.0
    %2238 = vmatprep.subr.mxu0 0.0
    %2239 = vmatpush2.msra.mxu0 0.0
    %2240 = vmatprep.subr.mxu0 0.0
    %2241 = vmatpush2.msra.mxu0 0.0
    %2242 = vmatprep.subr.mxu0 0.0
    %2243 = vmatpush2.msra.mxu0 0.0
    %2244 = vmatprep.subr.mxu0 0.0
    %2245 = vmatpush2.msra.mxu0 0.0
    %2246 = vmatprep.subr.mxu0 0.0
    %2247 = vmatpush2.msra.mxu0 0.0
    %2248 = vmatprep.subr.mxu0 0.0
    %2249 = vmatpush2.msra.mxu0 0.0
    %2250 = vmatprep.subr.mxu0 0.0
    %2251 = vmatpush2.msra.mxu0 0.0
    %2252 = vmatprep.subr.mxu0 0.0
    %2253 = vmatpush2.msra.mxu0 0.0
    %2254 = vmatprep.mubr.f32.mxu0 0.0
    %2255 = vmatmul.mubr.f32.gmra.mxu0 %v2188
    %v2256 = vpop.f32.mrf.mxu0
    %v2257 = vadd.f32 0.0, %v2256
    %v2258 = vpop.f32.mrf.mxu0
    %2259 = vdwg.mxu0
    %v2260 = vld [vmem:[%s2018] sm:$0xff]
    %v2261 = vld [vmem:[%s2018 + $0x8] sm:$0xff]
    %v2262 = vld [vmem:[%s2018 + $0x10] sm:$0xff]
    %v2263 = vld [vmem:[%s2018 + $0x18] sm:$0xff]
    %v2265 = vsel %vm333, %v2257, 0
    %2267 = vmatprep.subr.mxu0 0.0
    %2268 = vmatpush1.msra.mxu0 0.0
    %2269 = vmatprep.subr.mxu0 0.0
    %2270 = vmatpush1.msra.mxu0 0.0
    %2271 = vmatprep.subr.mxu0 0.0
    %2272 = vmatpush1.msra.mxu0 0.0
    %2273 = vmatprep.subr.mxu0 0.0
    %2274 = vmatpush1.msra.mxu0 0.0
    %2275 = vmatprep.subr.mxu0 0.0
    %2276 = vmatpush1.msra.mxu0 0.0
    %2277 = vmatprep.subr.mxu0 0.0
    %2278 = vmatpush1.msra.mxu0 0.0
    %2279 = vmatprep.subr.mxu0 0.0
    %2280 = vmatpush1.msra.mxu0 0.0
    %2281 = vmatprep.subr.mxu0 0.0
    %2282 = vmatpush1.msra.mxu0 0.0
    %2283 = vmatprep.subr.mxu0 0.0
    %2284 = vmatpush1.msra.mxu0 0.0
    %2285 = vmatprep.subr.mxu0 0.0
    %2286 = vmatpush1.msra.mxu0 0.0
    %2287 = vmatprep.subr.mxu0 0.0
    %2288 = vmatpush1.msra.mxu0 0.0
    %2289 = vmatprep.subr.mxu0 0.0
    %2290 = vmatpush1.msra.mxu0 0.0
    %2291 = vmatprep.subr.mxu0 0.0
    %2292 = vmatpush1.msra.mxu0 %v2263
    %2293 = vmatprep.subr.mxu0 0.0
    %2294 = vmatpush1.msra.mxu0 %v2262
    %2295 = vmatprep.subr.mxu0 0.0
    %2296 = vmatpush1.msra.mxu0 %v2261
    %2297 = vmatprep.subr.mxu0 0.0
    %2298 = vmatpush1.msra.mxu0 %v2260
    %2299 = vmatprep.subr.mxu0 0.0
    %2300 = vmatpush2.msra.mxu0 0.0
    %2301 = vmatprep.subr.mxu0 0.0
    %2302 = vmatpush2.msra.mxu0 0.0
    %2303 = vmatprep.subr.mxu0 0.0
    %2304 = vmatpush2.msra.mxu0 0.0
    %2305 = vmatprep.subr.mxu0 0.0
    %2306 = vmatpush2.msra.mxu0 0.0
    %2307 = vmatprep.subr.mxu0 0.0
    %2308 = vmatpush2.msra.mxu0 0.0
    %2309 = vmatprep.subr.mxu0 0.0
    %2310 = vmatpush2.msra.mxu0 0.0
    %2311 = vmatprep.subr.mxu0 0.0
    %2312 = vmatpush2.msra.mxu0 0.0
    %2313 = vmatprep.subr.mxu0 0.0
    %2314 = vmatpush2.msra.mxu0 0.0
    %2315 = vmatprep.subr.mxu0 0.0
    %2316 = vmatpush2.msra.mxu0 0.0
    %2317 = vmatprep.subr.mxu0 0.0
    %2318 = vmatpush2.msra.mxu0 0.0
    %2319 = vmatprep.subr.mxu0 0.0
    %2320 = vmatpush2.msra.mxu0 0.0
    %2321 = vmatprep.subr.mxu0 0.0
    %2322 = vmatpush2.msra.mxu0 0.0
    %2323 = vmatprep.subr.mxu0 0.0
    %2324 = vmatpush2.msra.mxu0 0.0
    %2325 = vmatprep.subr.mxu0 0.0
    %2326 = vmatpush2.msra.mxu0 0.0
    %2327 = vmatprep.subr.mxu0 0.0
    %2328 = vmatpush2.msra.mxu0 0.0
    %2329 = vmatprep.subr.mxu0 0.0
    %2330 = vmatpush2.msra.mxu0 0.0
    %2331 = vmatprep.mubr.f32.mxu0 0.0
    %2332 = vmatmul.mubr.f32.gmra.mxu0 %v2265
    %v2333 = vpop.f32.mrf.mxu0
    %v2334 = vadd.f32 0.0, %v2333
    %v2335 = vpop.f32.mrf.mxu0
    %2336 = vdwg.mxu0
    %v2337 = vadd.f32 %v1576, %v2334
    %s2338 = scalar_lea.vmem %s4, 384
    %v2339 = vld [vmem:[%s2338] sm:$0xff]
    %v2340 = vld [vmem:[%s2338 + $0x8] sm:$0xff]
    %v2341 = vld [vmem:[%s2338 + $0x10] sm:$0xff]
    %v2342 = vld [vmem:[%s2338 + $0x18] sm:$0xff]
    %v2343 = vld [vmem:[%s2338 + $0x20] sm:$0xff]
    %v2344 = vld [vmem:[%s2338 + $0x28] sm:$0xff]
    %v2345 = vld [vmem:[%s2338 + $0x30] sm:$0xff]
    %v2346 = vld [vmem:[%s2338 + $0x38] sm:$0xff]
    %v2347 = vld [vmem:[%s2338 + $0x40] sm:$0xff]
    %v2348 = vld [vmem:[%s2338 + $0x48] sm:$0xff]
    %v2349 = vld [vmem:[%s2338 + $0x50] sm:$0xff]
    %v2350 = vld [vmem:[%s2338 + $0x58] sm:$0xff]
    %v2351 = vld [vmem:[%s2338 + $0x60] sm:$0xff]
    %v2352 = vld [vmem:[%s2338 + $0x68] sm:$0xff]
    %v2353 = vld [vmem:[%s2338 + $0x70] sm:$0xff]
    %v2354 = vld [vmem:[%s2338 + $0x78] sm:$0xff]
    %2355 = vmatprep.subr.mxu0 0.0
    %2356 = vmatpush1.msra.mxu0 %v2354
    %2357 = vmatprep.subr.mxu0 0.0
    %2358 = vmatpush1.msra.mxu0 %v2353
    %2359 = vmatprep.subr.mxu0 0.0
    %2360 = vmatpush1.msra.mxu0 %v2352
    %2361 = vmatprep.subr.mxu0 0.0
    %2362 = vmatpush1.msra.mxu0 %v2351
    %2363 = vmatprep.subr.mxu0 0.0
    %2364 = vmatpush1.msra.mxu0 %v2350
    %2365 = vmatprep.subr.mxu0 0.0
    %2366 = vmatpush1.msra.mxu0 %v2349
    %2367 = vmatprep.subr.mxu0 0.0
    %2368 = vmatpush1.msra.mxu0 %v2348
    %2369 = vmatprep.subr.mxu0 0.0
    %2370 = vmatpush1.msra.mxu0 %v2347
    %2371 = vmatprep.subr.mxu0 0.0
    %2372 = vmatpush1.msra.mxu0 %v2346
    %2373 = vmatprep.subr.mxu0 0.0
    %2374 = vmatpush1.msra.mxu0 %v2345
    %2375 = vmatprep.subr.mxu0 0.0
    %2376 = vmatpush1.msra.mxu0 %v2344
    %2377 = vmatprep.subr.mxu0 0.0
    %2378 = vmatpush1.msra.mxu0 %v2343
    %2379 = vmatprep.subr.mxu0 0.0
    %2380 = vmatpush1.msra.mxu0 %v2342
    %2381 = vmatprep.subr.mxu0 0.0
    %2382 = vmatpush1.msra.mxu0 %v2341
    %2383 = vmatprep.subr.mxu0 0.0
    %2384 = vmatpush1.msra.mxu0 %v2340
    %2385 = vmatprep.subr.mxu0 0.0
    %2386 = vmatpush1.msra.mxu0 %v2339
    %2387 = vmatprep.subr.mxu0 0.0
    %2388 = vmatpush2.msra.mxu0 0.0
    %2389 = vmatprep.subr.mxu0 0.0
    %2390 = vmatpush2.msra.mxu0 0.0
    %2391 = vmatprep.subr.mxu0 0.0
    %2392 = vmatpush2.msra.mxu0 0.0
    %2393 = vmatprep.subr.mxu0 0.0
    %2394 = vmatpush2.msra.mxu0 0.0
    %2395 = vmatprep.subr.mxu0 0.0
    %2396 = vmatpush2.msra.mxu0 0.0
    %2397 = vmatprep.subr.mxu0 0.0
    %2398 = vmatpush2.msra.mxu0 0.0
    %2399 = vmatprep.subr.mxu0 0.0
    %2400 = vmatpush2.msra.mxu0 0.0
    %2401 = vmatprep.subr.mxu0 0.0
    %2402 = vmatpush2.msra.mxu0 0.0
    %2403 = vmatprep.subr.mxu0 0.0
    %2404 = vmatpush2.msra.mxu0 0.0
    %2405 = vmatprep.subr.mxu0 0.0
    %2406 = vmatpush2.msra.mxu0 0.0
    %2407 = vmatprep.subr.mxu0 0.0
    %2408 = vmatpush2.msra.mxu0 0.0
    %2409 = vmatprep.subr.mxu0 0.0
    %2410 = vmatpush2.msra.mxu0 0.0
    %2411 = vmatprep.subr.mxu0 0.0
    %2412 = vmatpush2.msra.mxu0 0.0
    %2413 = vmatprep.subr.mxu0 0.0
    %2414 = vmatpush2.msra.mxu0 0.0
    %2415 = vmatprep.subr.mxu0 0.0
    %2416 = vmatpush2.msra.mxu0 0.0
    %2417 = vmatprep.subr.mxu0 0.0
    %2418 = vmatpush2.msra.mxu0 0.0
    %2419 = vmatprep.mubr.f32.mxu0 0.0
    %2420 = vmatmul.mubr.f32.gmra.mxu0 %v42
    %v2421 = vpop.f32.mrf.mxu0
    %v2422 = vadd.f32 0.0, %v2421
    %v2423 = vpop.f32.mrf.mxu0
    %2424 = vmatprep.mubr.f32.mxu0 0.0
    %2425 = vmatmul.mubr.f32.gmra.mxu0 %v43
    %v2426 = vpop.f32.mrf.mxu0
    %v2427 = vadd.f32 0.0, %v2426
    %v2428 = vpop.f32.mrf.mxu0
    %2429 = vdwg.mxu0
    %v2430 = vmul.f32 %v2422, 0.17677669
    %v2431 = vmul.f32 %v2427, 0.17677669
    %s2432 = scalar_lea.vmem %s5, 384
    %v2433 = vld [vmem:[%s2432] sm:$0xff]
    %v2434 = vld [vmem:[%s2432 + $0x8] sm:$0xff]
    %v2435 = vld [vmem:[%s2432 + $0x10] sm:$0xff]
    %v2436 = vld [vmem:[%s2432 + $0x18] sm:$0xff]
    %v2437 = vld [vmem:[%s2432 + $0x20] sm:$0xff]
    %v2438 = vld [vmem:[%s2432 + $0x28] sm:$0xff]
    %v2439 = vld [vmem:[%s2432 + $0x30] sm:$0xff]
    %v2440 = vld [vmem:[%s2432 + $0x38] sm:$0xff]
    %v2441 = vld [vmem:[%s2432 + $0x40] sm:$0xff]
    %v2442 = vld [vmem:[%s2432 + $0x48] sm:$0xff]
    %v2443 = vld [vmem:[%s2432 + $0x50] sm:$0xff]
    %v2444 = vld [vmem:[%s2432 + $0x58] sm:$0xff]
    %v2445 = vld [vmem:[%s2432 + $0x60] sm:$0xff]
    %v2446 = vld [vmem:[%s2432 + $0x68] sm:$0xff]
    %v2447 = vld [vmem:[%s2432 + $0x70] sm:$0xff]
    %v2448 = vld [vmem:[%s2432 + $0x78] sm:$0xff]
    %2449 = vmatprep.subr.mxu0 0.0
    %2450 = vmatpush1.msra.mxu0 %v2448
    %2451 = vmatprep.subr.mxu0 0.0
    %2452 = vmatpush1.msra.mxu0 %v2447
    %2453 = vmatprep.subr.mxu0 0.0
    %2454 = vmatpush1.msra.mxu0 %v2446
    %2455 = vmatprep.subr.mxu0 0.0
    %2456 = vmatpush1.msra.mxu0 %v2445
    %2457 = vmatprep.subr.mxu0 0.0
    %2458 = vmatpush1.msra.mxu0 %v2444
    %2459 = vmatprep.subr.mxu0 0.0
    %2460 = vmatpush1.msra.mxu0 %v2443
    %2461 = vmatprep.subr.mxu0 0.0
    %2462 = vmatpush1.msra.mxu0 %v2442
    %2463 = vmatprep.subr.mxu0 0.0
    %2464 = vmatpush1.msra.mxu0 %v2441
    %2465 = vmatprep.subr.mxu0 0.0
    %2466 = vmatpush1.msra.mxu0 %v2440
    %2467 = vmatprep.subr.mxu0 0.0
    %2468 = vmatpush1.msra.mxu0 %v2439
    %2469 = vmatprep.subr.mxu0 0.0
    %2470 = vmatpush1.msra.mxu0 %v2438
    %2471 = vmatprep.subr.mxu0 0.0
    %2472 = vmatpush1.msra.mxu0 %v2437
    %2473 = vmatprep.subr.mxu0 0.0
    %2474 = vmatpush1.msra.mxu0 %v2436
    %2475 = vmatprep.subr.mxu0 0.0
    %2476 = vmatpush1.msra.mxu0 %v2435
    %2477 = vmatprep.subr.mxu0 0.0
    %2478 = vmatpush1.msra.mxu0 %v2434
    %2479 = vmatprep.subr.mxu0 0.0
    %2480 = vmatpush1.msra.mxu0 %v2433
    %2481 = vmatprep.subr.mxu0 0.0
    %2482 = vmatpush2.msra.mxu0 0.0
    %2483 = vmatprep.subr.mxu0 0.0
    %2484 = vmatpush2.msra.mxu0 0.0
    %2485 = vmatprep.subr.mxu0 0.0
    %2486 = vmatpush2.msra.mxu0 0.0
    %2487 = vmatprep.subr.mxu0 0.0
    %2488 = vmatpush2.msra.mxu0 0.0
    %2489 = vmatprep.subr.mxu0 0.0
    %2490 = vmatpush2.msra.mxu0 0.0
    %2491 = vmatprep.subr.mxu0 0.0
    %2492 = vmatpush2.msra.mxu0 0.0
    %2493 = vmatprep.subr.mxu0 0.0
    %2494 = vmatpush2.msra.mxu0 0.0
    %2495 = vmatprep.subr.mxu0 0.0
    %2496 = vmatpush2.msra.mxu0 0.0
    %2497 = vmatprep.subr.mxu0 0.0
    %2498 = vmatpush2.msra.mxu0 0.0
    %2499 = vmatprep.subr.mxu0 0.0
    %2500 = vmatpush2.msra.mxu0 0.0
    %2501 = vmatprep.subr.mxu0 0.0
    %2502 = vmatpush2.msra.mxu0 0.0
    %2503 = vmatprep.subr.mxu0 0.0
    %2504 = vmatpush2.msra.mxu0 0.0
    %2505 = vmatprep.subr.mxu0 0.0
    %2506 = vmatpush2.msra.mxu0 0.0
    %2507 = vmatprep.subr.mxu0 0.0
    %2508 = vmatpush2.msra.mxu0 0.0
    %2509 = vmatprep.subr.mxu0 0.0
    %2510 = vmatpush2.msra.mxu0 0.0
    %2511 = vmatprep.subr.mxu0 0.0
    %2512 = vmatpush2.msra.mxu0 0.0
    %2513 = vmatprep.mubr.f32.mxu0 0.0
    %2514 = vmatmul.mubr.f32.gmra.mxu0 %v44
    %v2515 = vpop.f32.mrf.mxu0
    %v2516 = vadd.f32 0.0, %v2515
    %v2517 = vpop.f32.mrf.mxu0
    %2518 = vmatprep.mubr.f32.mxu0 0.0
    %2519 = vmatmul.mubr.f32.gmra.mxu0 %v45
    %v2520 = vpop.f32.mrf.mxu0
    %v2521 = vadd.f32 0.0, %v2520
    %v2522 = vpop.f32.mrf.mxu0
    %2523 = vdwg.mxu0
    %s2524 = scalar_lea.vmem %s6, 384
    %v2525 = vld [vmem:[%s2524] sm:$0xff]
    %v2526 = vld [vmem:[%s2524 + $0x8] sm:$0xff]
    %v2527 = vld [vmem:[%s2524 + $0x10] sm:$0xff]
    %v2528 = vld [vmem:[%s2524 + $0x18] sm:$0xff]
    %v2529 = vld [vmem:[%s2524 + $0x20] sm:$0xff]
    %v2530 = vld [vmem:[%s2524 + $0x28] sm:$0xff]
    %v2531 = vld [vmem:[%s2524 + $0x30] sm:$0xff]
    %v2532 = vld [vmem:[%s2524 + $0x38] sm:$0xff]
    %v2533 = vld [vmem:[%s2524 + $0x40] sm:$0xff]
    %v2534 = vld [vmem:[%s2524 + $0x48] sm:$0xff]
    %v2535 = vld [vmem:[%s2524 + $0x50] sm:$0xff]
    %v2536 = vld [vmem:[%s2524 + $0x58] sm:$0xff]
    %v2537 = vld [vmem:[%s2524 + $0x60] sm:$0xff]
    %v2538 = vld [vmem:[%s2524 + $0x68] sm:$0xff]
    %v2539 = vld [vmem:[%s2524 + $0x70] sm:$0xff]
    %v2540 = vld [vmem:[%s2524 + $0x78] sm:$0xff]
    %2541 = vmatprep.subr.mxu0 0.0
    %2542 = vmatpush1.msra.mxu0 %v2540
    %2543 = vmatprep.subr.mxu0 0.0
    %2544 = vmatpush1.msra.mxu0 %v2539
    %2545 = vmatprep.subr.mxu0 0.0
    %2546 = vmatpush1.msra.mxu0 %v2538
    %2547 = vmatprep.subr.mxu0 0.0
    %2548 = vmatpush1.msra.mxu0 %v2537
    %2549 = vmatprep.subr.mxu0 0.0
    %2550 = vmatpush1.msra.mxu0 %v2536
    %2551 = vmatprep.subr.mxu0 0.0
    %2552 = vmatpush1.msra.mxu0 %v2535
    %2553 = vmatprep.subr.mxu0 0.0
    %2554 = vmatpush1.msra.mxu0 %v2534
    %2555 = vmatprep.subr.mxu0 0.0
    %2556 = vmatpush1.msra.mxu0 %v2533
    %2557 = vmatprep.subr.mxu0 0.0
    %2558 = vmatpush1.msra.mxu0 %v2532
    %2559 = vmatprep.subr.mxu0 0.0
    %2560 = vmatpush1.msra.mxu0 %v2531
    %2561 = vmatprep.subr.mxu0 0.0
    %2562 = vmatpush1.msra.mxu0 %v2530
    %2563 = vmatprep.subr.mxu0 0.0
    %2564 = vmatpush1.msra.mxu0 %v2529
    %2565 = vmatprep.subr.mxu0 0.0
    %2566 = vmatpush1.msra.mxu0 %v2528
    %2567 = vmatprep.subr.mxu0 0.0
    %2568 = vmatpush1.msra.mxu0 %v2527
    %2569 = vmatprep.subr.mxu0 0.0
    %2570 = vmatpush1.msra.mxu0 %v2526
    %2571 = vmatprep.subr.mxu0 0.0
    %2572 = vmatpush1.msra.mxu0 %v2525
    %2573 = vmatprep.subr.mxu0 0.0
    %2574 = vmatpush2.msra.mxu0 0.0
    %2575 = vmatprep.subr.mxu0 0.0
    %2576 = vmatpush2.msra.mxu0 0.0
    %2577 = vmatprep.subr.mxu0 0.0
    %2578 = vmatpush2.msra.mxu0 0.0
    %2579 = vmatprep.subr.mxu0 0.0
    %2580 = vmatpush2.msra.mxu0 0.0
    %2581 = vmatprep.subr.mxu0 0.0
    %2582 = vmatpush2.msra.mxu0 0.0
    %2583 = vmatprep.subr.mxu0 0.0
    %2584 = vmatpush2.msra.mxu0 0.0
    %2585 = vmatprep.subr.mxu0 0.0
    %2586 = vmatpush2.msra.mxu0 0.0
    %2587 = vmatprep.subr.mxu0 0.0
    %2588 = vmatpush2.msra.mxu0 0.0
    %2589 = vmatprep.subr.mxu0 0.0
    %2590 = vmatpush2.msra.mxu0 0.0
    %2591 = vmatprep.subr.mxu0 0.0
    %2592 = vmatpush2.msra.mxu0 0.0
    %2593 = vmatprep.subr.mxu0 0.0
    %2594 = vmatpush2.msra.mxu0 0.0
    %2595 = vmatprep.subr.mxu0 0.0
    %2596 = vmatpush2.msra.mxu0 0.0
    %2597 = vmatprep.subr.mxu0 0.0
    %2598 = vmatpush2.msra.mxu0 0.0
    %2599 = vmatprep.subr.mxu0 0.0
    %2600 = vmatpush2.msra.mxu0 0.0
    %2601 = vmatprep.subr.mxu0 0.0
    %2602 = vmatpush2.msra.mxu0 0.0
    %2603 = vmatprep.subr.mxu0 0.0
    %2604 = vmatpush2.msra.mxu0 0.0
    %2605 = vmatprep.mubr.f32.mxu0 0.0
    %2606 = vmatmul.mubr.f32.gmra.mxu0 %v46
    %v2607 = vpop.f32.mrf.mxu0
    %v2608 = vadd.f32 0.0, %v2607
    %v2609 = vpop.f32.mrf.mxu0
    %2610 = vmatprep.mubr.f32.mxu0 0.0
    %2611 = vmatmul.mubr.f32.gmra.mxu0 %v47
    %v2612 = vpop.f32.mrf.mxu0
    %v2613 = vadd.f32 0.0, %v2612
    %v2614 = vpop.f32.mrf.mxu0
    %2615 = vdwg.mxu0
    %v2616 = vld [vmem:[%s3] sm:$0xff]
    %v2618 = vsel %vm333, %v2430, 0
    %v2621 = vsel %vm333, %v2516, 0
    %2623 = vmatprep.subr.mxu0 0.0
    %2624 = vmatpush1.xpose.msra.mxu0 0.0
    %2625 = vmatprep.subr.mxu0 0.0
    %2626 = vmatpush1.xpose.msra.mxu0 0.0
    %2627 = vmatprep.subr.mxu0 0.0
    %2628 = vmatpush1.xpose.msra.mxu0 0.0
    %2629 = vmatprep.subr.mxu0 0.0
    %2630 = vmatpush1.xpose.msra.mxu0 0.0
    %2631 = vmatprep.subr.mxu0 0.0
    %2632 = vmatpush1.xpose.msra.mxu0 0.0
    %2633 = vmatprep.subr.mxu0 0.0
    %2634 = vmatpush1.xpose.msra.mxu0 0.0
    %2635 = vmatprep.subr.mxu0 0.0
    %2636 = vmatpush1.xpose.msra.mxu0 0.0
    %2637 = vmatprep.subr.mxu0 0.0
    %2638 = vmatpush1.xpose.msra.mxu0 0.0
    %2639 = vmatprep.subr.mxu0 0.0
    %2640 = vmatpush1.xpose.msra.mxu0 0.0
    %2641 = vmatprep.subr.mxu0 0.0
    %2642 = vmatpush1.xpose.msra.mxu0 0.0
    %2643 = vmatprep.subr.mxu0 0.0
    %2644 = vmatpush1.xpose.msra.mxu0 0.0
    %2645 = vmatprep.subr.mxu0 0.0
    %2646 = vmatpush1.xpose.msra.mxu0 0.0
    %2647 = vmatprep.subr.mxu0 0.0
    %2648 = vmatpush1.xpose.msra.mxu0 0.0
    %2649 = vmatprep.subr.mxu0 0.0
    %2650 = vmatpush1.xpose.msra.mxu0 0.0
    %2651 = vmatprep.subr.mxu0 0.0
    %2652 = vmatpush1.xpose.msra.mxu0 0.0
    %2653 = vmatprep.subr.mxu0 0.0
    %2654 = vmatpush1.xpose.msra.mxu0 %v2621
    %2655 = vmatprep.subr.mxu0 0.0
    %2656 = vmatpush2.xpose.msra.mxu0 0.0
    %2657 = vmatprep.subr.mxu0 0.0
    %2658 = vmatpush2.xpose.msra.mxu0 0.0
    %2659 = vmatprep.subr.mxu0 0.0
    %2660 = vmatpush2.xpose.msra.mxu0 0.0
    %2661 = vmatprep.subr.mxu0 0.0
    %2662 = vmatpush2.xpose.msra.mxu0 0.0
    %2663 = vmatprep.subr.mxu0 0.0
    %2664 = vmatpush2.xpose.msra.mxu0 0.0
    %2665 = vmatprep.subr.mxu0 0.0
    %2666 = vmatpush2.xpose.msra.mxu0 0.0
    %2667 = vmatprep.subr.mxu0 0.0
    %2668 = vmatpush2.xpose.msra.mxu0 0.0
    %2669 = vmatprep.subr.mxu0 0.0
    %2670 = vmatpush2.xpose.msra.mxu0 0.0
    %2671 = vmatprep.subr.mxu0 0.0
    %2672 = vmatpush2.xpose.msra.mxu0 0.0
    %2673 = vmatprep.subr.mxu0 0.0
    %2674 = vmatpush2.xpose.msra.mxu0 0.0
    %2675 = vmatprep.subr.mxu0 0.0
    %2676 = vmatpush2.xpose.msra.mxu0 0.0
    %2677 = vmatprep.subr.mxu0 0.0
    %2678 = vmatpush2.xpose.msra.mxu0 0.0
    %2679 = vmatprep.subr.mxu0 0.0
    %2680 = vmatpush2.xpose.msra.mxu0 0.0
    %2681 = vmatprep.subr.mxu0 0.0
    %2682 = vmatpush2.xpose.msra.mxu0 0.0
    %2683 = vmatprep.subr.mxu0 0.0
    %2684 = vmatpush2.xpose.msra.mxu0 0.0
    %2685 = vmatprep.subr.mxu0 0.0
    %2686 = vmatpush2.xpose.msra.mxu0 0.0
    %2687 = vmatprep.mubr.f32.mxu0 0.0
    %2688 = vmatmul.mubr.f32.gmra.mxu0 %v2618
    %v2689 = vpop.f32.mrf.mxu0
    %v2690 = vadd.f32 %v2616, %v2689
    %v2691 = vpop.f32.mrf.mxu0
    %2692 = vdwg.mxu0
    %v2693 = vsel %vm410, %v2690, -inf
    %2694 = vmax.xlane.f32.xlu0 %v2693
    %v2695 = vpop.xlane.xlu0 %2694
    %v2696 = vsub.f32 %v2690, %v2695
    %v2697 = vmul.f32 %v2696, 1.442695
    %v2698 = vpow.pop %v2697
    %v2699 = vsel %vm410, %v2698, 0.0
    %2700 = vadd.xlane.f32.xlu0 %v2699
    %v2701 = vpop.xlane.xlu0 %2700
    %v2702 = vrcp.pop %v2701
    %v2703 = vmul.f32 %v2698, %v2702
    %s2704 = scalar_lea.vmem [#allocation4], 48
    %2705 = vst.msk [vmem:[%s2704] sm:$0xff] %vm410, %v2703
    %v2707 = vsel %vm410, %v2703, 0
    %2709 = vmatprep.subr.mxu0 0.0
    %2710 = vmatpush1.msra.mxu0 0.0
    %2711 = vmatprep.subr.mxu0 0.0
    %2712 = vmatpush1.msra.mxu0 0.0
    %2713 = vmatprep.subr.mxu0 0.0
    %2714 = vmatpush1.msra.mxu0 0.0
    %2715 = vmatprep.subr.mxu0 0.0
    %2716 = vmatpush1.msra.mxu0 0.0
    %2717 = vmatprep.subr.mxu0 0.0
    %2718 = vmatpush1.msra.mxu0 0.0
    %2719 = vmatprep.subr.mxu0 0.0
    %2720 = vmatpush1.msra.mxu0 0.0
    %2721 = vmatprep.subr.mxu0 0.0
    %2722 = vmatpush1.msra.mxu0 0.0
    %2723 = vmatprep.subr.mxu0 0.0
    %2724 = vmatpush1.msra.mxu0 0.0
    %2725 = vmatprep.subr.mxu0 0.0
    %2726 = vmatpush1.msra.mxu0 0.0
    %2727 = vmatprep.subr.mxu0 0.0
    %2728 = vmatpush1.msra.mxu0 0.0
    %2729 = vmatprep.subr.mxu0 0.0
    %2730 = vmatpush1.msra.mxu0 0.0
    %2731 = vmatprep.subr.mxu0 0.0
    %2732 = vmatpush1.msra.mxu0 0.0
    %2733 = vmatprep.subr.mxu0 0.0
    %2734 = vmatpush1.msra.mxu0 0.0
    %2735 = vmatprep.subr.mxu0 0.0
    %2736 = vmatpush1.msra.mxu0 0.0
    %2737 = vmatprep.subr.mxu0 0.0
    %2738 = vmatpush1.msra.mxu0 0.0
    %2739 = vmatprep.subr.mxu0 0.0
    %2740 = vmatpush1.msra.mxu0 %v2608
    %2741 = vmatprep.subr.mxu0 0.0
    %2742 = vmatpush2.msra.mxu0 0.0
    %2743 = vmatprep.subr.mxu0 0.0
    %2744 = vmatpush2.msra.mxu0 0.0
    %2745 = vmatprep.subr.mxu0 0.0
    %2746 = vmatpush2.msra.mxu0 0.0
    %2747 = vmatprep.subr.mxu0 0.0
    %2748 = vmatpush2.msra.mxu0 0.0
    %2749 = vmatprep.subr.mxu0 0.0
    %2750 = vmatpush2.msra.mxu0 0.0
    %2751 = vmatprep.subr.mxu0 0.0
    %2752 = vmatpush2.msra.mxu0 0.0
    %2753 = vmatprep.subr.mxu0 0.0
    %2754 = vmatpush2.msra.mxu0 0.0
    %2755 = vmatprep.subr.mxu0 0.0
    %2756 = vmatpush2.msra.mxu0 0.0
    %2757 = vmatprep.subr.mxu0 0.0
    %2758 = vmatpush2.msra.mxu0 0.0
    %2759 = vmatprep.subr.mxu0 0.0
    %2760 = vmatpush2.msra.mxu0 0.0
    %2761 = vmatprep.subr.mxu0 0.0
    %2762 = vmatpush2.msra.mxu0 0.0
    %2763 = vmatprep.subr.mxu0 0.0
    %2764 = vmatpush2.msra.mxu0 0.0
    %2765 = vmatprep.subr.mxu0 0.0
    %2766 = vmatpush2.msra.mxu0 0.0
    %2767 = vmatprep.subr.mxu0 0.0
    %2768 = vmatpush2.msra.mxu0 0.0
    %2769 = vmatprep.subr.mxu0 0.0
    %2770 = vmatpush2.msra.mxu0 0.0
    %2771 = vmatprep.subr.mxu0 0.0
    %2772 = vmatpush2.msra.mxu0 0.0
    %2773 = vmatprep.mubr.f32.mxu0 0.0
    %2774 = vmatmul.mubr.f32.gmra.mxu0 %v2707
    %v2775 = vpop.f32.mrf.mxu0
    %v2776 = vadd.f32 0.0, %v2775
    %v2777 = vpop.f32.mrf.mxu0
    %2778 = vdwg.mxu0
    %s2779 = scalar_lea.vmem %s7, 96
    %v2780 = vld [vmem:[%s2779] sm:$0xff]
    %v2781 = vld [vmem:[%s2779 + $0x8] sm:$0xff]
    %v2782 = vld [vmem:[%s2779 + $0x10] sm:$0xff]
    %v2783 = vld [vmem:[%s2779 + $0x18] sm:$0xff]
    %v2785 = vsel %vm333, %v2776, 0
    %2787 = vmatprep.subr.mxu0 0.0
    %2788 = vmatpush1.msra.mxu0 0.0
    %2789 = vmatprep.subr.mxu0 0.0
    %2790 = vmatpush1.msra.mxu0 0.0
    %2791 = vmatprep.subr.mxu0 0.0
    %2792 = vmatpush1.msra.mxu0 0.0
    %2793 = vmatprep.subr.mxu0 0.0
    %2794 = vmatpush1.msra.mxu0 0.0
    %2795 = vmatprep.subr.mxu0 0.0
    %2796 = vmatpush1.msra.mxu0 0.0
    %2797 = vmatprep.subr.mxu0 0.0
    %2798 = vmatpush1.msra.mxu0 0.0
    %2799 = vmatprep.subr.mxu0 0.0
    %2800 = vmatpush1.msra.mxu0 0.0
    %2801 = vmatprep.subr.mxu0 0.0
    %2802 = vmatpush1.msra.mxu0 0.0
    %2803 = vmatprep.subr.mxu0 0.0
    %2804 = vmatpush1.msra.mxu0 0.0
    %2805 = vmatprep.subr.mxu0 0.0
    %2806 = vmatpush1.msra.mxu0 0.0
    %2807 = vmatprep.subr.mxu0 0.0
    %2808 = vmatpush1.msra.mxu0 0.0
    %2809 = vmatprep.subr.mxu0 0.0
    %2810 = vmatpush1.msra.mxu0 0.0
    %2811 = vmatprep.subr.mxu0 0.0
    %2812 = vmatpush1.msra.mxu0 %v2783
    %2813 = vmatprep.subr.mxu0 0.0
    %2814 = vmatpush1.msra.mxu0 %v2782
    %2815 = vmatprep.subr.mxu0 0.0
    %2816 = vmatpush1.msra.mxu0 %v2781
    %2817 = vmatprep.subr.mxu0 0.0
    %2818 = vmatpush1.msra.mxu0 %v2780
    %2819 = vmatprep.subr.mxu0 0.0
    %2820 = vmatpush2.msra.mxu0 0.0
    %2821 = vmatprep.subr.mxu0 0.0
    %2822 = vmatpush2.msra.mxu0 0.0
    %2823 = vmatprep.subr.mxu0 0.0
    %2824 = vmatpush2.msra.mxu0 0.0
    %2825 = vmatprep.subr.mxu0 0.0
    %2826 = vmatpush2.msra.mxu0 0.0
    %2827 = vmatprep.subr.mxu0 0.0
    %2828 = vmatpush2.msra.mxu0 0.0
    %2829 = vmatprep.subr.mxu0 0.0
    %2830 = vmatpush2.msra.mxu0 0.0
    %2831 = vmatprep.subr.mxu0 0.0
    %2832 = vmatpush2.msra.mxu0 0.0
    %2833 = vmatprep.subr.mxu0 0.0
    %2834 = vmatpush2.msra.mxu0 0.0
    %2835 = vmatprep.subr.mxu0 0.0
    %2836 = vmatpush2.msra.mxu0 0.0
    %2837 = vmatprep.subr.mxu0 0.0
    %2838 = vmatpush2.msra.mxu0 0.0
    %2839 = vmatprep.subr.mxu0 0.0
    %2840 = vmatpush2.msra.mxu0 0.0
    %2841 = vmatprep.subr.mxu0 0.0
    %2842 = vmatpush2.msra.mxu0 0.0
    %2843 = vmatprep.subr.mxu0 0.0
    %2844 = vmatpush2.msra.mxu0 0.0
    %2845 = vmatprep.subr.mxu0 0.0
    %2846 = vmatpush2.msra.mxu0 0.0
    %2847 = vmatprep.subr.mxu0 0.0
    %2848 = vmatpush2.msra.mxu0 0.0
    %2849 = vmatprep.subr.mxu0 0.0
    %2850 = vmatpush2.msra.mxu0 0.0
    %2851 = vmatprep.mubr.f32.mxu0 0.0
    %2852 = vmatmul.mubr.f32.gmra.mxu0 %v2785
    %v2853 = vpop.f32.mrf.mxu0
    %v2854 = vadd.f32 0.0, %v2853
    %v2855 = vpop.f32.mrf.mxu0
    %2856 = vdwg.mxu0
    %v2857 = vadd.f32 %v2096, %v2854
    %v2858 = vld [vmem:[%s574] sm:$0xff]
    %v2860 = vsel %vm333, %v2431, 0
    %v2863 = vsel %vm333, %v2521, 0
    %2865 = vmatprep.subr.mxu0 0.0
    %2866 = vmatpush1.xpose.msra.mxu0 0.0
    %2867 = vmatprep.subr.mxu0 0.0
    %2868 = vmatpush1.xpose.msra.mxu0 0.0
    %2869 = vmatprep.subr.mxu0 0.0
    %2870 = vmatpush1.xpose.msra.mxu0 0.0
    %2871 = vmatprep.subr.mxu0 0.0
    %2872 = vmatpush1.xpose.msra.mxu0 0.0
    %2873 = vmatprep.subr.mxu0 0.0
    %2874 = vmatpush1.xpose.msra.mxu0 0.0
    %2875 = vmatprep.subr.mxu0 0.0
    %2876 = vmatpush1.xpose.msra.mxu0 0.0
    %2877 = vmatprep.subr.mxu0 0.0
    %2878 = vmatpush1.xpose.msra.mxu0 0.0
    %2879 = vmatprep.subr.mxu0 0.0
    %2880 = vmatpush1.xpose.msra.mxu0 0.0
    %2881 = vmatprep.subr.mxu0 0.0
    %2882 = vmatpush1.xpose.msra.mxu0 0.0
    %2883 = vmatprep.subr.mxu0 0.0
    %2884 = vmatpush1.xpose.msra.mxu0 0.0
    %2885 = vmatprep.subr.mxu0 0.0
    %2886 = vmatpush1.xpose.msra.mxu0 0.0
    %2887 = vmatprep.subr.mxu0 0.0
    %2888 = vmatpush1.xpose.msra.mxu0 0.0
    %2889 = vmatprep.subr.mxu0 0.0
    %2890 = vmatpush1.xpose.msra.mxu0 0.0
    %2891 = vmatprep.subr.mxu0 0.0
    %2892 = vmatpush1.xpose.msra.mxu0 0.0
    %2893 = vmatprep.subr.mxu0 0.0
    %2894 = vmatpush1.xpose.msra.mxu0 0.0
    %2895 = vmatprep.subr.mxu0 0.0
    %2896 = vmatpush1.xpose.msra.mxu0 %v2863
    %2897 = vmatprep.subr.mxu0 0.0
    %2898 = vmatpush2.xpose.msra.mxu0 0.0
    %2899 = vmatprep.subr.mxu0 0.0
    %2900 = vmatpush2.xpose.msra.mxu0 0.0
    %2901 = vmatprep.subr.mxu0 0.0
    %2902 = vmatpush2.xpose.msra.mxu0 0.0
    %2903 = vmatprep.subr.mxu0 0.0
    %2904 = vmatpush2.xpose.msra.mxu0 0.0
    %2905 = vmatprep.subr.mxu0 0.0
    %2906 = vmatpush2.xpose.msra.mxu0 0.0
    %2907 = vmatprep.subr.mxu0 0.0
    %2908 = vmatpush2.xpose.msra.mxu0 0.0
    %2909 = vmatprep.subr.mxu0 0.0
    %2910 = vmatpush2.xpose.msra.mxu0 0.0
    %2911 = vmatprep.subr.mxu0 0.0
    %2912 = vmatpush2.xpose.msra.mxu0 0.0
    %2913 = vmatprep.subr.mxu0 0.0
    %2914 = vmatpush2.xpose.msra.mxu0 0.0
    %2915 = vmatprep.subr.mxu0 0.0
    %2916 = vmatpush2.xpose.msra.mxu0 0.0
    %2917 = vmatprep.subr.mxu0 0.0
    %2918 = vmatpush2.xpose.msra.mxu0 0.0
    %2919 = vmatprep.subr.mxu0 0.0
    %2920 = vmatpush2.xpose.msra.mxu0 0.0
    %2921 = vmatprep.subr.mxu0 0.0
    %2922 = vmatpush2.xpose.msra.mxu0 0.0
    %2923 = vmatprep.subr.mxu0 0.0
    %2924 = vmatpush2.xpose.msra.mxu0 0.0
    %2925 = vmatprep.subr.mxu0 0.0
    %2926 = vmatpush2.xpose.msra.mxu0 0.0
    %2927 = vmatprep.subr.mxu0 0.0
    %2928 = vmatpush2.xpose.msra.mxu0 0.0
    %2929 = vmatprep.mubr.f32.mxu0 0.0
    %2930 = vmatmul.mubr.f32.gmra.mxu0 %v2860
    %v2931 = vpop.f32.mrf.mxu0
    %v2932 = vadd.f32 %v2858, %v2931
    %v2933 = vpop.f32.mrf.mxu0
    %2934 = vdwg.mxu0
    %v2935 = vsel %vm410, %v2932, -inf
    %2936 = vmax.xlane.f32.xlu0 %v2935
    %v2937 = vpop.xlane.xlu0 %2936
    %v2938 = vsub.f32 %v2932, %v2937
    %v2939 = vmul.f32 %v2938, 1.442695
    %v2940 = vpow.pop %v2939
    %v2941 = vsel %vm410, %v2940, 0.0
    %2942 = vadd.xlane.f32.xlu0 %v2941
    %v2943 = vpop.xlane.xlu0 %2942
    %v2944 = vrcp.pop %v2943
    %v2945 = vmul.f32 %v2940, %v2944
    %s2946 = scalar_lea.vmem [#allocation4], 56
    %2947 = vst.msk [vmem:[%s2946] sm:$0xff] %vm410, %v2945
    %v2949 = vsel %vm410, %v2945, 0
    %2951 = vmatprep.subr.mxu0 0.0
    %2952 = vmatpush1.msra.mxu0 0.0
    %2953 = vmatprep.subr.mxu0 0.0
    %2954 = vmatpush1.msra.mxu0 0.0
    %2955 = vmatprep.subr.mxu0 0.0
    %2956 = vmatpush1.msra.mxu0 0.0
    %2957 = vmatprep.subr.mxu0 0.0
    %2958 = vmatpush1.msra.mxu0 0.0
    %2959 = vmatprep.subr.mxu0 0.0
    %2960 = vmatpush1.msra.mxu0 0.0
    %2961 = vmatprep.subr.mxu0 0.0
    %2962 = vmatpush1.msra.mxu0 0.0
    %2963 = vmatprep.subr.mxu0 0.0
    %2964 = vmatpush1.msra.mxu0 0.0
    %2965 = vmatprep.subr.mxu0 0.0
    %2966 = vmatpush1.msra.mxu0 0.0
    %2967 = vmatprep.subr.mxu0 0.0
    %2968 = vmatpush1.msra.mxu0 0.0
    %2969 = vmatprep.subr.mxu0 0.0
    %2970 = vmatpush1.msra.mxu0 0.0
    %2971 = vmatprep.subr.mxu0 0.0
    %2972 = vmatpush1.msra.mxu0 0.0
    %2973 = vmatprep.subr.mxu0 0.0
    %2974 = vmatpush1.msra.mxu0 0.0
    %2975 = vmatprep.subr.mxu0 0.0
    %2976 = vmatpush1.msra.mxu0 0.0
    %2977 = vmatprep.subr.mxu0 0.0
    %2978 = vmatpush1.msra.mxu0 0.0
    %2979 = vmatprep.subr.mxu0 0.0
    %2980 = vmatpush1.msra.mxu0 0.0
    %2981 = vmatprep.subr.mxu0 0.0
    %2982 = vmatpush1.msra.mxu0 %v2613
    %2983 = vmatprep.subr.mxu0 0.0
    %2984 = vmatpush2.msra.mxu0 0.0
    %2985 = vmatprep.subr.mxu0 0.0
    %2986 = vmatpush2.msra.mxu0 0.0
    %2987 = vmatprep.subr.mxu0 0.0
    %2988 = vmatpush2.msra.mxu0 0.0
    %2989 = vmatprep.subr.mxu0 0.0
    %2990 = vmatpush2.msra.mxu0 0.0
    %2991 = vmatprep.subr.mxu0 0.0
    %2992 = vmatpush2.msra.mxu0 0.0
    %2993 = vmatprep.subr.mxu0 0.0
    %2994 = vmatpush2.msra.mxu0 0.0
    %2995 = vmatprep.subr.mxu0 0.0
    %2996 = vmatpush2.msra.mxu0 0.0
    %2997 = vmatprep.subr.mxu0 0.0
    %2998 = vmatpush2.msra.mxu0 0.0
    %2999 = vmatprep.subr.mxu0 0.0
    %3000 = vmatpush2.msra.mxu0 0.0
    %3001 = vmatprep.subr.mxu0 0.0
    %3002 = vmatpush2.msra.mxu0 0.0
    %3003 = vmatprep.subr.mxu0 0.0
    %3004 = vmatpush2.msra.mxu0 0.0
    %3005 = vmatprep.subr.mxu0 0.0
    %3006 = vmatpush2.msra.mxu0 0.0
    %3007 = vmatprep.subr.mxu0 0.0
    %3008 = vmatpush2.msra.mxu0 0.0
    %3009 = vmatprep.subr.mxu0 0.0
    %3010 = vmatpush2.msra.mxu0 0.0
    %3011 = vmatprep.subr.mxu0 0.0
    %3012 = vmatpush2.msra.mxu0 0.0
    %3013 = vmatprep.subr.mxu0 0.0
    %3014 = vmatpush2.msra.mxu0 0.0
    %3015 = vmatprep.mubr.f32.mxu0 0.0
    %3016 = vmatmul.mubr.f32.gmra.mxu0 %v2949
    %v3017 = vpop.f32.mrf.mxu0
    %v3018 = vadd.f32 0.0, %v3017
    %v3019 = vpop.f32.mrf.mxu0
    %3020 = vdwg.mxu0
    %v3021 = vld [vmem:[%s2779] sm:$0xff]
    %v3022 = vld [vmem:[%s2779 + $0x8] sm:$0xff]
    %v3023 = vld [vmem:[%s2779 + $0x10] sm:$0xff]
    %v3024 = vld [vmem:[%s2779 + $0x18] sm:$0xff]
    %v3026 = vsel %vm333, %v3018, 0
    %3028 = vmatprep.subr.mxu0 0.0
    %3029 = vmatpush1.msra.mxu0 0.0
    %3030 = vmatprep.subr.mxu0 0.0
    %3031 = vmatpush1.msra.mxu0 0.0
    %3032 = vmatprep.subr.mxu0 0.0
    %3033 = vmatpush1.msra.mxu0 0.0
    %3034 = vmatprep.subr.mxu0 0.0
    %3035 = vmatpush1.msra.mxu0 0.0
    %3036 = vmatprep.subr.mxu0 0.0
    %3037 = vmatpush1.msra.mxu0 0.0
    %3038 = vmatprep.subr.mxu0 0.0
    %3039 = vmatpush1.msra.mxu0 0.0
    %3040 = vmatprep.subr.mxu0 0.0
    %3041 = vmatpush1.msra.mxu0 0.0
    %3042 = vmatprep.subr.mxu0 0.0
    %3043 = vmatpush1.msra.mxu0 0.0
    %3044 = vmatprep.subr.mxu0 0.0
    %3045 = vmatpush1.msra.mxu0 0.0
    %3046 = vmatprep.subr.mxu0 0.0
    %3047 = vmatpush1.msra.mxu0 0.0
    %3048 = vmatprep.subr.mxu0 0.0
    %3049 = vmatpush1.msra.mxu0 0.0
    %3050 = vmatprep.subr.mxu0 0.0
    %3051 = vmatpush1.msra.mxu0 0.0
    %3052 = vmatprep.subr.mxu0 0.0
    %3053 = vmatpush1.msra.mxu0 %v3024
    %3054 = vmatprep.subr.mxu0 0.0
    %3055 = vmatpush1.msra.mxu0 %v3023
    %3056 = vmatprep.subr.mxu0 0.0
    %3057 = vmatpush1.msra.mxu0 %v3022
    %3058 = vmatprep.subr.mxu0 0.0
    %3059 = vmatpush1.msra.mxu0 %v3021
    %3060 = vmatprep.subr.mxu0 0.0
    %3061 = vmatpush2.msra.mxu0 0.0
    %3062 = vmatprep.subr.mxu0 0.0
    %3063 = vmatpush2.msra.mxu0 0.0
    %3064 = vmatprep.subr.mxu0 0.0
    %3065 = vmatpush2.msra.mxu0 0.0
    %3066 = vmatprep.subr.mxu0 0.0
    %3067 = vmatpush2.msra.mxu0 0.0
    %3068 = vmatprep.subr.mxu0 0.0
    %3069 = vmatpush2.msra.mxu0 0.0
    %3070 = vmatprep.subr.mxu0 0.0
    %3071 = vmatpush2.msra.mxu0 0.0
    %3072 = vmatprep.subr.mxu0 0.0
    %3073 = vmatpush2.msra.mxu0 0.0
    %3074 = vmatprep.subr.mxu0 0.0
    %3075 = vmatpush2.msra.mxu0 0.0
    %3076 = vmatprep.subr.mxu0 0.0
    %3077 = vmatpush2.msra.mxu0 0.0
    %3078 = vmatprep.subr.mxu0 0.0
    %3079 = vmatpush2.msra.mxu0 0.0
    %3080 = vmatprep.subr.mxu0 0.0
    %3081 = vmatpush2.msra.mxu0 0.0
    %3082 = vmatprep.subr.mxu0 0.0
    %3083 = vmatpush2.msra.mxu0 0.0
    %3084 = vmatprep.subr.mxu0 0.0
    %3085 = vmatpush2.msra.mxu0 0.0
    %3086 = vmatprep.subr.mxu0 0.0
    %3087 = vmatpush2.msra.mxu0 0.0
    %3088 = vmatprep.subr.mxu0 0.0
    %3089 = vmatpush2.msra.mxu0 0.0
    %3090 = vmatprep.subr.mxu0 0.0
    %3091 = vmatpush2.msra.mxu0 0.0
    %3092 = vmatprep.mubr.f32.mxu0 0.0
    %3093 = vmatmul.mubr.f32.gmra.mxu0 %v3026
    %v3094 = vpop.f32.mrf.mxu0
    %v3095 = vadd.f32 0.0, %v3094
    %v3096 = vpop.f32.mrf.mxu0
    %3097 = vdwg.mxu0
    %v3098 = vadd.f32 %v2337, %v3095
    %3099 = vadd.xlane.f32.xlu0 %v2857
    %v3100 = vpop.xlane.xlu0 %3099
    %v3101 = vrcp.pop 128.0
    %v3102 = vmul.f32 %v3100, %v3101
    %v3103 = vsub.f32 %v2857, %v3102
    %v3104 = vmul.f32 %v3103, %v3103
    %3105 = vadd.xlane.f32.xlu0 %v3104
    %v3106 = vpop.xlane.xlu0 %3105
    %v3107 = vmul.f32 %v3106, %v3101
    %v3108 = vadd.f32 %v3107, 1e-05
    %v3109 = vrsqrt.pop %v3108
    %v3110 = vmul.f32 %v3103, %v3109
    %v3111 = vld [vmem:[%s9] sm:$0x1]
    %v3113 = vlaneseq
    %v3114 = vshrl.u32 %v3113, 7
    %v3115 = vsub.s32 0, %v3114
    %v3116 = vrot.slane %v3111, %v3115
    %v3118 = vmul.f32 %v3110, %v3116
    %v3119 = vld [vmem:[%s10] sm:$0x1]
    %v3121 = vlaneseq
    %v3122 = vshrl.u32 %v3121, 7
    %v3123 = vsub.s32 0, %v3122
    %v3124 = vrot.slane %v3119, %v3123
    %v3126 = vadd.f32 %v3118, %v3124
    %3127 = vst [vmem:[#allocation2] sm:$0xff] %v3126
    %3128 = vadd.xlane.f32.xlu0 %v3098
    %v3129 = vpop.xlane.xlu0 %3128
    %v3130 = vmul.f32 %v3129, %v3101
    %v3131 = vsub.f32 %v3098, %v3130
    %v3132 = vmul.f32 %v3131, %v3131
    %3133 = vadd.xlane.f32.xlu0 %v3132
    %v3134 = vpop.xlane.xlu0 %3133
    %v3135 = vmul.f32 %v3134, %v3101
    %v3136 = vadd.f32 %v3135, 1e-05
    %v3137 = vrsqrt.pop %v3136
    %v3138 = vmul.f32 %v3131, %v3137
    %v3139 = vld [vmem:[%s9] sm:$0x1]
    %v3141 = vlaneseq
    %v3142 = vshrl.u32 %v3141, 7
    %v3143 = vsub.s32 0, %v3142
    %v3144 = vrot.slane %v3139, %v3143
    %v3146 = vmul.f32 %v3138, %v3144
    %v3147 = vld [vmem:[%s10] sm:$0x1]
    %v3149 = vlaneseq
    %v3150 = vshrl.u32 %v3149, 7
    %v3151 = vsub.s32 0, %v3150
    %v3152 = vrot.slane %v3147, %v3151
    %v3154 = vadd.f32 %v3146, %v3152
    %s3155 = scalar_lea.vmem [#allocation2], 8
    %3156 = vst [vmem:[%s3155] sm:$0xff] %v3154
    // Predicated region
    $region46: #{tpu_custom_call.1} parent=1 // pred_check
      _
    $region47: #{tpu_custom_call.1} parent=1 // pred_check_branch
      %3158 = sbr.rel (0) target = $region49
    $region48: #{tpu_custom_call.1} parent=1 // pred_region
      %s3160 = ssub.s32 256, 256
      %3161 = vsyncadd [#allocation3], %s3160
      %s3162 = sshll.u32 [#allocation2], 4
      %s3163 = int_to_ptr.vmem [resolvable:$true] %s3162
      %3168 = dma.vmem_to_hbm [thread:$0]  %s3163, 256, %s11, [#allocation3], 128, 128, 8
    $region49: #{tpu_custom_call.1} parent=1 // pred_fallthru
      _
    // Predicated region
    $region50: #{tpu_custom_call.1} parent=1 // pred_check
      _
    $region51: #{tpu_custom_call.1} parent=1 // pred_check_branch
      %3170 = sbr.rel (0) target = $region53
    $region52: #{tpu_custom_call.1} parent=1 // pred_region
      %s3172 = ssub.s32 1024, 1024
      %3173 = vsyncadd [#allocation5], %s3172
      %s3174 = sshll.u32 [#allocation4], 4
      %s3175 = int_to_ptr.vmem [resolvable:$true] %s3174
      %3180 = dma.vmem_to_hbm [thread:$0]  %s3175, 1024, %s12, [#allocation5], 128, 128, 8
    $region53: #{tpu_custom_call.1} parent=1 // pred_fallthru
      _
    // Predicated region
    $region54: #{tpu_custom_call.1} parent=1 // pred_check
      _
    $region55: #{tpu_custom_call.1} parent=1 // pred_check_branch
      %3182 = sbr.rel (0) target = $region57
    $region56: #{tpu_custom_call.1} parent=1 // pred_region
      %3183 = dma.done [#allocation3], 256
    $region57: #{tpu_custom_call.1} parent=1 // pred_fallthru
      _
    // Predicated region
    $region58: #{tpu_custom_call.1} parent=1 // pred_check
      _
    $region59: #{tpu_custom_call.1} parent=1 // pred_check_branch
      %3185 = sbr.rel (0) target = $region61
    $region60: #{tpu_custom_call.1} parent=1 // pred_region
      %3186 = dma.done [#allocation5], 1024
    $region61: #{tpu_custom_call.1} parent=1 // pred_fallthru
      _
    %3187 = vsyncpa [#allocation3], 1
    %3188 = vsyncpa [#allocation5], 1

</llo_original>
